<compile_context>
chip_gen: v7x
topology: tpu7x:2x2x1
jax: 0.10.0
libtpu: 0.0.40
codegen_flags: <defaults>
</compile_context>

<pallas_src>
import functools
import math

import jax
import jax.numpy as jnp
from jax.experimental import pallas as pl
from jax.experimental.pallas import tpu as pltpu

_VMEM_LIMIT = 16 << 20  # actual working sets are < 3 MiB; leave v7x headroom


# ---------------------------------------------------------------------------
# Pallas kernels
# ---------------------------------------------------------------------------

def _matmul_bias_relu_kernel(x_ref, w_ref, b_ref, o_ref):
    # x: (bm, K) bf16, w: (K, N) bf16, b: (1, N) f32 -> o: (bm, N) bf16
    acc = jnp.dot(x_ref[...], w_ref[...], preferred_element_type=jnp.float32)
    o_ref[...] = jnp.maximum(acc + b_ref[...], 0.0).astype(o_ref.dtype)


def pallas_matmul_bias_relu(x, w, b, *, block_m=None):
    """y = relu(x @ w + b); w already stored (K, N).  Optional M-parallel split."""
    M, K = x.shape
    N = w.shape[1]
    if block_m is None or block_m >= M:
        block_m, grid_m = M, 1
    else:
        assert M % block_m == 0 and block_m % 8 == 0
        grid_m = M // block_m
    cost = pl.CostEstimate(
        flops=2 * M * K * N,
        transcendentals=0,
        bytes_accessed=(M * K + K * N + M * N) * 2 + N * 4)
    return pl.pallas_call(
        _matmul_bias_relu_kernel,
        out_shape=jax.ShapeDtypeStruct((M, N), jnp.bfloat16),
        grid=(grid_m,),
        in_specs=[
            pl.BlockSpec((block_m, K), lambda i: (i, 0)),
            pl.BlockSpec((K, N), lambda i: (0, 0)),
            pl.BlockSpec((1, N), lambda i: (0, 0)),
        ],
        out_specs=pl.BlockSpec((block_m, N), lambda i: (i, 0)),
        compiler_params=pltpu.CompilerParams(
            dimension_semantics=("parallel",),
            vmem_limit_bytes=_VMEM_LIMIT),
        cost_estimate=cost,
    )(x, w, b)


def _head_kernel(x_ref, w1_ref, b1_ref, wv_ref, bv_ref, wa_ref, ba_ref,
                 o_ref, acc_ref, *, num_actions, num_atoms, hidden):
    # K-tiled fc_value|fc_advantage matmul with f32 accumulator; value /
    # advantage streams and the dueling-head epilogue run on the last K step.
    k = pl.program_id(0)

    @pl.when(k == 0)
    def _():
        acc_ref[...] = jnp.zeros_like(acc_ref)

    acc_ref[...] += jnp.dot(x_ref[...], w1_ref[...],
                            preferred_element_type=jnp.float32)

    @pl.when(k == pl.num_programs(0) - 1)
    def _():
        h = jnp.maximum(acc_ref[...] + b1_ref[...], 0.0)          # (B, 2*hidden) f32
        hv = h[:, :hidden].astype(jnp.bfloat16)                   # value hidden
        ha = h[:, hidden:].astype(jnp.bfloat16)                   # advantage hidden
        value = jnp.dot(hv, wv_ref[...],
                        preferred_element_type=jnp.float32) + bv_ref[...]    # (B, Z)
        adv = jnp.dot(ha, wa_ref[...],
                      preferred_element_type=jnp.float32) + ba_ref[...]      # (B, A*Z)
        bsz = adv.shape[0]
        adv = adv.reshape(bsz, num_actions, num_atoms)
        q = value[:, None, :] + adv - jnp.mean(adv, axis=1, keepdims=True)
        q = q - jnp.max(q, axis=2, keepdims=True)                 # stable softmax
        e = jnp.exp(q)
        p = e / jnp.sum(e, axis=2, keepdims=True)                 # exact reciprocal
        p = jnp.maximum(p, 0.001)
        o_ref[...] = p.reshape(bsz, num_actions * num_atoms)      # lane-dense store


def pallas_fused_head(x, params, num_actions, num_atoms, *, hidden=512, tk=640):
    B, K = x.shape
    fc1_w, fc1_b = params['fc1_w'], params['fc1_b']
    vs_w, vs_b = params['value_stream_w'], params['value_stream_b']
    as_w, as_b = params['adv_stream_w'], params['adv_stream_b']
    assert K == fc1_w.shape[0] and K % tk == 0
    grid_k = K // tk
    n1 = fc1_w.shape[1]
    az = num_actions * num_atoms
    cost = pl.CostEstimate(
        flops=2 * B * K * n1 + 2 * B * hidden * (num_atoms + az),
        transcendentals=B * az,
        bytes_accessed=(B * K + K * n1 + hidden * (num_atoms + az)) * 2
                       + (n1 + num_atoms + az) * 4 + B * az * 4)
    out = pl.pallas_call(
        functools.partial(_head_kernel, num_actions=num_actions,
                          num_atoms=num_atoms, hidden=hidden),
        out_shape=jax.ShapeDtypeStruct((B, az), jnp.float32),
        grid=(grid_k,),
        in_specs=[
            pl.BlockSpec((B, tk), lambda k: (0, k)),       # x K-tiles
            pl.BlockSpec((tk, n1), lambda k: (k, 0)),      # fc1 weight K-tiles (streamed)
            pl.BlockSpec((1, n1), lambda k: (0, 0)),
            pl.BlockSpec(vs_w.shape, lambda k: (0, 0)),
            pl.BlockSpec(vs_b.shape, lambda k: (0, 0)),
            pl.BlockSpec(as_w.shape, lambda k: (0, 0)),
            pl.BlockSpec(as_b.shape, lambda k: (0, 0)),
        ],
        out_specs=pl.BlockSpec((B, az), lambda k: (0, 0)),
        scratch_shapes=[pltpu.VMEM((B, n1), jnp.float32)],
        compiler_params=pltpu.CompilerParams(
            dimension_semantics=("arbitrary",),
            vmem_limit_bytes=_VMEM_LIMIT),
        cost_estimate=cost,
    )(x, fc1_w, fc1_b, vs_w, vs_b, as_w, as_b)
    return out.reshape(B, num_actions, num_atoms)


# ---------------------------------------------------------------------------
# Conv = NHWC im2col (XLA glue, transpose-free) + Pallas matmul+bias+relu
# ---------------------------------------------------------------------------

def _im2col_nhwc(x, kh, kw, stride, pad_taps=0):
    """x: (B,H,W,C) -> patches (B*OH*OW, (KH*KW+pad_taps)*C), order (kh, kw, c)."""
    B, H, W, C = x.shape
    oh = (H - kh) // stride + 1
    ow = (W - kw) // stride + 1
    cols = []
    for i in range(kh):
        for j in range(kw):
            cols.append(x[:, i:i + stride * oh:stride, j:j + stride * ow:stride, :])
    for _ in range(pad_taps):                       # zero taps -> K multiple of 128
        cols.append(jnp.zeros_like(cols[0]))
    patches = jnp.stack(cols, axis=3)               # (B, OH, OW, taps, C)
    return patches.reshape(B * oh * ow, (kh * kw + pad_taps) * C), oh, ow


def conv2d_relu(x, w_km, b, kh, kw, stride, *, pad_taps=0, m_splits=1):
    """x NHWC bf16, w_km (K, N) bf16, b (1, N) f32 -> NHWC bf16."""
    B = x.shape[0]
    patches, oh, ow = _im2col_nhwc(x, kh, kw, stride, pad_taps)
    M = patches.shape[0]
    block_m = None
    if m_splits > 1 and M % m_splits == 0 and (M // m_splits) % 8 == 0:
        block_m = M // m_splits                     # v7x: both TensorCores
    y = pallas_matmul_bias_relu(patches, w_km, b, block_m=block_m)
    return y.reshape(B, oh, ow, w_km.shape[1])      # stays channel-last


# ---------------------------------------------------------------------------
# Deterministic parameter construction (mirrors the torch module's __init__),
# with all layout permutations / transposes / padding / bf16 casts paid once.
# ---------------------------------------------------------------------------

def _scale_noise(key, size):
    x = jax.random.normal(key, (size,), dtype=jnp.float32)
    return jnp.sign(x) * jnp.sqrt(jnp.abs(x))


def _noisy_linear_params(key, in_f, out_f, sigma_init=0.017, training=True):
    k_wmu, k_bmu, k_ein, k_eout = jax.random.split(key, 4)
    bound = 1.0 / math.sqrt(in_f)
    w_mu = jax.random.uniform(k_wmu, (out_f, in_f), jnp.float32, -bound, bound)
    b_mu = jax.random.uniform(k_bmu, (out_f,), jnp.float32, -bound, bound)
    w_sigma = jnp.full((out_f, in_f), sigma_init / math.sqrt(in_f), jnp.float32)
    b_sigma = jnp.full((out_f,), sigma_init / math.sqrt(out_f), jnp.float32)
    eps_in = _scale_noise(k_ein, in_f)
    eps_out = _scale_noise(k_eout, out_f)
    if training:  # torch modules default to training=True; noise fixed per forward
        return w_mu + w_sigma * jnp.outer(eps_out, eps_in), b_mu + b_sigma * eps_out
    return w_mu, b_mu


def _conv_params(key, out_c, in_c, k):
    kw_, kb_ = jax.random.split(key)
    fan_in = in_c * k * k
    bound = 1.0 / math.sqrt(fan_in)
    w = jax.random.uniform(kw_, (out_c, in_c, k, k), jnp.float32, -bound, bound)
    b = jax.random.uniform(kb_, (out_c,), jnp.float32, -bound, bound)
    return w, b


def _prep_conv(w, b, pad_rows=0):
    """torch (N,C,KH,KW) -> ((KH*KW*C [+pad], N) bf16, (1, N) f32) for NHWC patches."""
    N, C, KH, KW = w.shape
    w_km = jnp.transpose(w, (2, 3, 1, 0)).reshape(KH * KW * C, N)
    if pad_rows:
        w_km = jnp.concatenate([w_km, jnp.zeros((pad_rows, N), w_km.dtype)], axis=0)
    return w_km.astype(jnp.bfloat16), b.reshape(1, N).astype(jnp.float32)


def make_params(key, input_channels, num_actions, num_atoms):
    ks = jax.random.split(key, 7)
    c1_w, c1_b = _conv_params(ks[0], 32, input_channels, 8)
    c2_w, c2_b = _conv_params(ks[1], 64, 32, 4)
    c3_w, c3_b = _conv_params(ks[2], 64, 64, 3)

    H = W = 7
    C = 64
    lin = H * W * C          # 3136, from the 84x84 size formula in __init__
    lin_pad = 3200           # padded so K is a multiple of 128 and of tk=640
    fcv_w, fcv_b = _noisy_linear_params(ks[3], lin, 512)
    fca_w, fca_b = _noisy_linear_params(ks[4], lin, 512)
    vs_w, vs_b = _noisy_linear_params(ks[5], 512, num_atoms)
    as_w, as_b = _noisy_linear_params(ks[6], 512, num_actions * num_atoms)

    # Permute fc columns from torch's (C,H,W) flatten order to our (H,W,C)
    # flatten order, transpose to (K, N), fuse value|advantage along N, pad K.
    def _fc_hwc_t(w):
        out_f = w.shape[0]
        return jnp.transpose(
            w.reshape(out_f, C, H, W).transpose(0, 2, 3, 1).reshape(out_f, lin))

    fc1_w = jnp.concatenate([_fc_hwc_t(fcv_w), _fc_hwc_t(fca_w)], axis=1)  # (3136,1024)
    fc1_w = jnp.concatenate(
        [fc1_w, jnp.zeros((lin_pad - lin, fc1_w.shape[1]), fc1_w.dtype)], axis=0)
    fc1_w = fc1_w.astype(jnp.bfloat16)                                     # (3200,1024)
    fc1_b = jnp.concatenate([fcv_b, fca_b]).reshape(1, -1).astype(jnp.float32)

    c1_wk, c1_bk = _prep_conv(c1_w, c1_b)
    c2_wk, c2_bk = _prep_conv(c2_w, c2_b)
    c3_wk, c3_bk = _prep_conv(c3_w, c3_b, pad_rows=64)   # K: 576 -> 640

    return dict(
        conv1_w=c1_wk, conv1_b=c1_bk,
        conv2_w=c2_wk, conv2_b=c2_bk,
        conv3_w=c3_wk, conv3_b=c3_bk,
        fc1_w=fc1_w, fc1_b=fc1_b,
        value_stream_w=jnp.transpose(vs_w).astype(jnp.bfloat16),       # (512, Z)
        value_stream_b=vs_b.reshape(1, num_atoms).astype(jnp.float32),
        adv_stream_w=jnp.transpose(as_w).astype(jnp.bfloat16),         # (512, A*Z)
        adv_stream_b=as_b.reshape(1, num_actions * num_atoms).astype(jnp.float32),
    )


# ---------------------------------------------------------------------------
# Forward pass
# ---------------------------------------------------------------------------

def rainbow_dqn_forward(x, params, num_actions, num_atoms):
    # NCHW -> NHWC once at entry; bf16 activations from here on.
    # TODO(synk): conv1's C=4 lane-sparse stage and the im2col glue could be
    # pulled in-kernel / fused with conv2 for further launch-overhead savings.
    x = jnp.transpose(x, (0, 2, 3, 1)).astype(jnp.bfloat16)
    x = conv2d_relu(x, params['conv1_w'], params['conv1_b'], 8, 8, 4,
                    m_splits=2)                                        # (B,20,20,32)
    x = conv2d_relu(x, params['conv2_w'], params['conv2_b'], 4, 4, 2)  # (B, 9, 9,64)
    x = conv2d_relu(x, params['conv3_w'], params['conv3_b'], 3, 3, 1,
                    pad_taps=1)                                        # (B, 7, 7,64)
    B = x.shape[0]
    x = x.reshape(B, -1)                       # (B, 3136) in H,W,C flatten order
    x = jnp.pad(x, ((0, 0), (0, params['fc1_w'].shape[0] - x.shape[1])))  # -> 3200
    # Single fused, K-pipelined kernel: fc_value|fc_adv matmul+relu, both
    # streams, and the dueling-head epilogue.
    return pallas_fused_head(x, params, num_actions, num_atoms)       # (B, A, Z)


if __name__ == "__main__":
    # Architecture hard-codes the 84x84 Atari geometry (conv2d_size_out(84,...)),
    # so spatial size must be 84; keep batch / channels / actions small.
    batch = 2
    input_channels = 4
    num_actions = 6
    num_atoms = 51

    key = jax.random.PRNGKey(0)
    k_params, k_x = jax.random.split(key)
    params = make_params(k_params, input_channels, num_actions, num_atoms)
    x = jax.random.uniform(k_x, (batch, input_channels, 84, 84), jnp.float32)

    fwd = jax.jit(functools.partial(rainbow_dqn_forward,
                                    num_actions=num_actions, num_atoms=num_atoms))
    q_dist = jax.block_until_ready(fwd(x, params))

    assert q_dist.shape == (batch, num_actions, num_atoms)
    assert bool(jnp.all(q_dist >= 0.001))
    print("KERNEL_OK")
</pallas_src>

<mosaic_0001>
module attributes {stable_mosaic.version = 11 : i64} {
  func.func @_matmul_bias_relu_kernel(%arg0: i32, %arg1: memref<400x256xbf16, #tpu.memory_space<vmem>>, %arg2: memref<256x32xbf16, #tpu.memory_space<vmem>>, %arg3: memref<1x32xf32, #tpu.memory_space<vmem>>, %arg4: memref<400x32xbf16, #tpu.memory_space<vmem>>) attributes {dimension_semantics = [#tpu.dimension_semantics<parallel>], iteration_bounds = array<i64: 2>, scalar_prefetch = 0 : i64, scratch_operands = 0 : i64, tpu.core_type = #tpu.core_type<tc>, window_params = [{transform_indices = @transform_0, window_bounds = array<i64: 400, 256>}, {pipeline_mode = #tpu.pipeline_mode<synchronous>, transform_indices = @transform_1, window_bounds = array<i64: 256, 32>}, {pipeline_mode = #tpu.pipeline_mode<synchronous>, transform_indices = @transform_2, window_bounds = array<i64: 1, 32>}, {transform_indices = @transform_3, window_bounds = array<i64: 400, 32>}]} {
    %c0 = arith.constant 0 : index
    %c0_0 = arith.constant 0 : index
    %0 = vector.load %arg1[%c0, %c0_0] : memref<400x256xbf16, #tpu.memory_space<vmem>>, vector<400x256xbf16>
    %c0_1 = arith.constant 0 : index
    %c0_2 = arith.constant 0 : index
    %1 = vector.load %arg2[%c0_1, %c0_2] : memref<256x32xbf16, #tpu.memory_space<vmem>>, vector<256x32xbf16>
    %cst = arith.constant dense<0.000000e+00> : vector<400x32xf32>
    %2 = tpu.matmul %0, %1, %cst {dimension_numbers = #tpu.dot_dimension_numbers<[1], [0], [0], [1], [0, 0, 1, 1], [], []>} : vector<400x256xbf16>, vector<256x32xbf16>, vector<400x32xf32> -> vector<400x32xf32>
    %c0_3 = arith.constant 0 : index
    %c0_4 = arith.constant 0 : index
    %3 = vector.load %arg3[%c0_3, %c0_4] : memref<1x32xf32, #tpu.memory_space<vmem>>, vector<1x32xf32>
    %4 = vector.broadcast %3 : vector<1x32xf32> to vector<400x32xf32>
    %5 = arith.addf %2, %4 : vector<400x32xf32>
    %cst_5 = arith.constant 0.000000e+00 : f32
    %6 = vector.broadcast %cst_5 : f32 to vector<400x32xf32>
    %7 = arith.maximumf %5, %6 : vector<400x32xf32>
    %8 = arith.truncf %7 : vector<400x32xf32> to vector<400x32xbf16>
    %c0_6 = arith.constant 0 : index
    %c0_7 = arith.constant 0 : index
    %9 = vector.load %arg4[%c0_6, %c0_7] : memref<400x32xbf16, #tpu.memory_space<vmem>>, vector<400x32xbf16>
    tpu.vector_store %arg4[%c0_6, %c0_7], %8 {strides = array<i32>} : memref<400x32xbf16, #tpu.memory_space<vmem>>, vector<400x32xbf16>,
    return
  }
  func.func @transform_0(%arg0: i32) -> (i32, i32) {
    %c0_i32 = arith.constant 0 : i32
    %c0_i32_0 = arith.constant 0 : i32
    return %arg0, %c0_i32 : i32, i32
  }
  func.func @transform_1(%arg0: i32) -> (i32, i32) {
    %c0_i32 = arith.constant 0 : i32
    %c0_i32_0 = arith.constant 0 : i32
    %c0_i32_1 = arith.constant 0 : i32
    return %c0_i32, %c0_i32_0 : i32, i32
  }
  func.func @transform_2(%arg0: i32) -> (i32, i32) {
    %c0_i32 = arith.constant 0 : i32
    %c0_i32_0 = arith.constant 0 : i32
    %c0_i32_1 = arith.constant 0 : i32
    return %c0_i32, %c0_i32_0 : i32, i32
  }
  func.func @transform_3(%arg0: i32) -> (i32, i32) {
    %c0_i32 = arith.constant 0 : i32
    %c0_i32_0 = arith.constant 0 : i32
    return %arg0, %c0_i32 : i32, i32
  }
}

module attributes {stable_mosaic.version = 11 : i64} {
  func.func @_matmul_bias_relu_kernel(%arg0: i32, %arg1: memref<162x512xbf16, #tpu.memory_space<vmem>>, %arg2: memref<512x64xbf16, #tpu.memory_space<vmem>>, %arg3: memref<1x64xf32, #tpu.memory_space<vmem>>, %arg4: memref<162x64xbf16, #tpu.memory_space<vmem>>) attributes {dimension_semantics = [#tpu.dimension_semantics<parallel>], iteration_bounds = array<i64: 1>, scalar_prefetch = 0 : i64, scratch_operands = 0 : i64, tpu.core_type = #tpu.core_type<tc>, window_params = [{transform_indices = @transform_0, window_bounds = array<i64: 162, 512>}, {pipeline_mode = #tpu.pipeline_mode<synchronous>, transform_indices = @transform_1, window_bounds = array<i64: 512, 64>}, {pipeline_mode = #tpu.pipeline_mode<synchronous>, transform_indices = @transform_2, window_bounds = array<i64: 1, 64>}, {transform_indices = @transform_3, window_bounds = array<i64: 162, 64>}]} {
    %c0 = arith.constant 0 : index
    %c0_0 = arith.constant 0 : index
    %0 = vector.load %arg1[%c0, %c0_0] : memref<162x512xbf16, #tpu.memory_space<vmem>>, vector<162x512xbf16>
    %c0_1 = arith.constant 0 : index
    %c0_2 = arith.constant 0 : index
    %1 = vector.load %arg2[%c0_1, %c0_2] : memref<512x64xbf16, #tpu.memory_space<vmem>>, vector<512x64xbf16>
    %cst = arith.constant dense<0.000000e+00> : vector<162x64xf32>
    %2 = tpu.matmul %0, %1, %cst {dimension_numbers = #tpu.dot_dimension_numbers<[1], [0], [0], [1], [0, 0, 1, 1], [], []>} : vector<162x512xbf16>, vector<512x64xbf16>, vector<162x64xf32> -> vector<162x64xf32>
    %c0_3 = arith.constant 0 : index
    %c0_4 = arith.constant 0 : index
    %3 = vector.load %arg3[%c0_3, %c0_4] : memref<1x64xf32, #tpu.memory_space<vmem>>, vector<1x64xf32>
    %4 = vector.broadcast %3 : vector<1x64xf32> to vector<162x64xf32>
    %5 = arith.addf %2, %4 : vector<162x64xf32>
    %cst_5 = arith.constant 0.000000e+00 : f32
    %6 = vector.broadcast %cst_5 : f32 to vector<162x64xf32>
    %7 = arith.maximumf %5, %6 : vector<162x64xf32>
    %8 = arith.truncf %7 : vector<162x64xf32> to vector<162x64xbf16>
    %c0_6 = arith.constant 0 : index
    %c0_7 = arith.constant 0 : index
    %9 = vector.load %arg4[%c0_6, %c0_7] : memref<162x64xbf16, #tpu.memory_space<vmem>>, vector<162x64xbf16>
    tpu.vector_store %arg4[%c0_6, %c0_7], %8 {strides = array<i32>} : memref<162x64xbf16, #tpu.memory_space<vmem>>, vector<162x64xbf16>,
    return
  }
  func.func @transform_0(%arg0: i32) -> (i32, i32) {
    %c0_i32 = arith.constant 0 : i32
    %c0_i32_0 = arith.constant 0 : i32
    return %arg0, %c0_i32 : i32, i32
  }
  func.func @transform_1(%arg0: i32) -> (i32, i32) {
    %c0_i32 = arith.constant 0 : i32
    %c0_i32_0 = arith.constant 0 : i32
    %c0_i32_1 = arith.constant 0 : i32
    return %c0_i32, %c0_i32_0 : i32, i32
  }
  func.func @transform_2(%arg0: i32) -> (i32, i32) {
    %c0_i32 = arith.constant 0 : i32
    %c0_i32_0 = arith.constant 0 : i32
    %c0_i32_1 = arith.constant 0 : i32
    return %c0_i32, %c0_i32_0 : i32, i32
  }
  func.func @transform_3(%arg0: i32) -> (i32, i32) {
    %c0_i32 = arith.constant 0 : i32
    %c0_i32_0 = arith.constant 0 : i32
    return %arg0, %c0_i32 : i32, i32
  }
}

module attributes {stable_mosaic.version = 11 : i64} {
  func.func @_matmul_bias_relu_kernel(%arg0: i32, %arg1: memref<98x640xbf16, #tpu.memory_space<vmem>>, %arg2: memref<640x64xbf16, #tpu.memory_space<vmem>>, %arg3: memref<1x64xf32, #tpu.memory_space<vmem>>, %arg4: memref<98x64xbf16, #tpu.memory_space<vmem>>) attributes {dimension_semantics = [#tpu.dimension_semantics<parallel>], iteration_bounds = array<i64: 1>, scalar_prefetch = 0 : i64, scratch_operands = 0 : i64, tpu.core_type = #tpu.core_type<tc>, window_params = [{transform_indices = @transform_0, window_bounds = array<i64: 98, 640>}, {pipeline_mode = #tpu.pipeline_mode<synchronous>, transform_indices = @transform_1, window_bounds = array<i64: 640, 64>}, {pipeline_mode = #tpu.pipeline_mode<synchronous>, transform_indices = @transform_2, window_bounds = array<i64: 1, 64>}, {transform_indices = @transform_3, window_bounds = array<i64: 98, 64>}]} {
    %c0 = arith.constant 0 : index
    %c0_0 = arith.constant 0 : index
    %0 = vector.load %arg1[%c0, %c0_0] : memref<98x640xbf16, #tpu.memory_space<vmem>>, vector<98x640xbf16>
    %c0_1 = arith.constant 0 : index
    %c0_2 = arith.constant 0 : index
    %1 = vector.load %arg2[%c0_1, %c0_2] : memref<640x64xbf16, #tpu.memory_space<vmem>>, vector<640x64xbf16>
    %cst = arith.constant dense<0.000000e+00> : vector<98x64xf32>
    %2 = tpu.matmul %0, %1, %cst {dimension_numbers = #tpu.dot_dimension_numbers<[1], [0], [0], [1], [0, 0, 1, 1], [], []>} : vector<98x640xbf16>, vector<640x64xbf16>, vector<98x64xf32> -> vector<98x64xf32>
    %c0_3 = arith.constant 0 : index
    %c0_4 = arith.constant 0 : index
    %3 = vector.load %arg3[%c0_3, %c0_4] : memref<1x64xf32, #tpu.memory_space<vmem>>, vector<1x64xf32>
    %4 = vector.broadcast %3 : vector<1x64xf32> to vector<98x64xf32>
    %5 = arith.addf %2, %4 : vector<98x64xf32>
    %cst_5 = arith.constant 0.000000e+00 : f32
    %6 = vector.broadcast %cst_5 : f32 to vector<98x64xf32>
    %7 = arith.maximumf %5, %6 : vector<98x64xf32>
    %8 = arith.truncf %7 : vector<98x64xf32> to vector<98x64xbf16>
    %c0_6 = arith.constant 0 : index
    %c0_7 = arith.constant 0 : index
    %9 = vector.load %arg4[%c0_6, %c0_7] : memref<98x64xbf16, #tpu.memory_space<vmem>>, vector<98x64xbf16>
    tpu.vector_store %arg4[%c0_6, %c0_7], %8 {strides = array<i32>} : memref<98x64xbf16, #tpu.memory_space<vmem>>, vector<98x64xbf16>,
    return
  }
  func.func @transform_0(%arg0: i32) -> (i32, i32) {
    %c0_i32 = arith.constant 0 : i32
    %c0_i32_0 = arith.constant 0 : i32
    return %arg0, %c0_i32 : i32, i32
  }
  func.func @transform_1(%arg0: i32) -> (i32, i32) {
    %c0_i32 = arith.constant 0 : i32
    %c0_i32_0 = arith.constant 0 : i32
    %c0_i32_1 = arith.constant 0 : i32
    return %c0_i32, %c0_i32_0 : i32, i32
  }
  func.func @transform_2(%arg0: i32) -> (i32, i32) {
    %c0_i32 = arith.constant 0 : i32
    %c0_i32_0 = arith.constant 0 : i32
    %c0_i32_1 = arith.constant 0 : i32
    return %c0_i32, %c0_i32_0 : i32, i32
  }
  func.func @transform_3(%arg0: i32) -> (i32, i32) {
    %c0_i32 = arith.constant 0 : i32
    %c0_i32_0 = arith.constant 0 : i32
    return %arg0, %c0_i32 : i32, i32
  }
}

module attributes {stable_mosaic.version = 11 : i64} {
  func.func @_head_kernel(%arg0: i32, %arg1: memref<2x640xbf16, #tpu.memory_space<vmem>>, %arg2: memref<640x1024xbf16, #tpu.memory_space<vmem>>, %arg3: memref<1x1024xf32, #tpu.memory_space<vmem>>, %arg4: memref<512x51xbf16, #tpu.memory_space<vmem>>, %arg5: memref<1x51xf32, #tpu.memory_space<vmem>>, %arg6: memref<512x306xbf16, #tpu.memory_space<vmem>>, %arg7: memref<1x306xf32, #tpu.memory_space<vmem>>, %arg8: memref<2x306xf32, #tpu.memory_space<vmem>>, %arg9: memref<2x1024xf32, #tpu.memory_space<vmem>>) attributes {dimension_semantics = [#tpu.dimension_semantics<arbitrary>], iteration_bounds = array<i64: 5>, scalar_prefetch = 0 : i64, scratch_operands = 1 : i64, tpu.core_type = #tpu.core_type<tc>, window_params = [{transform_indices = @transform_0, window_bounds = array<i64: 2, 640>}, {transform_indices = @transform_1, window_bounds = array<i64: 640, 1024>}, {pipeline_mode = #tpu.pipeline_mode<synchronous>, transform_indices = @transform_2, window_bounds = array<i64: 1, 1024>}, {pipeline_mode = #tpu.pipeline_mode<synchronous>, transform_indices = @transform_3, window_bounds = array<i64: 512, 51>}, {pipeline_mode = #tpu.pipeline_mode<synchronous>, transform_indices = @transform_4, window_bounds = array<i64: 1, 51>}, {pipeline_mode = #tpu.pipeline_mode<synchronous>, transform_indices = @transform_5, window_bounds = array<i64: 512, 306>}, {pipeline_mode = #tpu.pipeline_mode<synchronous>, transform_indices = @transform_6, window_bounds = array<i64: 1, 306>}, {pipeline_mode = #tpu.pipeline_mode<synchronous>, transform_indices = @transform_7, window_bounds = array<i64: 2, 306>}]} {
    %c0_i32 = arith.constant 0 : i32
    %0 = arith.cmpi eq, %arg0, %c0_i32 : i32
    %1 = arith.extui %0 : i1 to i32
    %c0_i32_0 = arith.constant 0 : i32
    %2 = arith.cmpi ne, %1, %c0_i32_0 : i32
    scf.if %2 {
      %cst_9 = arith.constant 0.000000e+00 : f32
      %12 = vector.broadcast %cst_9 : f32 to vector<2x1024xf32>
      %c0_10 = arith.constant 0 : index
      %c0_11 = arith.constant 0 : index
      %13 = vector.load %arg9[%c0_10, %c0_11] : memref<2x1024xf32, #tpu.memory_space<vmem>>, vector<2x1024xf32>
      tpu.vector_store %arg9[%c0_10, %c0_11], %12 {strides = array<i32>} : memref<2x1024xf32, #tpu.memory_space<vmem>>, vector<2x1024xf32>,
    } else {
    }
    %c0 = arith.constant 0 : index
    %c0_1 = arith.constant 0 : index
    %3 = vector.load %arg9[%c0, %c0_1] : memref<2x1024xf32, #tpu.memory_space<vmem>>, vector<2x1024xf32>
    %c0_2 = arith.constant 0 : index
    %c0_3 = arith.constant 0 : index
    %4 = vector.load %arg1[%c0_2, %c0_3] : memref<2x640xbf16, #tpu.memory_space<vmem>>, vector<2x640xbf16>
    %c0_4 = arith.constant 0 : index
    %c0_5 = arith.constant 0 : index
    %5 = vector.load %arg2[%c0_4, %c0_5] : memref<640x1024xbf16, #tpu.memory_space<vmem>>, vector<640x1024xbf16>
    %cst = arith.constant dense<0.000000e+00> : vector<2x1024xf32>
    %6 = tpu.matmul %4, %5, %cst {dimension_numbers = #tpu.dot_dimension_numbers<[1], [0], [0], [1], [0, 0, 1, 1], [], []>} : vector<2x640xbf16>, vector<640x1024xbf16>, vector<2x1024xf32> -> vector<2x1024xf32>
    %7 = arith.addf %3, %6 : vector<2x1024xf32>
    %c0_6 = arith.constant 0 : index
    %c0_7 = arith.constant 0 : index
    %8 = vector.load %arg9[%c0_6, %c0_7] : memref<2x1024xf32, #tpu.memory_space<vmem>>, vector<2x1024xf32>
    tpu.vector_store %arg9[%c0_6, %c0_7], %7 {strides = array<i32>} : memref<2x1024xf32, #tpu.memory_space<vmem>>, vector<2x1024xf32>,
    %c4_i32 = arith.constant 4 : i32
    %9 = arith.cmpi eq, %arg0, %c4_i32 : i32
    %10 = arith.extui %9 : i1 to i32
    %c0_i32_8 = arith.constant 0 : i32
    %11 = arith.cmpi ne, %10, %c0_i32_8 : i32
    scf.if %11 {
      %c0_9 = arith.constant 0 : index
      %c0_10 = arith.constant 0 : index
      %12 = vector.load %arg9[%c0_9, %c0_10] : memref<2x1024xf32, #tpu.memory_space<vmem>>, vector<2x1024xf32>
      %c0_11 = arith.constant 0 : index
      %c0_12 = arith.constant 0 : index
      %13 = vector.load %arg3[%c0_11, %c0_12] : memref<1x1024xf32, #tpu.memory_space<vmem>>, vector<1x1024xf32>
      %14 = vector.broadcast %13 : vector<1x1024xf32> to vector<2x1024xf32>
      %15 = arith.addf %12, %14 : vector<2x1024xf32>
      %cst_13 = arith.constant 0.000000e+00 : f32
      %16 = vector.broadcast %cst_13 : f32 to vector<2x1024xf32>
      %17 = arith.maximumf %15, %16 : vector<2x1024xf32>
      %18 = vector.extract_strided_slice %17 {offsets = [0, 0], sizes = [2, 512], strides = [1, 1]} : vector<2x1024xf32> to vector<2x512xf32>
      %19 = arith.truncf %18 : vector<2x512xf32> to vector<2x512xbf16>
      %20 = vector.extract_strided_slice %17 {offsets = [0, 512], sizes = [2, 512], strides = [1, 1]} : vector<2x1024xf32> to vector<2x512xf32>
      %21 = arith.truncf %20 : vector<2x512xf32> to vector<2x512xbf16>
      %c0_14 = arith.constant 0 : index
      %c0_15 = arith.constant 0 : index
      %22 = vector.load %arg4[%c0_14, %c0_15] : memref<512x51xbf16, #tpu.memory_space<vmem>>, vector<512x51xbf16>
      %cst_16 = arith.constant dense<0.000000e+00> : vector<2x51xf32>
      %23 = tpu.matmul %19, %22, %cst_16 {dimension_numbers = #tpu.dot_dimension_numbers<[1], [0], [0], [1], [0, 0, 1, 1], [], []>} : vector<2x512xbf16>, vector<512x51xbf16>, vector<2x51xf32> -> vector<2x51xf32>
      %c0_17 = arith.constant 0 : index
      %c0_18 = arith.constant 0 : index
      %24 = vector.load %arg5[%c0_17, %c0_18] : memref<1x51xf32, #tpu.memory_space<vmem>>, vector<1x51xf32>
      %25 = vector.broadcast %24 : vector<1x51xf32> to vector<2x51xf32>
      %26 = arith.addf %23, %25 : vector<2x51xf32>
      %c0_19 = arith.constant 0 : index
      %c0_20 = arith.constant 0 : index
      %27 = vector.load %arg6[%c0_19, %c0_20] : memref<512x306xbf16, #tpu.memory_space<vmem>>, vector<512x306xbf16>
      %cst_21 = arith.constant dense<0.000000e+00> : vector<2x306xf32>
      %28 = tpu.matmul %21, %27, %cst_21 {dimension_numbers = #tpu.dot_dimension_numbers<[1], [0], [0], [1], [0, 0, 1, 1], [], []>} : vector<2x512xbf16>, vector<512x306xbf16>, vector<2x306xf32> -> vector<2x306xf32>
      %c0_22 = arith.constant 0 : index
      %c0_23 = arith.constant 0 : index
      %29 = vector.load %arg7[%c0_22, %c0_23] : memref<1x306xf32, #tpu.memory_space<vmem>>, vector<1x306xf32>
      %30 = vector.broadcast %29 : vector<1x306xf32> to vector<2x306xf32>
      %31 = arith.addf %28, %30 : vector<2x306xf32>
      %32 = vector.shape_cast %31 : vector<2x306xf32> to vector<2x6x51xf32>
      %33 = vector.shape_cast %26 : vector<2x51xf32> to vector<2x1x51xf32>
      %34 = vector.broadcast %33 : vector<2x1x51xf32> to vector<2x6x51xf32>
      %35 = arith.addf %34, %32 : vector<2x6x51xf32>
      %cst_24 = arith.constant dense<0.000000e+00> : vector<2x51xf32>
      %36 = vector.multi_reduction <add>, %32, %cst_24 [1] : vector<2x6x51xf32> to vector<2x51xf32>
      %37 = vector.shape_cast %36 : vector<2x51xf32> to vector<2x1x51xf32>
      %cst_25 = arith.constant 6.000000e+00 : f32
      %38 = vector.broadcast %cst_25 : f32 to vector<2x1x51xf32>
      %39 = arith.divf %37, %38 : vector<2x1x51xf32>
      %40 = vector.broadcast %39 : vector<2x1x51xf32> to vector<2x6x51xf32>
      %41 = arith.subf %35, %40 : vector<2x6x51xf32>
      %cst_26 = arith.constant dense<0xFF800000> : vector<2x6xf32>
      %42 = vector.multi_reduction <maximumf>, %41, %cst_26 [2] : vector<2x6x51xf32> to vector<2x6xf32>
      %43 = vector.shape_cast %42 : vector<2x6xf32> to vector<2x6x1xf32>
      %44 = vector.broadcast %43 : vector<2x6x1xf32> to vector<2x6x51xf32>
      %45 = arith.subf %41, %44 : vector<2x6x51xf32>
      %46 = math.exp %45 : vector<2x6x51xf32>
      %cst_27 = arith.constant dense<0.000000e+00> : vector<2x6xf32>
      %47 = vector.multi_reduction <add>, %46, %cst_27 [2] : vector<2x6x51xf32> to vector<2x6xf32>
      %48 = vector.shape_cast %47 : vector<2x6xf32> to vector<2x6x1xf32>
      %49 = vector.broadcast %48 : vector<2x6x1xf32> to vector<2x6x51xf32>
      %50 = arith.divf %46, %49 : vector<2x6x51xf32>
      %cst_28 = arith.constant 1.000000e-03 : f32
      %51 = vector.broadcast %cst_28 : f32 to vector<2x6x51xf32>
      %52 = arith.maximumf %50, %51 : vector<2x6x51xf32>
      %53 = vector.shape_cast %52 : vector<2x6x51xf32> to vector<2x306xf32>
      %c0_29 = arith.constant 0 : index
      %c0_30 = arith.constant 0 : index
      %54 = vector.load %arg8[%c0_29, %c0_30] : memref<2x306xf32, #tpu.memory_space<vmem>>, vector<2x306xf32>
      tpu.vector_store %arg8[%c0_29, %c0_30], %53 {strides = array<i32>} : memref<2x306xf32, #tpu.memory_space<vmem>>, vector<2x306xf32>,
    } else {
    }
    return
  }
  func.func @transform_0(%arg0: i32) -> (i32, i32) {
    %c0_i32 = arith.constant 0 : i32
    %c0_i32_0 = arith.constant 0 : i32
    return %c0_i32, %arg0 : i32, i32
  }
  func.func @transform_1(%arg0: i32) -> (i32, i32) {
    %c0_i32 = arith.constant 0 : i32
    %c0_i32_0 = arith.constant 0 : i32
    return %arg0, %c0_i32 : i32, i32
  }
  func.func @transform_2(%arg0: i32) -> (i32, i32) {
    %c0_i32 = arith.constant 0 : i32
    %c0_i32_0 = arith.constant 0 : i32
    %c0_i32_1 = arith.constant 0 : i32
    return %c0_i32, %c0_i32_0 : i32, i32
  }
  func.func @transform_3(%arg0: i32) -> (i32, i32) {
    %c0_i32 = arith.constant 0 : i32
    %c0_i32_0 = arith.constant 0 : i32
    %c0_i32_1 = arith.constant 0 : i32
    return %c0_i32, %c0_i32_0 : i32, i32
  }
  func.func @transform_4(%arg0: i32) -> (i32, i32) {
    %c0_i32 = arith.constant 0 : i32
    %c0_i32_0 = arith.constant 0 : i32
    %c0_i32_1 = arith.constant 0 : i32
    return %c0_i32, %c0_i32_0 : i32, i32
  }
  func.func @transform_5(%arg0: i32) -> (i32, i32) {
    %c0_i32 = arith.constant 0 : i32
    %c0_i32_0 = arith.constant 0 : i32
    %c0_i32_1 = arith.constant 0 : i32
    return %c0_i32, %c0_i32_0 : i32, i32
  }
  func.func @transform_6(%arg0: i32) -> (i32, i32) {
    %c0_i32 = arith.constant 0 : i32
    %c0_i32_0 = arith.constant 0 : i32
    %c0_i32_1 = arith.constant 0 : i32
    return %c0_i32, %c0_i32_0 : i32, i32
  }
  func.func @transform_7(%arg0: i32) -> (i32, i32) {
    %c0_i32 = arith.constant 0 : i32
    %c0_i32_0 = arith.constant 0 : i32
    %c0_i32_1 = arith.constant 0 : i32
    return %c0_i32, %c0_i32_0 : i32, i32
  }
}

</mosaic_0001>

<llo_original>
// kernel: rainbow_dqn_forward.4
$region0: #{rainbow_dqn_forward.4}
  #allocation0 [shape = 'u32[]', space=smem, size = 0x4, offset = 0x4, fixed_abs, tag = 'smem constant byte address 0x4 - core index']
  #allocation1 [shape = 'u32[144,128]{1,0:T(1,128)}', space=vmem, size = 0x12000, scoped, tag = 'internal scratch']
  %s0 = inlined_call_operand.vmem [shape: bf16[800,256], index: 0, kind: input, shape index: {}]
  %s1 = inlined_call_operand.vmem [shape: bf16[256,32], index: 1, kind: input, shape index: {}]
  %s2 = inlined_call_operand.vmem [shape: f32[1,32], index: 2, kind: input, shape index: {}]
  %s3 = inlined_call_operand.vmem [shape: bf16[800,32], index: 3, kind: output, shape index: {}]
  %s4 = sld [smem:[#allocation0]]
  $region45: #{rainbow_dqn_forward.4} parent=0
    _
  %s6 = ssub.s32 1, %s4
  %s7 = scalar_select 0, %s6, %s4
  loop: start=0, step=1, limit=4
  $region2: #{rainbow_dqn_forward.4} parent=0 // loop_pre_header
    _
  $region3: #{rainbow_dqn_forward.4} parent=0 // loop_header
    %s9 = sphi 0, %s13
    %p10 = scmp.ge.s32.totalorder %s9, 4
    %s19 = sphi 0, %s21
    %s22 = sphi 0, %s19
    %s23 = sphi 0, %s22
    %s39 = sphi 0, %s23
    %s43 = sphi 0, %s43
    %s45 = sphi 0, %s43
    %s46 = sphi 0, %s45
    %s60 = sphi 0, %s46
    %s64 = sphi 0, %s64
    %s66 = sphi 0, %s64
    %s67 = sphi 0, %s66
    %s81 = sphi 0, %s67
    %s87 = sphi 0, %s89
    %s90 = sphi 0, %s87
    %s91 = sphi 0, %s90
    %s107 = sphi 0, %s91
  $region4: #{rainbow_dqn_forward.4} parent=0 // loop_header_branch
    %12 = sbr.rel (%p10) target = $region8
  $region5: #{rainbow_dqn_forward.4} parent=0 // loop_body
    %s14 = ssub.s32 %s9, 1
    %s15 = ssub.s32 %s9, 2
    %s16 = sadd.s32 %s9, 1
    %s17 = ssub.s32 %s9, %s16
    %p18 = scmp.eq.s32.totalorder %s17, 0
    %s20 = sadd.s32 %s19, 1
    %s21 = scalar_select %p18, %s19, %s20
    %p24 = pneg %p18
    %p25 = scmp.eq.s32.totalorder %s9, 1
    %p26 = por %p24, %p25
    %p27 = scmp.ne.s32.totalorder %s19, %s22
    %p28 = scmp.eq.s32.totalorder %s9, 0
    %p29 = por %p27, %p28
    %p30 = scmp.ne.s32.totalorder %s19, %s22
    %p31 = scmp.eq.s32.totalorder %s14, 1
    %p32 = por %p30, %p31
    %p33 = scmp.ne.s32.totalorder %s22, %s23
    %p34 = scmp.eq.s32.totalorder %s14, 0
    %p35 = por %p33, %p34
    %p36 = scmp.ne.s32.totalorder %s22, %s23
    %p37 = scmp.eq.s32.totalorder %s15, 1
    %p38 = por %p36, %p37
    %p40 = scmp.ne.s32.totalorder %s23, %s39
    %p41 = scmp.eq.s32.totalorder %s15, 0
    %p42 = por %p40, %p41
    %s44 = sadd.s32 %s43, 1
    %p47 = scmp.eq.s32.totalorder %s9, 1
    %p48 = scmp.ne.s32.totalorder %s43, %s45
    %p49 = scmp.eq.s32.totalorder %s9, 0
    %p50 = por %p48, %p49
    %p51 = scmp.ne.s32.totalorder %s43, %s45
    %p52 = scmp.eq.s32.totalorder %s14, 1
    %p53 = por %p51, %p52
    %p54 = scmp.ne.s32.totalorder %s45, %s46
    %p55 = scmp.eq.s32.totalorder %s14, 0
    %p56 = por %p54, %p55
    %p57 = scmp.ne.s32.totalorder %s45, %s46
    %p58 = scmp.eq.s32.totalorder %s15, 1
    %p59 = por %p57, %p58
    %p61 = scmp.ne.s32.totalorder %s46, %s60
    %p62 = scmp.eq.s32.totalorder %s15, 0
    %p63 = por %p61, %p62
    %s65 = sadd.s32 %s64, 1
    %p68 = scmp.eq.s32.totalorder %s9, 1
    %p69 = scmp.ne.s32.totalorder %s64, %s66
    %p70 = scmp.eq.s32.totalorder %s9, 0
    %p71 = por %p69, %p70
    %p72 = scmp.ne.s32.totalorder %s64, %s66
    %p73 = scmp.eq.s32.totalorder %s14, 1
    %p74 = por %p72, %p73
    %p75 = scmp.ne.s32.totalorder %s66, %s67
    %p76 = scmp.eq.s32.totalorder %s14, 0
    %p77 = por %p75, %p76
    %p78 = scmp.ne.s32.totalorder %s66, %s67
    %p79 = scmp.eq.s32.totalorder %s15, 1
    %p80 = por %p78, %p79
    %p82 = scmp.ne.s32.totalorder %s67, %s81
    %p83 = scmp.eq.s32.totalorder %s15, 0
    %p84 = por %p82, %p83
    %s85 = ssub.s32 %s9, %s16
    %p86 = scmp.eq.s32.totalorder %s85, 0
    %s88 = sadd.s32 %s87, 1
    %s89 = scalar_select %p86, %s87, %s88
    %p92 = pneg %p86
    %p93 = scmp.eq.s32.totalorder %s9, 1
    %p94 = por %p92, %p93
    %p95 = scmp.ne.s32.totalorder %s87, %s90
    %p96 = scmp.eq.s32.totalorder %s9, 0
    %p97 = por %p95, %p96
    %p98 = scmp.ne.s32.totalorder %s87, %s90
    %p99 = scmp.eq.s32.totalorder %s14, 1
    %p100 = por %p98, %p99
    %p101 = scmp.ne.s32.totalorder %s90, %s91
    %p102 = scmp.eq.s32.totalorder %s14, 0
    %p103 = por %p101, %p102
    %p104 = scmp.ne.s32.totalorder %s90, %s91
    %p105 = scmp.eq.s32.totalorder %s15, 1
    %p106 = por %p104, %p105
    %p108 = scmp.ne.s32.totalorder %s91, %s107
    %p109 = scmp.eq.s32.totalorder %s15, 0
    %p110 = por %p108, %p109
    %p111 = scmp.le.s32.totalorder 1, %s9
    %p112 = scmp.lt.s32.totalorder %s9, 3
    %p113 = pnand %p111, %p112
    %p114 = pneg %p113
    // Predicated region
    $region9: #{rainbow_dqn_forward.4} parent=5 // pred_check
      _
    $region10: #{rainbow_dqn_forward.4} parent=5 // pred_check_branch
      %116 = sbr.rel (%p113) target = $region12
    $region11: #{rainbow_dqn_forward.4} parent=5 // pred_region
      %s117 = ssub.s32 %s9, 1
      // Predicated region
      $region13: #{rainbow_dqn_forward.4} parent=11 // pred_check
        %p118 = pneg %p56
      $region14: #{rainbow_dqn_forward.4} parent=11 // pred_check_branch
        %120 = sbr.rel (%p118) target = $region16
      $region15: #{rainbow_dqn_forward.4} parent=11 // pred_region
        _
      $region16: #{rainbow_dqn_forward.4} parent=11 // pred_fallthru
        _
      // Predicated region
      $region17: #{rainbow_dqn_forward.4} parent=11 // pred_check
        %p121 = pneg %p77
      $region18: #{rainbow_dqn_forward.4} parent=11 // pred_check_branch
        %123 = sbr.rel (%p121) target = $region20
      $region19: #{rainbow_dqn_forward.4} parent=11 // pred_region
        _
      $region20: #{rainbow_dqn_forward.4} parent=11 // pred_fallthru
        _
    $region12: #{rainbow_dqn_forward.4} parent=5 // pred_fallthru
      _
    %p124 = scmp.lt.s32.totalorder %s9, 2
    // Predicated region
    $region21: #{rainbow_dqn_forward.4} parent=5 // pred_check
      %p125 = pneg %p124
    $region22: #{rainbow_dqn_forward.4} parent=5 // pred_check_branch
      %127 = sbr.rel (%p125) target = $region24
    $region23: #{rainbow_dqn_forward.4} parent=5 // pred_region
      // Predicated region
      $region25: #{rainbow_dqn_forward.4} parent=23 // pred_check
        %p128 = pneg %p29
      $region26: #{rainbow_dqn_forward.4} parent=23 // pred_check_branch
        %130 = sbr.rel (%p128) target = $region28
      $region27: #{rainbow_dqn_forward.4} parent=23 // pred_region
        %s131 = smul.u32 50, %s9
        %p132 = scmp.lt.s32.totalorder %s131, 99
        %s133 = scalar_select %p132, %s131, 99
        %s134 = smul.addr %s133, 2
        %s135 = smul.addr %s134, 4
        %s136 = scalar_lea.vmem %s0, %s135
        %s137 = smul.u32 50, %s9
      $region28: #{rainbow_dqn_forward.4} parent=23 // pred_fallthru
        _
    $region24: #{rainbow_dqn_forward.4} parent=5 // pred_fallthru
      _
    %p138 = scmp.le.s32.totalorder 1, %s9
    %p139 = scmp.lt.s32.totalorder %s9, 3
    %p140 = pnand %p138, %p139
    %p141 = pneg %p140
    // Predicated region
    $region29: #{rainbow_dqn_forward.4} parent=5 // pred_check
      _
    $region30: #{rainbow_dqn_forward.4} parent=5 // pred_check_branch
      %143 = sbr.rel (%p140) target = $region32
    $region31: #{rainbow_dqn_forward.4} parent=5 // pred_region
      %s144 = ssub.s32 %s9, 1
      %s145 = smul.u32 50, %s14
      %p146 = scmp.lt.s32.totalorder %s145, 99
      %s147 = scalar_select %p146, %s145, 99
      %s148 = smul.addr %s147, 2
      %s149 = smul.addr %s148, 4
      %s150 = scalar_lea.vmem %s0, %s149
      %p151 = pneg %p35
      %p152 = pneg %p32
      %p153 = pneg %p56
      %p154 = pneg %p53
      %p155 = pneg %p77
      %p156 = pneg %p74
      %p157 = pneg %p103
      %p158 = pneg %p100
      %s159 = smul.u32 50, %s14
      %p160 = scmp.lt.s32.totalorder %s159, 99
      %s161 = scalar_select %p160, %s159, 99
      %s162 = smul.addr %s161, 4
      %s163 = scalar_lea.vmem %s3, %s162
      %s164 = smul.u32 50, %s14
      %p165 = scmp.lt.s32.totalorder %s164, 99
      %s166 = scalar_select %p165, %s164, 99
      %s167 = smul.addr %s166, 2
      %s168 = smul.addr %s167, 4
      %s169 = scalar_lea.vmem %s0, %s168
      %s170 = smul.u32 50, %s14
      %s171 = smul.u32 50, %s14
      %p172 = scmp.lt.s32.totalorder %s171, 99
      %s173 = scalar_select %p172, %s171, 99
      %s174 = smul.addr %s173, 4
      %s175 = scalar_lea.vmem %s3, %s174
      %s176 = smul.u32 50, %s14
      %v178 = vld [vmem:[%s169] sm:$0xff]
      %v179 = vld [vmem:[%s169 + $0x8] sm:$0xff]
      %v180 = vld [vmem:[%s169 + $0x10] sm:$0xff]
      %v181 = vld [vmem:[%s169 + $0x18] sm:$0xff]
      %v182 = vld [vmem:[%s169 + $0x20] sm:$0xff]
      %v183 = vld [vmem:[%s169 + $0x28] sm:$0xff]
      %v184 = vld [vmem:[%s169 + $0x30] sm:$0xff]
      %v185 = vld [vmem:[%s169 + $0x38] sm:$0xff]
      %v186 = vld [vmem:[%s169 + $0x40] sm:$0xff]
      %v187 = vld [vmem:[%s169 + $0x48] sm:$0xff]
      %v188 = vld [vmem:[%s169 + $0x50] sm:$0xff]
      %v189 = vld [vmem:[%s169 + $0x58] sm:$0xff]
      %v190 = vld [vmem:[%s169 + $0x60] sm:$0xff]
      %v191 = vld [vmem:[%s169 + $0x68] sm:$0xff]
      %v192 = vld [vmem:[%s169 + $0x70] sm:$0xff]
      %v193 = vld [vmem:[%s169 + $0x78] sm:$0xff]
      %v194 = vld [vmem:[%s169 + $0x80] sm:$0xff]
      %v195 = vld [vmem:[%s169 + $0x88] sm:$0xff]
      %v196 = vld [vmem:[%s169 + $0x90] sm:$0xff]
      %v197 = vld [vmem:[%s169 + $0x98] sm:$0xff]
      %v198 = vld [vmem:[%s169 + $0xa0] sm:$0xff]
      %v199 = vld [vmem:[%s169 + $0xa8] sm:$0xff]
      %v200 = vld [vmem:[%s169 + $0xb0] sm:$0xff]
      %v201 = vld [vmem:[%s169 + $0xb8] sm:$0xff]
      %v202 = vld [vmem:[%s169 + $0xc0] sm:$0xff]
      %v203 = vld [vmem:[%s169 + $0xc8] sm:$0xff]
      %v204 = vld [vmem:[%s169 + $0xd0] sm:$0xff]
      %v205 = vld [vmem:[%s169 + $0xd8] sm:$0xff]
      %v206 = vld [vmem:[%s169 + $0xe0] sm:$0xff]
      %v207 = vld [vmem:[%s169 + $0xe8] sm:$0xff]
      %v208 = vld [vmem:[%s169 + $0xf0] sm:$0xff]
      %v209 = vld [vmem:[%s169 + $0xf8] sm:$0xff]
      %v210 = vld [vmem:[%s169 + $0x100] sm:$0xff]
      %v211 = vld [vmem:[%s169 + $0x108] sm:$0xff]
      %v212 = vld [vmem:[%s169 + $0x110] sm:$0xff]
      %v213 = vld [vmem:[%s169 + $0x118] sm:$0xff]
      %v214 = vld [vmem:[%s169 + $0x120] sm:$0xff]
      %v215 = vld [vmem:[%s169 + $0x128] sm:$0xff]
      %v216 = vld [vmem:[%s169 + $0x130] sm:$0xff]
      %v217 = vld [vmem:[%s169 + $0x138] sm:$0xff]
      %v218 = vld [vmem:[%s169 + $0x140] sm:$0xff]
      %v219 = vld [vmem:[%s169 + $0x148] sm:$0xff]
      %v220 = vld [vmem:[%s169 + $0x150] sm:$0xff]
      %v221 = vld [vmem:[%s169 + $0x158] sm:$0xff]
      %v222 = vld [vmem:[%s169 + $0x160] sm:$0xff]
      %v223 = vld [vmem:[%s169 + $0x168] sm:$0xff]
      %v224 = vld [vmem:[%s169 + $0x170] sm:$0xff]
      %v225 = vld [vmem:[%s169 + $0x178] sm:$0xff]
      %v226 = vld [vmem:[%s169 + $0x180] sm:$0xff]
      %v227 = vld [vmem:[%s169 + $0x188] sm:$0xff]
      %v228 = vld [vmem:[%s1] sm:$0xf]
      %v229 = vld [vmem:[%s1 + $0x4] sm:$0xf]
      %v230 = vld [vmem:[%s1 + $0x8] sm:$0xf]
      %v231 = vld [vmem:[%s1 + $0xc] sm:$0xf]
      %v232 = vld [vmem:[%s1 + $0x10] sm:$0xf]
      %v233 = vld [vmem:[%s1 + $0x14] sm:$0xf]
      %v234 = vld [vmem:[%s1 + $0x18] sm:$0xf]
      %v235 = vld [vmem:[%s1 + $0x1c] sm:$0xf]
      %v236 = vld [vmem:[%s1 + $0x20] sm:$0xf]
      %v237 = vld [vmem:[%s1 + $0x24] sm:$0xf]
      %v238 = vld [vmem:[%s1 + $0x28] sm:$0xf]
      %v239 = vld [vmem:[%s1 + $0x2c] sm:$0xf]
      %v240 = vld [vmem:[%s1 + $0x30] sm:$0xf]
      %v241 = vld [vmem:[%s1 + $0x34] sm:$0xf]
      %v242 = vld [vmem:[%s1 + $0x38] sm:$0xf]
      %v243 = vld [vmem:[%s1 + $0x3c] sm:$0xf]
      %v244 = vld [vmem:[%s1 + $0x40] sm:$0xf]
      %v245 = vld [vmem:[%s1 + $0x44] sm:$0xf]
      %v246 = vld [vmem:[%s1 + $0x48] sm:$0xf]
      %v247 = vld [vmem:[%s1 + $0x4c] sm:$0xf]
      %v248 = vld [vmem:[%s1 + $0x50] sm:$0xf]
      %v249 = vld [vmem:[%s1 + $0x54] sm:$0xf]
      %v250 = vld [vmem:[%s1 + $0x58] sm:$0xf]
      %v251 = vld [vmem:[%s1 + $0x5c] sm:$0xf]
      %v252 = vld [vmem:[%s1 + $0x60] sm:$0xf]
      %v253 = vld [vmem:[%s1 + $0x64] sm:$0xf]
      %v254 = vld [vmem:[%s1 + $0x68] sm:$0xf]
      %v255 = vld [vmem:[%s1 + $0x6c] sm:$0xf]
      %v256 = vld [vmem:[%s1 + $0x70] sm:$0xf]
      %v257 = vld [vmem:[%s1 + $0x74] sm:$0xf]
      %v258 = vld [vmem:[%s1 + $0x78] sm:$0xf]
      %v259 = vld [vmem:[%s1 + $0x7c] sm:$0xf]
      %v260 = vld [vmem:[%s2] sm:$0x1]
      %v262 = vlaneseq
      %v263 = vshrl.u32 %v262, 7
      %v264 = vsub.s32 0, %v263
      %v265 = vrot.slane %v260, %v264
      %v317 = vunpack.c.l.b16 %v178
      %v318 = vunpack.c.h.b16 %v178
      %v319 = vunpack.c.l.b16 %v179
      %v320 = vunpack.c.h.b16 %v179
      %v321 = vunpack.c.l.b16 %v180
      %v322 = vunpack.c.h.b16 %v180
      %v323 = vunpack.c.l.b16 %v181
      %v324 = vunpack.c.h.b16 %v181
      %v325 = vunpack.c.l.b16 %v182
      %v326 = vunpack.c.h.b16 %v182
      %v327 = vunpack.c.l.b16 %v183
      %v328 = vunpack.c.h.b16 %v183
      %v329 = vunpack.c.l.b16 %v184
      %v330 = vunpack.c.h.b16 %v184
      %v331 = vunpack.c.l.b16 %v185
      %v332 = vunpack.c.h.b16 %v185
      %v333 = vunpack.c.l.b16 %v186
      %v334 = vunpack.c.h.b16 %v186
      %v335 = vunpack.c.l.b16 %v187
      %v336 = vunpack.c.h.b16 %v187
      %v337 = vunpack.c.l.b16 %v188
      %v338 = vunpack.c.h.b16 %v188
      %v339 = vunpack.c.l.b16 %v189
      %v340 = vunpack.c.h.b16 %v189
      %v341 = vunpack.c.l.b16 %v190
      %v342 = vunpack.c.h.b16 %v190
      %v343 = vunpack.c.l.b16 %v191
      %v344 = vunpack.c.h.b16 %v191
      %v345 = vunpack.c.l.b16 %v192
      %v346 = vunpack.c.h.b16 %v192
      %v347 = vunpack.c.l.b16 %v193
      %v348 = vunpack.c.h.b16 %v193
      %v349 = vunpack.c.l.b16 %v194
      %v350 = vunpack.c.h.b16 %v194
      %v351 = vunpack.c.l.b16 %v195
      %v352 = vunpack.c.h.b16 %v195
      %v353 = vunpack.c.l.b16 %v196
      %v354 = vunpack.c.h.b16 %v196
      %v355 = vunpack.c.l.b16 %v197
      %v356 = vunpack.c.h.b16 %v197
      %v357 = vunpack.c.l.b16 %v198
      %v358 = vunpack.c.h.b16 %v198
      %v359 = vunpack.c.l.b16 %v199
      %v360 = vunpack.c.h.b16 %v199
      %v361 = vunpack.c.l.b16 %v200
      %v362 = vunpack.c.h.b16 %v200
      %v363 = vunpack.c.l.b16 %v201
      %v364 = vunpack.c.h.b16 %v201
      %v365 = vunpack.c.l.b16 %v202
      %v366 = vunpack.c.h.b16 %v202
      %v367 = vunpack.c.l.b16 %v203
      %v368 = vunpack.c.h.b16 %v203
      %v369 = vunpack.c.l.b16 %v204
      %v370 = vunpack.c.h.b16 %v204
      %v371 = vunpack.c.l.b16 %v205
      %v372 = vunpack.c.h.b16 %v205
      %v373 = vunpack.c.l.b16 %v206
      %v374 = vunpack.c.h.b16 %v206
      %v375 = vunpack.c.l.b16 %v207
      %v376 = vunpack.c.h.b16 %v207
      %v377 = vunpack.c.l.b16 %v208
      %v378 = vunpack.c.h.b16 %v208
      %v379 = vunpack.c.l.b16 %v209
      %v380 = vunpack.c.h.b16 %v209
      %v381 = vunpack.c.l.b16 %v210
      %v382 = vunpack.c.h.b16 %v210
      %v383 = vunpack.c.l.b16 %v211
      %v384 = vunpack.c.h.b16 %v211
      %v385 = vunpack.c.l.b16 %v212
      %v386 = vunpack.c.h.b16 %v212
      %v387 = vunpack.c.l.b16 %v213
      %v388 = vunpack.c.h.b16 %v213
      %v389 = vunpack.c.l.b16 %v214
      %v390 = vunpack.c.h.b16 %v214
      %v391 = vunpack.c.l.b16 %v215
      %v392 = vunpack.c.h.b16 %v215
      %v393 = vunpack.c.l.b16 %v216
      %v394 = vunpack.c.h.b16 %v216
      %v395 = vunpack.c.l.b16 %v217
      %v396 = vunpack.c.h.b16 %v217
      %v397 = vunpack.c.l.b16 %v218
      %v398 = vunpack.c.h.b16 %v218
      %v399 = vunpack.c.l.b16 %v219
      %v400 = vunpack.c.h.b16 %v219
      %v401 = vunpack.c.l.b16 %v220
      %v402 = vunpack.c.h.b16 %v220
      %v403 = vunpack.c.l.b16 %v221
      %v404 = vunpack.c.h.b16 %v221
      %v405 = vunpack.c.l.b16 %v222
      %v406 = vunpack.c.h.b16 %v222
      %v407 = vunpack.c.l.b16 %v223
      %v408 = vunpack.c.h.b16 %v223
      %v409 = vunpack.c.l.b16 %v224
      %v410 = vunpack.c.h.b16 %v224
      %v411 = vunpack.c.l.b16 %v225
      %v412 = vunpack.c.h.b16 %v225
      %v413 = vunpack.c.l.b16 %v226
      %v414 = vunpack.c.h.b16 %v226
      %v415 = vunpack.c.l.b16 %v227
      %v416 = vunpack.c.h.b16 %v227
      %v417 = vpack.c.b16 %v319, %v317
      %v418 = vpack.c.b16 %v320, %v318
      %v419 = vpack.c.b16 %v323, %v321
      %v420 = vpack.c.b16 %v324, %v322
      %v421 = vpack.c.b16 %v327, %v325
      %v422 = vpack.c.b16 %v328, %v326
      %v423 = vpack.c.b16 %v331, %v329
      %v424 = vpack.c.b16 %v332, %v330
      %v425 = vpack.c.b16 %v335, %v333
      %v426 = vpack.c.b16 %v336, %v334
      %v427 = vpack.c.b16 %v339, %v337
      %v428 = vpack.c.b16 %v340, %v338
      %v429 = vpack.c.b16 %v343, %v341
      %v430 = vpack.c.b16 %v344, %v342
      %v431 = vpack.c.b16 %v347, %v345
      %v432 = vpack.c.b16 %v348, %v346
      %v433 = vpack.c.b16 %v351, %v349
      %v434 = vpack.c.b16 %v352, %v350
      %v435 = vpack.c.b16 %v355, %v353
      %v436 = vpack.c.b16 %v356, %v354
      %v437 = vpack.c.b16 %v359, %v357
      %v438 = vpack.c.b16 %v360, %v358
      %v439 = vpack.c.b16 %v363, %v361
      %v440 = vpack.c.b16 %v364, %v362
      %v441 = vpack.c.b16 %v367, %v365
      %v442 = vpack.c.b16 %v368, %v366
      %v443 = vpack.c.b16 %v371, %v369
      %v444 = vpack.c.b16 %v372, %v370
      %v445 = vpack.c.b16 %v375, %v373
      %v446 = vpack.c.b16 %v376, %v374
      %v447 = vpack.c.b16 %v379, %v377
      %v448 = vpack.c.b16 %v380, %v378
      %v449 = vpack.c.b16 %v383, %v381
      %v450 = vpack.c.b16 %v384, %v382
      %v451 = vpack.c.b16 %v387, %v385
      %v452 = vpack.c.b16 %v388, %v386
      %v453 = vpack.c.b16 %v391, %v389
      %v454 = vpack.c.b16 %v392, %v390
      %v455 = vpack.c.b16 %v395, %v393
      %v456 = vpack.c.b16 %v396, %v394
      %v457 = vpack.c.b16 %v399, %v397
      %v458 = vpack.c.b16 %v400, %v398
      %v459 = vpack.c.b16 %v403, %v401
      %v460 = vpack.c.b16 %v404, %v402
      %v461 = vpack.c.b16 %v407, %v405
      %v462 = vpack.c.b16 %v408, %v406
      %v463 = vpack.c.b16 %v411, %v409
      %v464 = vpack.c.b16 %v412, %v410
      %v465 = vpack.c.b16 %v415, %v413
      %v466 = vpack.c.b16 %v416, %v414
      %v549 = vunpack.c.l.b16 %v228
      %v550 = vunpack.c.l.b16 %v229
      %v551 = vunpack.c.l.b16 %v230
      %v552 = vunpack.c.l.b16 %v231
      %v553 = vunpack.c.l.b16 %v232
      %v554 = vunpack.c.l.b16 %v233
      %v555 = vunpack.c.l.b16 %v234
      %v556 = vunpack.c.l.b16 %v235
      %v557 = vunpack.c.l.b16 %v236
      %v558 = vunpack.c.l.b16 %v237
      %v559 = vunpack.c.l.b16 %v238
      %v560 = vunpack.c.l.b16 %v239
      %v561 = vunpack.c.l.b16 %v240
      %v562 = vunpack.c.l.b16 %v241
      %v563 = vunpack.c.l.b16 %v242
      %v564 = vunpack.c.l.b16 %v243
      %v565 = vunpack.c.l.b16 %v244
      %v566 = vunpack.c.l.b16 %v245
      %v567 = vunpack.c.l.b16 %v246
      %v568 = vunpack.c.l.b16 %v247
      %v569 = vunpack.c.l.b16 %v248
      %v570 = vunpack.c.l.b16 %v249
      %v571 = vunpack.c.l.b16 %v250
      %v572 = vunpack.c.l.b16 %v251
      %v573 = vunpack.c.l.b16 %v252
      %v574 = vunpack.c.l.b16 %v253
      %v575 = vunpack.c.l.b16 %v254
      %v576 = vunpack.c.l.b16 %v255
      %v577 = vunpack.c.l.b16 %v256
      %v578 = vunpack.c.l.b16 %v257
      %v579 = vunpack.c.l.b16 %v258
      %v580 = vunpack.c.l.b16 %v259
      %v581 = vpack.c.b16 %v550, %v549
      %v582 = vpack.c.b16 %v552, %v551
      %v583 = vpack.c.b16 %v554, %v553
      %v584 = vpack.c.b16 %v556, %v555
      %v585 = vpack.c.b16 %v558, %v557
      %v586 = vpack.c.b16 %v560, %v559
      %v587 = vpack.c.b16 %v562, %v561
      %v588 = vpack.c.b16 %v564, %v563
      %v589 = vpack.c.b16 %v566, %v565
      %v590 = vpack.c.b16 %v568, %v567
      %v591 = vpack.c.b16 %v570, %v569
      %v592 = vpack.c.b16 %v572, %v571
      %v593 = vpack.c.b16 %v574, %v573
      %v594 = vpack.c.b16 %v576, %v575
      %v595 = vpack.c.b16 %v578, %v577
      %v596 = vpack.c.b16 %v580, %v579
      %613 = vmatprep.subr.bf16.mxu0 0
      %614 = vmatpush1.bf16.msra.mxu0 %v581
      %615 = vmatprep.subr.bf16.mxu0 0
      %616 = vmatpush1.bf16.msra.mxu0 %v582
      %617 = vmatprep.subr.bf16.mxu0 0
      %618 = vmatpush1.bf16.msra.mxu0 %v583
      %619 = vmatprep.subr.bf16.mxu0 0
      %620 = vmatpush1.bf16.msra.mxu0 %v584
      %621 = vmatprep.subr.bf16.mxu0 0
      %622 = vmatpush1.bf16.msra.mxu0 %v585
      %623 = vmatprep.subr.bf16.mxu0 0
      %624 = vmatpush1.bf16.msra.mxu0 %v586
      %625 = vmatprep.subr.bf16.mxu0 0
      %626 = vmatpush1.bf16.msra.mxu0 %v587
      %627 = vmatprep.subr.bf16.mxu0 0
      %628 = vmatpush1.bf16.msra.mxu0 %v588
      %629 = vmatprep.subr.bf16.mxu0 0
      %630 = vmatpush1.bf16.msra.mxu0 %v589
      %631 = vmatprep.subr.bf16.mxu0 0
      %632 = vmatpush1.bf16.msra.mxu0 %v590
      %633 = vmatprep.subr.bf16.mxu0 0
      %634 = vmatpush1.bf16.msra.mxu0 %v591
      %635 = vmatprep.subr.bf16.mxu0 0
      %636 = vmatpush1.bf16.msra.mxu0 %v592
      %637 = vmatprep.subr.bf16.mxu0 0
      %638 = vmatpush1.bf16.msra.mxu0 %v593
      %639 = vmatprep.subr.bf16.mxu0 0
      %640 = vmatpush1.bf16.msra.mxu0 %v594
      %641 = vmatprep.subr.bf16.mxu0 0
      %642 = vmatpush1.bf16.msra.mxu0 %v595
      %643 = vmatprep.subr.bf16.mxu0 0
      %644 = vmatpush1.bf16.msra.mxu0 %v596
      %645 = vmatprep.mubr.bf16.mxu0 %v418
      %646 = vmatmul.mubr.bf16.gmra.mrb[0].mxu0 %v417
      %v647 = vpop.f32.mrb[0].mxu0
      %v648 = vadd.f32 %v265, %v647
      %v649 = vpop.f32.mrb[0].mxu0
      %v650 = vpop.f32.mrb[0].mxu0
      %v651 = vadd.f32 %v265, %v650
      %v652 = vpop.f32.mrb[0].mxu0
      %653 = vmatprep.mubr.bf16.mxu0 %v420
      %654 = vmatmul.mubr.bf16.gmra.mrb[0].mxu0 %v419
      %v655 = vpop.f32.mrb[0].mxu0
      %v656 = vadd.f32 %v265, %v655
      %v657 = vpop.f32.mrb[0].mxu0
      %v658 = vpop.f32.mrb[0].mxu0
      %v659 = vadd.f32 %v265, %v658
      %v660 = vpop.f32.mrb[0].mxu0
      %661 = vmatprep.mubr.bf16.mxu0 %v422
      %662 = vmatmul.mubr.bf16.gmra.mrb[0].mxu0 %v421
      %v663 = vpop.f32.mrb[0].mxu0
      %v664 = vadd.f32 %v265, %v663
      %v665 = vpop.f32.mrb[0].mxu0
      %v666 = vpop.f32.mrb[0].mxu0
      %v667 = vadd.f32 %v265, %v666
      %v668 = vpop.f32.mrb[0].mxu0
      %669 = vmatprep.mubr.bf16.mxu0 %v424
      %670 = vmatmul.mubr.bf16.gmra.mrb[0].mxu0 %v423
      %v671 = vpop.f32.mrb[0].mxu0
      %v672 = vadd.f32 %v265, %v671
      %v673 = vpop.f32.mrb[0].mxu0
      %v674 = vpop.f32.mrb[0].mxu0
      %v675 = vadd.f32 %v265, %v674
      %v676 = vpop.f32.mrb[0].mxu0
      %677 = vmatprep.mubr.bf16.mxu0 %v426
      %678 = vmatmul.mubr.bf16.gmra.mrb[0].mxu0 %v425
      %v679 = vpop.f32.mrb[0].mxu0
      %v680 = vadd.f32 %v265, %v679
      %v681 = vpop.f32.mrb[0].mxu0
      %v682 = vpop.f32.mrb[0].mxu0
      %v683 = vadd.f32 %v265, %v682
      %v684 = vpop.f32.mrb[0].mxu0
      %685 = vmatprep.mubr.bf16.mxu0 %v428
      %686 = vmatmul.mubr.bf16.gmra.mrb[0].mxu0 %v427
      %v687 = vpop.f32.mrb[0].mxu0
      %v688 = vadd.f32 %v265, %v687
      %v689 = vpop.f32.mrb[0].mxu0
      %v690 = vpop.f32.mrb[0].mxu0
      %v691 = vadd.f32 %v265, %v690
      %v692 = vpop.f32.mrb[0].mxu0
      %693 = vmatprep.mubr.bf16.mxu0 %v430
      %694 = vmatmul.mubr.bf16.gmra.mrb[0].mxu0 %v429
      %v695 = vpop.f32.mrb[0].mxu0
      %v696 = vadd.f32 %v265, %v695
      %v697 = vpop.f32.mrb[0].mxu0
      %v698 = vpop.f32.mrb[0].mxu0
      %v699 = vadd.f32 %v265, %v698
      %v700 = vpop.f32.mrb[0].mxu0
      %701 = vmatprep.mubr.bf16.mxu0 %v432
      %702 = vmatmul.mubr.bf16.gmra.mrb[0].mxu0 %v431
      %v703 = vpop.f32.mrb[0].mxu0
      %v704 = vadd.f32 %v265, %v703
      %v705 = vpop.f32.mrb[0].mxu0
      %v706 = vpop.f32.mrb[0].mxu0
      %v707 = vadd.f32 %v265, %v706
      %v708 = vpop.f32.mrb[0].mxu0
      %709 = vmatprep.mubr.bf16.mxu0 %v434
      %710 = vmatmul.mubr.bf16.gmra.mrb[0].mxu0 %v433
      %v711 = vpop.f32.mrb[0].mxu0
      %v712 = vadd.f32 %v265, %v711
      %v713 = vpop.f32.mrb[0].mxu0
      %v714 = vpop.f32.mrb[0].mxu0
      %v715 = vadd.f32 %v265, %v714
      %v716 = vpop.f32.mrb[0].mxu0
      %717 = vmatprep.mubr.bf16.mxu0 %v436
      %718 = vmatmul.mubr.bf16.gmra.mrb[0].mxu0 %v435
      %v719 = vpop.f32.mrb[0].mxu0
      %v720 = vadd.f32 %v265, %v719
      %v721 = vpop.f32.mrb[0].mxu0
      %v722 = vpop.f32.mrb[0].mxu0
      %v723 = vadd.f32 %v265, %v722
      %v724 = vpop.f32.mrb[0].mxu0
      %725 = vmatprep.mubr.bf16.mxu0 %v438
      %726 = vmatmul.mubr.bf16.gmra.mrb[0].mxu0 %v437
      %v727 = vpop.f32.mrb[0].mxu0
      %v728 = vadd.f32 %v265, %v727
      %v729 = vpop.f32.mrb[0].mxu0
      %v730 = vpop.f32.mrb[0].mxu0
      %v731 = vadd.f32 %v265, %v730
      %v732 = vpop.f32.mrb[0].mxu0
      %733 = vmatprep.mubr.bf16.mxu0 %v440
      %734 = vmatmul.mubr.bf16.gmra.mrb[0].mxu0 %v439
      %v735 = vpop.f32.mrb[0].mxu0
      %v736 = vadd.f32 %v265, %v735
      %v737 = vpop.f32.mrb[0].mxu0
      %v738 = vpop.f32.mrb[0].mxu0
      %v739 = vadd.f32 %v265, %v738
      %v740 = vpop.f32.mrb[0].mxu0
      %741 = vmatprep.mubr.bf16.mxu0 %v442
      %742 = vmatmul.mubr.bf16.gmra.mrb[0].mxu0 %v441
      %v743 = vpop.f32.mrb[0].mxu0
      %v744 = vadd.f32 %v265, %v743
      %v745 = vpop.f32.mrb[0].mxu0
      %v746 = vpop.f32.mrb[0].mxu0
      %v747 = vadd.f32 %v265, %v746
      %v748 = vpop.f32.mrb[0].mxu0
      %749 = vmatprep.mubr.bf16.mxu0 %v444
      %750 = vmatmul.mubr.bf16.gmra.mrb[0].mxu0 %v443
      %v751 = vpop.f32.mrb[0].mxu0
      %v752 = vadd.f32 %v265, %v751
      %v753 = vpop.f32.mrb[0].mxu0
      %v754 = vpop.f32.mrb[0].mxu0
      %v755 = vadd.f32 %v265, %v754
      %v756 = vpop.f32.mrb[0].mxu0
      %757 = vmatprep.mubr.bf16.mxu0 %v446
      %758 = vmatmul.mubr.bf16.gmra.mrb[0].mxu0 %v445
      %v759 = vpop.f32.mrb[0].mxu0
      %v760 = vadd.f32 %v265, %v759
      %v761 = vpop.f32.mrb[0].mxu0
      %v762 = vpop.f32.mrb[0].mxu0
      %v763 = vadd.f32 %v265, %v762
      %v764 = vpop.f32.mrb[0].mxu0
      %765 = vmatprep.mubr.bf16.mxu0 %v448
      %766 = vmatmul.mubr.bf16.gmra.mrb[0].mxu0 %v447
      %v767 = vpop.f32.mrb[0].mxu0
      %v768 = vadd.f32 %v265, %v767
      %v769 = vpop.f32.mrb[0].mxu0
      %v770 = vpop.f32.mrb[0].mxu0
      %v771 = vadd.f32 %v265, %v770
      %v772 = vpop.f32.mrb[0].mxu0
      %773 = vmatprep.mubr.bf16.mxu0 %v450
      %774 = vmatmul.mubr.bf16.gmra.mrb[0].mxu0 %v449
      %v775 = vpop.f32.mrb[0].mxu0
      %v776 = vadd.f32 %v265, %v775
      %v777 = vpop.f32.mrb[0].mxu0
      %v778 = vpop.f32.mrb[0].mxu0
      %v779 = vadd.f32 %v265, %v778
      %v780 = vpop.f32.mrb[0].mxu0
      %781 = vmatprep.mubr.bf16.mxu0 %v452
      %782 = vmatmul.mubr.bf16.gmra.mrb[0].mxu0 %v451
      %v783 = vpop.f32.mrb[0].mxu0
      %v784 = vadd.f32 %v265, %v783
      %v785 = vpop.f32.mrb[0].mxu0
      %v786 = vpop.f32.mrb[0].mxu0
      %v787 = vadd.f32 %v265, %v786
      %v788 = vpop.f32.mrb[0].mxu0
      %789 = vmatprep.mubr.bf16.mxu0 %v454
      %790 = vmatmul.mubr.bf16.gmra.mrb[0].mxu0 %v453
      %v791 = vpop.f32.mrb[0].mxu0
      %v792 = vadd.f32 %v265, %v791
      %v793 = vpop.f32.mrb[0].mxu0
      %v794 = vpop.f32.mrb[0].mxu0
      %v795 = vadd.f32 %v265, %v794
      %v796 = vpop.f32.mrb[0].mxu0
      %797 = vmatprep.mubr.bf16.mxu0 %v456
      %798 = vmatmul.mubr.bf16.gmra.mrb[0].mxu0 %v455
      %v799 = vpop.f32.mrb[0].mxu0
      %v800 = vadd.f32 %v265, %v799
      %v801 = vpop.f32.mrb[0].mxu0
      %v802 = vpop.f32.mrb[0].mxu0
      %v803 = vadd.f32 %v265, %v802
      %v804 = vpop.f32.mrb[0].mxu0
      %805 = vmatprep.mubr.bf16.mxu0 %v458
      %806 = vmatmul.mubr.bf16.gmra.mrb[0].mxu0 %v457
      %v807 = vpop.f32.mrb[0].mxu0
      %v808 = vadd.f32 %v265, %v807
      %v809 = vpop.f32.mrb[0].mxu0
      %v810 = vpop.f32.mrb[0].mxu0
      %v811 = vadd.f32 %v265, %v810
      %v812 = vpop.f32.mrb[0].mxu0
      %813 = vmatprep.mubr.bf16.mxu0 %v460
      %814 = vmatmul.mubr.bf16.gmra.mrb[0].mxu0 %v459
      %v815 = vpop.f32.mrb[0].mxu0
      %v816 = vadd.f32 %v265, %v815
      %v817 = vpop.f32.mrb[0].mxu0
      %v818 = vpop.f32.mrb[0].mxu0
      %v819 = vadd.f32 %v265, %v818
      %v820 = vpop.f32.mrb[0].mxu0
      %821 = vmatprep.mubr.bf16.mxu0 %v462
      %822 = vmatmul.mubr.bf16.gmra.mrb[0].mxu0 %v461
      %v823 = vpop.f32.mrb[0].mxu0
      %v824 = vadd.f32 %v265, %v823
      %v825 = vpop.f32.mrb[0].mxu0
      %v826 = vpop.f32.mrb[0].mxu0
      %v827 = vadd.f32 %v265, %v826
      %v828 = vpop.f32.mrb[0].mxu0
      %829 = vmatprep.mubr.bf16.mxu0 %v464
      %830 = vmatmul.mubr.bf16.gmra.mrb[0].mxu0 %v463
      %v831 = vpop.f32.mrb[0].mxu0
      %v832 = vadd.f32 %v265, %v831
      %v833 = vpop.f32.mrb[0].mxu0
      %v834 = vpop.f32.mrb[0].mxu0
      %v835 = vadd.f32 %v265, %v834
      %v836 = vpop.f32.mrb[0].mxu0
      %837 = vmatprep.mubr.bf16.mxu0 %v466
      %838 = vmatmul.mubr.bf16.gmra.mrb[0].mxu0 %v465
      %v839 = vpop.f32.mrb[0].mxu0
      %v840 = vadd.f32 %v265, %v839
      %v841 = vpop.f32.mrb[0].mxu0
      %v842 = vpop.f32.mrb[0].mxu0
      %v843 = vadd.f32 %v265, %v842
      %v844 = vpop.f32.mrb[0].mxu0
      %845 = vdwg.mxu0
      %v846 = vmax.f32 %v648, 0.0
      %v847 = vmax.f32 %v651, 0.0
      %v848 = vmax.f32 %v656, 0.0
      %v849 = vmax.f32 %v659, 0.0
      %v850 = vmax.f32 %v664, 0.0
      %v851 = vmax.f32 %v667, 0.0
      %v852 = vmax.f32 %v672, 0.0
      %v853 = vmax.f32 %v675, 0.0
      %v854 = vmax.f32 %v680, 0.0
      %v855 = vmax.f32 %v683, 0.0
      %v856 = vmax.f32 %v688, 0.0
      %v857 = vmax.f32 %v691, 0.0
      %v858 = vmax.f32 %v696, 0.0
      %v859 = vmax.f32 %v699, 0.0
      %v860 = vmax.f32 %v704, 0.0
      %v861 = vmax.f32 %v707, 0.0
      %v862 = vmax.f32 %v712, 0.0
      %v863 = vmax.f32 %v715, 0.0
      %v864 = vmax.f32 %v720, 0.0
      %v865 = vmax.f32 %v723, 0.0
      %v866 = vmax.f32 %v728, 0.0
      %v867 = vmax.f32 %v731, 0.0
      %v868 = vmax.f32 %v736, 0.0
      %v869 = vmax.f32 %v739, 0.0
      %v870 = vmax.f32 %v744, 0.0
      %v871 = vmax.f32 %v747, 0.0
      %v872 = vmax.f32 %v752, 0.0
      %v873 = vmax.f32 %v755, 0.0
      %v874 = vmax.f32 %v760, 0.0
      %v875 = vmax.f32 %v763, 0.0
      %v876 = vmax.f32 %v768, 0.0
      %v877 = vmax.f32 %v771, 0.0
      %v878 = vmax.f32 %v776, 0.0
      %v879 = vmax.f32 %v779, 0.0
      %v880 = vmax.f32 %v784, 0.0
      %v881 = vmax.f32 %v787, 0.0
      %v882 = vmax.f32 %v792, 0.0
      %v883 = vmax.f32 %v795, 0.0
      %v884 = vmax.f32 %v800, 0.0
      %v885 = vmax.f32 %v803, 0.0
      %v886 = vmax.f32 %v808, 0.0
      %v887 = vmax.f32 %v811, 0.0
      %v888 = vmax.f32 %v816, 0.0
      %v889 = vmax.f32 %v819, 0.0
      %v890 = vmax.f32 %v824, 0.0
      %v891 = vmax.f32 %v827, 0.0
      %v892 = vmax.f32 %v832, 0.0
      %v893 = vmax.f32 %v835, 0.0
      %v894 = vmax.f32 %v840, 0.0
      %v895 = vmax.f32 %v843, 0.0
      %v896 = vpack.c.bf16 %v847, %v846
      %v897 = vpack.c.bf16 %v849, %v848
      %v898 = vpack.c.bf16 %v851, %v850
      %v899 = vpack.c.bf16 %v853, %v852
      %v900 = vpack.c.bf16 %v855, %v854
      %v901 = vpack.c.bf16 %v857, %v856
      %v902 = vpack.c.bf16 %v859, %v858
      %v903 = vpack.c.bf16 %v861, %v860
      %v904 = vpack.c.bf16 %v863, %v862
      %v905 = vpack.c.bf16 %v865, %v864
      %v906 = vpack.c.bf16 %v867, %v866
      %v907 = vpack.c.bf16 %v869, %v868
      %v908 = vpack.c.bf16 %v871, %v870
      %v909 = vpack.c.bf16 %v873, %v872
      %v910 = vpack.c.bf16 %v875, %v874
      %v911 = vpack.c.bf16 %v877, %v876
      %v912 = vpack.c.bf16 %v879, %v878
      %v913 = vpack.c.bf16 %v881, %v880
      %v914 = vpack.c.bf16 %v883, %v882
      %v915 = vpack.c.bf16 %v885, %v884
      %v916 = vpack.c.bf16 %v887, %v886
      %v917 = vpack.c.bf16 %v889, %v888
      %v918 = vpack.c.bf16 %v891, %v890
      %v919 = vpack.c.bf16 %v893, %v892
      %v920 = vpack.c.bf16 %v895, %v894
      %v946 = vunpack.c.l.b16 %v896
      %v947 = vunpack.c.h.b16 %v896
      %v948 = vunpack.c.l.b16 %v897
      %v949 = vunpack.c.h.b16 %v897
      %v950 = vunpack.c.l.b16 %v898
      %v951 = vunpack.c.h.b16 %v898
      %v952 = vunpack.c.l.b16 %v899
      %v953 = vunpack.c.h.b16 %v899
      %v954 = vunpack.c.l.b16 %v900
      %v955 = vunpack.c.h.b16 %v900
      %v956 = vunpack.c.l.b16 %v901
      %v957 = vunpack.c.h.b16 %v901
      %v958 = vunpack.c.l.b16 %v902
      %v959 = vunpack.c.h.b16 %v902
      %v960 = vunpack.c.l.b16 %v903
      %v961 = vunpack.c.h.b16 %v903
      %v962 = vunpack.c.l.b16 %v904
      %v963 = vunpack.c.h.b16 %v904
      %v964 = vunpack.c.l.b16 %v905
      %v965 = vunpack.c.h.b16 %v905
      %v966 = vunpack.c.l.b16 %v906
      %v967 = vunpack.c.h.b16 %v906
      %v968 = vunpack.c.l.b16 %v907
      %v969 = vunpack.c.h.b16 %v907
      %v970 = vunpack.c.l.b16 %v908
      %v971 = vunpack.c.h.b16 %v908
      %v972 = vunpack.c.l.b16 %v909
      %v973 = vunpack.c.h.b16 %v909
      %v974 = vunpack.c.l.b16 %v910
      %v975 = vunpack.c.h.b16 %v910
      %v976 = vunpack.c.l.b16 %v911
      %v977 = vunpack.c.h.b16 %v911
      %v978 = vunpack.c.l.b16 %v912
      %v979 = vunpack.c.h.b16 %v912
      %v980 = vunpack.c.l.b16 %v913
      %v981 = vunpack.c.h.b16 %v913
      %v982 = vunpack.c.l.b16 %v914
      %v983 = vunpack.c.h.b16 %v914
      %v984 = vunpack.c.l.b16 %v915
      %v985 = vunpack.c.h.b16 %v915
      %v986 = vunpack.c.l.b16 %v916
      %v987 = vunpack.c.h.b16 %v916
      %v988 = vunpack.c.l.b16 %v917
      %v989 = vunpack.c.h.b16 %v917
      %v990 = vunpack.c.l.b16 %v918
      %v991 = vunpack.c.h.b16 %v918
      %v992 = vunpack.c.l.b16 %v919
      %v993 = vunpack.c.h.b16 %v919
      %v994 = vunpack.c.l.b16 %v920
      %v995 = vunpack.c.h.b16 %v920
      %v996 = vpack.c.b16 %v946, %v946
      %v997 = vpack.c.b16 %v947, %v947
      %v998 = vpack.c.b16 %v948, %v948
      %v999 = vpack.c.b16 %v949, %v949
      %v1000 = vpack.c.b16 %v950, %v950
      %v1001 = vpack.c.b16 %v951, %v951
      %v1002 = vpack.c.b16 %v952, %v952
      %v1003 = vpack.c.b16 %v953, %v953
      %v1004 = vpack.c.b16 %v954, %v954
      %v1005 = vpack.c.b16 %v955, %v955
      %v1006 = vpack.c.b16 %v956, %v956
      %v1007 = vpack.c.b16 %v957, %v957
      %v1008 = vpack.c.b16 %v958, %v958
      %v1009 = vpack.c.b16 %v959, %v959
      %v1010 = vpack.c.b16 %v960, %v960
      %v1011 = vpack.c.b16 %v961, %v961
      %v1012 = vpack.c.b16 %v962, %v962
      %v1013 = vpack.c.b16 %v963, %v963
      %v1014 = vpack.c.b16 %v964, %v964
      %v1015 = vpack.c.b16 %v965, %v965
      %v1016 = vpack.c.b16 %v966, %v966
      %v1017 = vpack.c.b16 %v967, %v967
      %v1018 = vpack.c.b16 %v968, %v968
      %v1019 = vpack.c.b16 %v969, %v969
      %v1020 = vpack.c.b16 %v970, %v970
      %v1021 = vpack.c.b16 %v971, %v971
      %v1022 = vpack.c.b16 %v972, %v972
      %v1023 = vpack.c.b16 %v973, %v973
      %v1024 = vpack.c.b16 %v974, %v974
      %v1025 = vpack.c.b16 %v975, %v975
      %v1026 = vpack.c.b16 %v976, %v976
      %v1027 = vpack.c.b16 %v977, %v977
      %v1028 = vpack.c.b16 %v978, %v978
      %v1029 = vpack.c.b16 %v979, %v979
      %v1030 = vpack.c.b16 %v980, %v980
      %v1031 = vpack.c.b16 %v981, %v981
      %v1032 = vpack.c.b16 %v982, %v982
      %v1033 = vpack.c.b16 %v983, %v983
      %v1034 = vpack.c.b16 %v984, %v984
      %v1035 = vpack.c.b16 %v985, %v985
      %v1036 = vpack.c.b16 %v986, %v986
      %v1037 = vpack.c.b16 %v987, %v987
      %v1038 = vpack.c.b16 %v988, %v988
      %v1039 = vpack.c.b16 %v989, %v989
      %v1040 = vpack.c.b16 %v990, %v990
      %v1041 = vpack.c.b16 %v991, %v991
      %v1042 = vpack.c.b16 %v992, %v992
      %v1043 = vpack.c.b16 %v993, %v993
      %v1044 = vpack.c.b16 %v994, %v994
      %v1045 = vpack.c.b16 %v995, %v995
      %vm1096 = vcmask 257024
      %1097 = vst.msk [vmem:[%s175] sm:$0xf] %vm1096, %v996
      %1098 = vst.msk [vmem:[%s175 + $0x4] sm:$0xf] %vm1096, %v997
      %1099 = vst.msk [vmem:[%s175 + $0x8] sm:$0xf] %vm1096, %v998
      %1100 = vst.msk [vmem:[%s175 + $0xc] sm:$0xf] %vm1096, %v999
      %1101 = vst.msk [vmem:[%s175 + $0x10] sm:$0xf] %vm1096, %v1000
      %1102 = vst.msk [vmem:[%s175 + $0x14] sm:$0xf] %vm1096, %v1001
      %1103 = vst.msk [vmem:[%s175 + $0x18] sm:$0xf] %vm1096, %v1002
      %1104 = vst.msk [vmem:[%s175 + $0x1c] sm:$0xf] %vm1096, %v1003
      %1105 = vst.msk [vmem:[%s175 + $0x20] sm:$0xf] %vm1096, %v1004
      %1106 = vst.msk [vmem:[%s175 + $0x24] sm:$0xf] %vm1096, %v1005
      %1107 = vst.msk [vmem:[%s175 + $0x28] sm:$0xf] %vm1096, %v1006
      %1108 = vst.msk [vmem:[%s175 + $0x2c] sm:$0xf] %vm1096, %v1007
      %1109 = vst.msk [vmem:[%s175 + $0x30] sm:$0xf] %vm1096, %v1008
      %1110 = vst.msk [vmem:[%s175 + $0x34] sm:$0xf] %vm1096, %v1009
      %1111 = vst.msk [vmem:[%s175 + $0x38] sm:$0xf] %vm1096, %v1010
      %1112 = vst.msk [vmem:[%s175 + $0x3c] sm:$0xf] %vm1096, %v1011
      %1113 = vst.msk [vmem:[%s175 + $0x40] sm:$0xf] %vm1096, %v1012
      %1114 = vst.msk [vmem:[%s175 + $0x44] sm:$0xf] %vm1096, %v1013
      %1115 = vst.msk [vmem:[%s175 + $0x48] sm:$0xf] %vm1096, %v1014
      %1116 = vst.msk [vmem:[%s175 + $0x4c] sm:$0xf] %vm1096, %v1015
      %1117 = vst.msk [vmem:[%s175 + $0x50] sm:$0xf] %vm1096, %v1016
      %1118 = vst.msk [vmem:[%s175 + $0x54] sm:$0xf] %vm1096, %v1017
      %1119 = vst.msk [vmem:[%s175 + $0x58] sm:$0xf] %vm1096, %v1018
      %1120 = vst.msk [vmem:[%s175 + $0x5c] sm:$0xf] %vm1096, %v1019
      %1121 = vst.msk [vmem:[%s175 + $0x60] sm:$0xf] %vm1096, %v1020
      %1122 = vst.msk [vmem:[%s175 + $0x64] sm:$0xf] %vm1096, %v1021
      %1123 = vst.msk [vmem:[%s175 + $0x68] sm:$0xf] %vm1096, %v1022
      %1124 = vst.msk [vmem:[%s175 + $0x6c] sm:$0xf] %vm1096, %v1023
      %1125 = vst.msk [vmem:[%s175 + $0x70] sm:$0xf] %vm1096, %v1024
      %1126 = vst.msk [vmem:[%s175 + $0x74] sm:$0xf] %vm1096, %v1025
      %1127 = vst.msk [vmem:[%s175 + $0x78] sm:$0xf] %vm1096, %v1026
      %1128 = vst.msk [vmem:[%s175 + $0x7c] sm:$0xf] %vm1096, %v1027
      %1129 = vst.msk [vmem:[%s175 + $0x80] sm:$0xf] %vm1096, %v1028
      %1130 = vst.msk [vmem:[%s175 + $0x84] sm:$0xf] %vm1096, %v1029
      %1131 = vst.msk [vmem:[%s175 + $0x88] sm:$0xf] %vm1096, %v1030
      %1132 = vst.msk [vmem:[%s175 + $0x8c] sm:$0xf] %vm1096, %v1031
      %1133 = vst.msk [vmem:[%s175 + $0x90] sm:$0xf] %vm1096, %v1032
      %1134 = vst.msk [vmem:[%s175 + $0x94] sm:$0xf] %vm1096, %v1033
      %1135 = vst.msk [vmem:[%s175 + $0x98] sm:$0xf] %vm1096, %v1034
      %1136 = vst.msk [vmem:[%s175 + $0x9c] sm:$0xf] %vm1096, %v1035
      %1137 = vst.msk [vmem:[%s175 + $0xa0] sm:$0xf] %vm1096, %v1036
      %1138 = vst.msk [vmem:[%s175 + $0xa4] sm:$0xf] %vm1096, %v1037
      %1139 = vst.msk [vmem:[%s175 + $0xa8] sm:$0xf] %vm1096, %v1038
      %1140 = vst.msk [vmem:[%s175 + $0xac] sm:$0xf] %vm1096, %v1039
      %1141 = vst.msk [vmem:[%s175 + $0xb0] sm:$0xf] %vm1096, %v1040
      %1142 = vst.msk [vmem:[%s175 + $0xb4] sm:$0xf] %vm1096, %v1041
      %1143 = vst.msk [vmem:[%s175 + $0xb8] sm:$0xf] %vm1096, %v1042
      %1144 = vst.msk [vmem:[%s175 + $0xbc] sm:$0xf] %vm1096, %v1043
      %1145 = vst.msk [vmem:[%s175 + $0xc0] sm:$0xf] %vm1096, %v1044
      %1146 = vst.msk [vmem:[%s175 + $0xc4] sm:$0xf] %vm1096, %v1045
      %s1147 = smul.u32 50, %s14
      %p1148 = scmp.lt.s32.totalorder %s1147, 99
      %s1149 = scalar_select %p1148, %s1147, 99
      %s1150 = smul.addr %s1149, 4
      %s1151 = scalar_lea.vmem %s3, %s1150
      // Predicated region
      $region33: #{rainbow_dqn_forward.4} parent=31 // pred_check
        %p1152 = pneg %p100
      $region34: #{rainbow_dqn_forward.4} parent=31 // pred_check_branch
        %1154 = sbr.rel (%p1152) target = $region36
      $region35: #{rainbow_dqn_forward.4} parent=31 // pred_region
        %s1155 = smul.u32 50, %s14
      $region36: #{rainbow_dqn_forward.4} parent=31 // pred_fallthru
        _
    $region32: #{rainbow_dqn_forward.4} parent=5 // pred_fallthru
      _
    %p1156 = scmp.le.s32.totalorder 2, %s9
    // Predicated region
    $region37: #{rainbow_dqn_forward.4} parent=5 // pred_check
      %p1157 = pneg %p1156
    $region38: #{rainbow_dqn_forward.4} parent=5 // pred_check_branch
      %1159 = sbr.rel (%p1157) target = $region40
    $region39: #{rainbow_dqn_forward.4} parent=5 // pred_region
      %s1160 = ssub.s32 %s9, 2
      // Predicated region
      $region41: #{rainbow_dqn_forward.4} parent=39 // pred_check
        %p1161 = pneg %p106
      $region42: #{rainbow_dqn_forward.4} parent=39 // pred_check_branch
        %1163 = sbr.rel (%p1161) target = $region44
      $region43: #{rainbow_dqn_forward.4} parent=39 // pred_region
        %s1164 = smul.u32 50, %s15
        %p1165 = scmp.lt.s32.totalorder %s1164, 99
        %s1166 = scalar_select %p1165, %s1164, 99
        %s1167 = smul.addr %s1166, 4
        %s1168 = scalar_lea.vmem %s3, %s1167
      $region44: #{rainbow_dqn_forward.4} parent=39 // pred_fallthru
        _
    $region40: #{rainbow_dqn_forward.4} parent=5 // pred_fallthru
      _
  $region6: #{rainbow_dqn_forward.4} parent=0 // loop_footer
    %s13 = sadd.s32 1, %s9
  $region7: #{rainbow_dqn_forward.4} parent=0 // loop_footer_branch
    %8 = sbr.rel target = $region3
  $region8: #{rainbow_dqn_forward.4} parent=0 // loop_exit
    _

// kernel: rainbow_dqn_forward.5
$region0: #{rainbow_dqn_forward.5}
  #allocation0 [shape = 'u32[]', space=smem, size = 0x4, offset = 0x4, fixed_abs, tag = 'smem constant byte address 0x4 - core index']
  #allocation1 [shape = 'u32[144,128]{1,0:T(1,128)}', space=vmem, size = 0x12000, scoped, tag = 'internal scratch']
  %s0 = inlined_call_operand.vmem [shape: bf16[162,512], index: 0, kind: input, shape index: {}]
  %s1 = inlined_call_operand.vmem [shape: bf16[512,64], index: 1, kind: input, shape index: {}]
  %s2 = inlined_call_operand.vmem [shape: f32[1,64], index: 2, kind: input, shape index: {}]
  %s3 = inlined_call_operand.vmem [shape: bf16[162,64], index: 3, kind: output, shape index: {}]
  %s4 = sld [smem:[#allocation0]]
  $region22: #{rainbow_dqn_forward.5} parent=0
    _
  %s6 = ssub.s32 1, %s4
  %s7 = scalar_select 0, %s6, %s4
  // Predicated region
  $region2: #{rainbow_dqn_forward.5} parent=0 // pred_check
    _
  $region3: #{rainbow_dqn_forward.5} parent=0 // pred_check_branch
    %9 = sbr.rel (0) target = $region5
  $region4: #{rainbow_dqn_forward.5} parent=0 // pred_region
    _
  $region5: #{rainbow_dqn_forward.5} parent=0 // pred_fallthru
    _
  // Predicated region
  $region6: #{rainbow_dqn_forward.5} parent=0 // pred_check
    _
  $region7: #{rainbow_dqn_forward.5} parent=0 // pred_check_branch
    %11 = sbr.rel (0) target = $region9
  $region8: #{rainbow_dqn_forward.5} parent=0 // pred_region
    _
  $region9: #{rainbow_dqn_forward.5} parent=0 // pred_fallthru
    _
  // Predicated region
  $region10: #{rainbow_dqn_forward.5} parent=0 // pred_check
    _
  $region11: #{rainbow_dqn_forward.5} parent=0 // pred_check_branch
    %13 = sbr.rel (0) target = $region13
  $region12: #{rainbow_dqn_forward.5} parent=0 // pred_region
    _
  $region13: #{rainbow_dqn_forward.5} parent=0 // pred_fallthru
    _
  %v15 = vld [vmem:[%s0] sm:$0xff]
  %v16 = vld [vmem:[%s0 + $0x8] sm:$0xff]
  %v17 = vld [vmem:[%s0 + $0x10] sm:$0xff]
  %v18 = vld [vmem:[%s0 + $0x18] sm:$0xff]
  %v19 = vld [vmem:[%s0 + $0x20] sm:$0xff]
  %v20 = vld [vmem:[%s0 + $0x28] sm:$0xff]
  %v21 = vld [vmem:[%s0 + $0x30] sm:$0xff]
  %v22 = vld [vmem:[%s0 + $0x38] sm:$0xff]
  %v23 = vld [vmem:[%s0 + $0x40] sm:$0xff]
  %v24 = vld [vmem:[%s0 + $0x48] sm:$0xff]
  %v25 = vld [vmem:[%s0 + $0x50] sm:$0xff]
  %v26 = vld [vmem:[%s0 + $0x58] sm:$0xff]
  %v27 = vld [vmem:[%s0 + $0x60] sm:$0xff]
  %v28 = vld [vmem:[%s0 + $0x68] sm:$0xff]
  %v29 = vld [vmem:[%s0 + $0x70] sm:$0xff]
  %v30 = vld [vmem:[%s0 + $0x78] sm:$0xff]
  %v31 = vld [vmem:[%s0 + $0x80] sm:$0xff]
  %v32 = vld [vmem:[%s0 + $0x88] sm:$0xff]
  %v33 = vld [vmem:[%s0 + $0x90] sm:$0xff]
  %v34 = vld [vmem:[%s0 + $0x98] sm:$0xff]
  %v35 = vld [vmem:[%s0 + $0xa0] sm:$0xff]
  %v36 = vld [vmem:[%s0 + $0xa8] sm:$0xff]
  %v37 = vld [vmem:[%s0 + $0xb0] sm:$0xff]
  %v38 = vld [vmem:[%s0 + $0xb8] sm:$0xff]
  %v39 = vld [vmem:[%s0 + $0xc0] sm:$0xff]
  %v40 = vld [vmem:[%s0 + $0xc8] sm:$0xff]
  %v41 = vld [vmem:[%s0 + $0xd0] sm:$0xff]
  %v42 = vld [vmem:[%s0 + $0xd8] sm:$0xff]
  %v43 = vld [vmem:[%s0 + $0xe0] sm:$0xff]
  %v44 = vld [vmem:[%s0 + $0xe8] sm:$0xff]
  %v45 = vld [vmem:[%s0 + $0xf0] sm:$0xff]
  %v46 = vld [vmem:[%s0 + $0xf8] sm:$0xff]
  %v47 = vld [vmem:[%s0 + $0x100] sm:$0xff]
  %v48 = vld [vmem:[%s0 + $0x108] sm:$0xff]
  %v49 = vld [vmem:[%s0 + $0x110] sm:$0xff]
  %v50 = vld [vmem:[%s0 + $0x118] sm:$0xff]
  %v51 = vld [vmem:[%s0 + $0x120] sm:$0xff]
  %v52 = vld [vmem:[%s0 + $0x128] sm:$0xff]
  %v53 = vld [vmem:[%s0 + $0x130] sm:$0xff]
  %v54 = vld [vmem:[%s0 + $0x138] sm:$0xff]
  %v55 = vld [vmem:[%s0 + $0x140] sm:$0x11]
  %v56 = vld [vmem:[%s0 + $0x148] sm:$0x11]
  %v57 = vld [vmem:[%s1] sm:$0xf]
  %v58 = vld [vmem:[%s1 + $0x4] sm:$0xf]
  %v59 = vld [vmem:[%s1 + $0x8] sm:$0xf]
  %v60 = vld [vmem:[%s1 + $0xc] sm:$0xf]
  %v61 = vld [vmem:[%s1 + $0x10] sm:$0xf]
  %v62 = vld [vmem:[%s1 + $0x14] sm:$0xf]
  %v63 = vld [vmem:[%s1 + $0x18] sm:$0xf]
  %v64 = vld [vmem:[%s1 + $0x1c] sm:$0xf]
  %v65 = vld [vmem:[%s1 + $0x20] sm:$0xf]
  %v66 = vld [vmem:[%s1 + $0x24] sm:$0xf]
  %v67 = vld [vmem:[%s1 + $0x28] sm:$0xf]
  %v68 = vld [vmem:[%s1 + $0x2c] sm:$0xf]
  %v69 = vld [vmem:[%s1 + $0x30] sm:$0xf]
  %v70 = vld [vmem:[%s1 + $0x34] sm:$0xf]
  %v71 = vld [vmem:[%s1 + $0x38] sm:$0xf]
  %v72 = vld [vmem:[%s1 + $0x3c] sm:$0xf]
  %v73 = vld [vmem:[%s1 + $0x40] sm:$0xf]
  %v74 = vld [vmem:[%s1 + $0x44] sm:$0xf]
  %v75 = vld [vmem:[%s1 + $0x48] sm:$0xf]
  %v76 = vld [vmem:[%s1 + $0x4c] sm:$0xf]
  %v77 = vld [vmem:[%s1 + $0x50] sm:$0xf]
  %v78 = vld [vmem:[%s1 + $0x54] sm:$0xf]
  %v79 = vld [vmem:[%s1 + $0x58] sm:$0xf]
  %v80 = vld [vmem:[%s1 + $0x5c] sm:$0xf]
  %v81 = vld [vmem:[%s1 + $0x60] sm:$0xf]
  %v82 = vld [vmem:[%s1 + $0x64] sm:$0xf]
  %v83 = vld [vmem:[%s1 + $0x68] sm:$0xf]
  %v84 = vld [vmem:[%s1 + $0x6c] sm:$0xf]
  %v85 = vld [vmem:[%s1 + $0x70] sm:$0xf]
  %v86 = vld [vmem:[%s1 + $0x74] sm:$0xf]
  %v87 = vld [vmem:[%s1 + $0x78] sm:$0xf]
  %v88 = vld [vmem:[%s1 + $0x7c] sm:$0xf]
  %v89 = vld [vmem:[%s1 + $0x80] sm:$0xf]
  %v90 = vld [vmem:[%s1 + $0x84] sm:$0xf]
  %v91 = vld [vmem:[%s1 + $0x88] sm:$0xf]
  %v92 = vld [vmem:[%s1 + $0x8c] sm:$0xf]
  %v93 = vld [vmem:[%s1 + $0x90] sm:$0xf]
  %v94 = vld [vmem:[%s1 + $0x94] sm:$0xf]
  %v95 = vld [vmem:[%s1 + $0x98] sm:$0xf]
  %v96 = vld [vmem:[%s1 + $0x9c] sm:$0xf]
  %v97 = vld [vmem:[%s1 + $0xa0] sm:$0xf]
  %v98 = vld [vmem:[%s1 + $0xa4] sm:$0xf]
  %v99 = vld [vmem:[%s1 + $0xa8] sm:$0xf]
  %v100 = vld [vmem:[%s1 + $0xac] sm:$0xf]
  %v101 = vld [vmem:[%s1 + $0xb0] sm:$0xf]
  %v102 = vld [vmem:[%s1 + $0xb4] sm:$0xf]
  %v103 = vld [vmem:[%s1 + $0xb8] sm:$0xf]
  %v104 = vld [vmem:[%s1 + $0xbc] sm:$0xf]
  %v105 = vld [vmem:[%s1 + $0xc0] sm:$0xf]
  %v106 = vld [vmem:[%s1 + $0xc4] sm:$0xf]
  %v107 = vld [vmem:[%s1 + $0xc8] sm:$0xf]
  %v108 = vld [vmem:[%s1 + $0xcc] sm:$0xf]
  %v109 = vld [vmem:[%s1 + $0xd0] sm:$0xf]
  %v110 = vld [vmem:[%s1 + $0xd4] sm:$0xf]
  %v111 = vld [vmem:[%s1 + $0xd8] sm:$0xf]
  %v112 = vld [vmem:[%s1 + $0xdc] sm:$0xf]
  %v113 = vld [vmem:[%s1 + $0xe0] sm:$0xf]
  %v114 = vld [vmem:[%s1 + $0xe4] sm:$0xf]
  %v115 = vld [vmem:[%s1 + $0xe8] sm:$0xf]
  %v116 = vld [vmem:[%s1 + $0xec] sm:$0xf]
  %v117 = vld [vmem:[%s1 + $0xf0] sm:$0xf]
  %v118 = vld [vmem:[%s1 + $0xf4] sm:$0xf]
  %v119 = vld [vmem:[%s1 + $0xf8] sm:$0xf]
  %v120 = vld [vmem:[%s1 + $0xfc] sm:$0xf]
  %v121 = vld [vmem:[%s2] sm:$0x1]
  %v123 = vlaneseq
  %v124 = vshrl.u32 %v123, 7
  %v125 = vsub.s32 0, %v124
  %v126 = vrot.slane %v121, %v125
  %v170 = vunpack.c.l.b16 %v15
  %v171 = vunpack.c.h.b16 %v15
  %v172 = vunpack.c.l.b16 %v16
  %v173 = vunpack.c.h.b16 %v16
  %v174 = vunpack.c.l.b16 %v17
  %v175 = vunpack.c.h.b16 %v17
  %v176 = vunpack.c.l.b16 %v18
  %v177 = vunpack.c.h.b16 %v18
  %v178 = vunpack.c.l.b16 %v19
  %v179 = vunpack.c.h.b16 %v19
  %v180 = vunpack.c.l.b16 %v20
  %v181 = vunpack.c.h.b16 %v20
  %v182 = vunpack.c.l.b16 %v21
  %v183 = vunpack.c.h.b16 %v21
  %v184 = vunpack.c.l.b16 %v22
  %v185 = vunpack.c.h.b16 %v22
  %v186 = vunpack.c.l.b16 %v23
  %v187 = vunpack.c.h.b16 %v23
  %v188 = vunpack.c.l.b16 %v24
  %v189 = vunpack.c.h.b16 %v24
  %v190 = vunpack.c.l.b16 %v25
  %v191 = vunpack.c.h.b16 %v25
  %v192 = vunpack.c.l.b16 %v26
  %v193 = vunpack.c.h.b16 %v26
  %v194 = vunpack.c.l.b16 %v27
  %v195 = vunpack.c.h.b16 %v27
  %v196 = vunpack.c.l.b16 %v28
  %v197 = vunpack.c.h.b16 %v28
  %v198 = vunpack.c.l.b16 %v29
  %v199 = vunpack.c.h.b16 %v29
  %v200 = vunpack.c.l.b16 %v30
  %v201 = vunpack.c.h.b16 %v30
  %v202 = vunpack.c.l.b16 %v31
  %v203 = vunpack.c.h.b16 %v31
  %v204 = vunpack.c.l.b16 %v32
  %v205 = vunpack.c.h.b16 %v32
  %v206 = vunpack.c.l.b16 %v33
  %v207 = vunpack.c.h.b16 %v33
  %v208 = vunpack.c.l.b16 %v34
  %v209 = vunpack.c.h.b16 %v34
  %v210 = vunpack.c.l.b16 %v35
  %v211 = vunpack.c.h.b16 %v35
  %v212 = vunpack.c.l.b16 %v36
  %v213 = vunpack.c.h.b16 %v36
  %v214 = vunpack.c.l.b16 %v37
  %v215 = vunpack.c.h.b16 %v37
  %v216 = vunpack.c.l.b16 %v38
  %v217 = vunpack.c.h.b16 %v38
  %v218 = vunpack.c.l.b16 %v39
  %v219 = vunpack.c.h.b16 %v39
  %v220 = vunpack.c.l.b16 %v40
  %v221 = vunpack.c.h.b16 %v40
  %v222 = vunpack.c.l.b16 %v41
  %v223 = vunpack.c.h.b16 %v41
  %v224 = vunpack.c.l.b16 %v42
  %v225 = vunpack.c.h.b16 %v42
  %v226 = vunpack.c.l.b16 %v43
  %v227 = vunpack.c.h.b16 %v43
  %v228 = vunpack.c.l.b16 %v44
  %v229 = vunpack.c.h.b16 %v44
  %v230 = vunpack.c.l.b16 %v45
  %v231 = vunpack.c.h.b16 %v45
  %v232 = vunpack.c.l.b16 %v46
  %v233 = vunpack.c.h.b16 %v46
  %v234 = vunpack.c.l.b16 %v47
  %v235 = vunpack.c.h.b16 %v47
  %v236 = vunpack.c.l.b16 %v48
  %v237 = vunpack.c.h.b16 %v48
  %v238 = vunpack.c.l.b16 %v49
  %v239 = vunpack.c.h.b16 %v49
  %v240 = vunpack.c.l.b16 %v50
  %v241 = vunpack.c.h.b16 %v50
  %v242 = vunpack.c.l.b16 %v51
  %v243 = vunpack.c.h.b16 %v51
  %v244 = vunpack.c.l.b16 %v52
  %v245 = vunpack.c.h.b16 %v52
  %v246 = vunpack.c.l.b16 %v53
  %v247 = vunpack.c.h.b16 %v53
  %v248 = vunpack.c.l.b16 %v54
  %v249 = vunpack.c.h.b16 %v54
  %v250 = vunpack.c.l.b16 %v55
  %v251 = vunpack.c.h.b16 %v55
  %v252 = vunpack.c.l.b16 %v56
  %v253 = vunpack.c.h.b16 %v56
  %v254 = vpack.c.b16 %v174, %v170
  %v255 = vpack.c.b16 %v175, %v171
  %v256 = vpack.c.b16 %v176, %v172
  %v257 = vpack.c.b16 %v177, %v173
  %v258 = vpack.c.b16 %v182, %v178
  %v259 = vpack.c.b16 %v183, %v179
  %v260 = vpack.c.b16 %v184, %v180
  %v261 = vpack.c.b16 %v185, %v181
  %v262 = vpack.c.b16 %v190, %v186
  %v263 = vpack.c.b16 %v191, %v187
  %v264 = vpack.c.b16 %v192, %v188
  %v265 = vpack.c.b16 %v193, %v189
  %v266 = vpack.c.b16 %v198, %v194
  %v267 = vpack.c.b16 %v199, %v195
  %v268 = vpack.c.b16 %v200, %v196
  %v269 = vpack.c.b16 %v201, %v197
  %v270 = vpack.c.b16 %v206, %v202
  %v271 = vpack.c.b16 %v207, %v203
  %v272 = vpack.c.b16 %v208, %v204
  %v273 = vpack.c.b16 %v209, %v205
  %v274 = vpack.c.b16 %v214, %v210
  %v275 = vpack.c.b16 %v215, %v211
  %v276 = vpack.c.b16 %v216, %v212
  %v277 = vpack.c.b16 %v217, %v213
  %v278 = vpack.c.b16 %v222, %v218
  %v279 = vpack.c.b16 %v223, %v219
  %v280 = vpack.c.b16 %v224, %v220
  %v281 = vpack.c.b16 %v225, %v221
  %v282 = vpack.c.b16 %v230, %v226
  %v283 = vpack.c.b16 %v231, %v227
  %v284 = vpack.c.b16 %v232, %v228
  %v285 = vpack.c.b16 %v233, %v229
  %v286 = vpack.c.b16 %v238, %v234
  %v287 = vpack.c.b16 %v239, %v235
  %v288 = vpack.c.b16 %v240, %v236
  %v289 = vpack.c.b16 %v241, %v237
  %v290 = vpack.c.b16 %v246, %v242
  %v291 = vpack.c.b16 %v247, %v243
  %v292 = vpack.c.b16 %v248, %v244
  %v293 = vpack.c.b16 %v249, %v245
  %v294 = vpack.c.b16 %v250, %v250
  %v295 = vpack.c.b16 %v251, %v251
  %v296 = vpack.c.b16 %v252, %v252
  %v297 = vpack.c.b16 %v253, %v253
  %v406 = vunpack.c.l.b16 %v57
  %v407 = vunpack.c.l.b16 %v58
  %v408 = vunpack.c.l.b16 %v59
  %v409 = vunpack.c.l.b16 %v60
  %v410 = vunpack.c.l.b16 %v61
  %v411 = vunpack.c.l.b16 %v62
  %v412 = vunpack.c.l.b16 %v63
  %v413 = vunpack.c.l.b16 %v64
  %v414 = vunpack.c.l.b16 %v65
  %v415 = vunpack.c.l.b16 %v66
  %v416 = vunpack.c.l.b16 %v67
  %v417 = vunpack.c.l.b16 %v68
  %v418 = vunpack.c.l.b16 %v69
  %v419 = vunpack.c.l.b16 %v70
  %v420 = vunpack.c.l.b16 %v71
  %v421 = vunpack.c.l.b16 %v72
  %v422 = vunpack.c.l.b16 %v73
  %v423 = vunpack.c.l.b16 %v74
  %v424 = vunpack.c.l.b16 %v75
  %v425 = vunpack.c.l.b16 %v76
  %v426 = vunpack.c.l.b16 %v77
  %v427 = vunpack.c.l.b16 %v78
  %v428 = vunpack.c.l.b16 %v79
  %v429 = vunpack.c.l.b16 %v80
  %v430 = vunpack.c.l.b16 %v81
  %v431 = vunpack.c.l.b16 %v82
  %v432 = vunpack.c.l.b16 %v83
  %v433 = vunpack.c.l.b16 %v84
  %v434 = vunpack.c.l.b16 %v85
  %v435 = vunpack.c.l.b16 %v86
  %v436 = vunpack.c.l.b16 %v87
  %v437 = vunpack.c.l.b16 %v88
  %v438 = vunpack.c.l.b16 %v89
  %v439 = vunpack.c.l.b16 %v90
  %v440 = vunpack.c.l.b16 %v91
  %v441 = vunpack.c.l.b16 %v92
  %v442 = vunpack.c.l.b16 %v93
  %v443 = vunpack.c.l.b16 %v94
  %v444 = vunpack.c.l.b16 %v95
  %v445 = vunpack.c.l.b16 %v96
  %v446 = vunpack.c.l.b16 %v97
  %v447 = vunpack.c.l.b16 %v98
  %v448 = vunpack.c.l.b16 %v99
  %v449 = vunpack.c.l.b16 %v100
  %v450 = vunpack.c.l.b16 %v101
  %v451 = vunpack.c.l.b16 %v102
  %v452 = vunpack.c.l.b16 %v103
  %v453 = vunpack.c.l.b16 %v104
  %v454 = vunpack.c.l.b16 %v105
  %v455 = vunpack.c.l.b16 %v106
  %v456 = vunpack.c.l.b16 %v107
  %v457 = vunpack.c.l.b16 %v108
  %v458 = vunpack.c.l.b16 %v109
  %v459 = vunpack.c.l.b16 %v110
  %v460 = vunpack.c.l.b16 %v111
  %v461 = vunpack.c.l.b16 %v112
  %v462 = vunpack.c.l.b16 %v113
  %v463 = vunpack.c.l.b16 %v114
  %v464 = vunpack.c.l.b16 %v115
  %v465 = vunpack.c.l.b16 %v116
  %v466 = vunpack.c.l.b16 %v117
  %v467 = vunpack.c.l.b16 %v118
  %v468 = vunpack.c.l.b16 %v119
  %v469 = vunpack.c.l.b16 %v120
  %v470 = vpack.c.b16 %v407, %v406
  %v471 = vpack.c.b16 %v409, %v408
  %v472 = vpack.c.b16 %v411, %v410
  %v473 = vpack.c.b16 %v413, %v412
  %v474 = vpack.c.b16 %v415, %v414
  %v475 = vpack.c.b16 %v417, %v416
  %v476 = vpack.c.b16 %v419, %v418
  %v477 = vpack.c.b16 %v421, %v420
  %v478 = vpack.c.b16 %v423, %v422
  %v479 = vpack.c.b16 %v425, %v424
  %v480 = vpack.c.b16 %v427, %v426
  %v481 = vpack.c.b16 %v429, %v428
  %v482 = vpack.c.b16 %v431, %v430
  %v483 = vpack.c.b16 %v433, %v432
  %v484 = vpack.c.b16 %v435, %v434
  %v485 = vpack.c.b16 %v437, %v436
  %v486 = vpack.c.b16 %v439, %v438
  %v487 = vpack.c.b16 %v441, %v440
  %v488 = vpack.c.b16 %v443, %v442
  %v489 = vpack.c.b16 %v445, %v444
  %v490 = vpack.c.b16 %v447, %v446
  %v491 = vpack.c.b16 %v449, %v448
  %v492 = vpack.c.b16 %v451, %v450
  %v493 = vpack.c.b16 %v453, %v452
  %v494 = vpack.c.b16 %v455, %v454
  %v495 = vpack.c.b16 %v457, %v456
  %v496 = vpack.c.b16 %v459, %v458
  %v497 = vpack.c.b16 %v461, %v460
  %v498 = vpack.c.b16 %v463, %v462
  %v499 = vpack.c.b16 %v465, %v464
  %v500 = vpack.c.b16 %v467, %v466
  %v501 = vpack.c.b16 %v469, %v468
  %534 = vmatprep.subr.bf16.mxu0 0
  %535 = vmatpush1.bf16.msra.mxu0 %v470
  %536 = vmatprep.subr.bf16.mxu0 0
  %537 = vmatpush1.bf16.msra.mxu0 %v471
  %538 = vmatprep.subr.bf16.mxu0 0
  %539 = vmatpush1.bf16.msra.mxu0 %v472
  %540 = vmatprep.subr.bf16.mxu0 0
  %541 = vmatpush1.bf16.msra.mxu0 %v473
  %542 = vmatprep.subr.bf16.mxu0 0
  %543 = vmatpush1.bf16.msra.mxu0 %v474
  %544 = vmatprep.subr.bf16.mxu0 0
  %545 = vmatpush1.bf16.msra.mxu0 %v475
  %546 = vmatprep.subr.bf16.mxu0 0
  %547 = vmatpush1.bf16.msra.mxu0 %v476
  %548 = vmatprep.subr.bf16.mxu0 0
  %549 = vmatpush1.bf16.msra.mxu0 %v477
  %550 = vmatprep.subr.bf16.mxu0 0
  %551 = vmatpush1.bf16.msra.mxu0 %v478
  %552 = vmatprep.subr.bf16.mxu0 0
  %553 = vmatpush1.bf16.msra.mxu0 %v479
  %554 = vmatprep.subr.bf16.mxu0 0
  %555 = vmatpush1.bf16.msra.mxu0 %v480
  %556 = vmatprep.subr.bf16.mxu0 0
  %557 = vmatpush1.bf16.msra.mxu0 %v481
  %558 = vmatprep.subr.bf16.mxu0 0
  %559 = vmatpush1.bf16.msra.mxu0 %v482
  %560 = vmatprep.subr.bf16.mxu0 0
  %561 = vmatpush1.bf16.msra.mxu0 %v483
  %562 = vmatprep.subr.bf16.mxu0 0
  %563 = vmatpush1.bf16.msra.mxu0 %v484
  %564 = vmatprep.subr.bf16.mxu0 0
  %565 = vmatpush1.bf16.msra.mxu0 %v485
  %566 = vmatprep.mubr.bf16.mxu0 %v255
  %567 = vmatmul.mubr.bf16.gmra.mrb[0].mxu0 %v254
  %v568 = vpop.f32.mrb[0].mxu0
  %v569 = vadd.f32 %v126, %v568
  %v570 = vpop.f32.mrb[0].mxu0
  %v571 = vpop.f32.mrb[0].mxu0
  %v572 = vadd.f32 %v126, %v571
  %v573 = vpop.f32.mrb[0].mxu0
  %574 = vmatprep.mubr.bf16.mxu0 %v259
  %575 = vmatmul.mubr.bf16.gmra.mrb[0].mxu0 %v258
  %v576 = vpop.f32.mrb[0].mxu0
  %v577 = vadd.f32 %v126, %v576
  %v578 = vpop.f32.mrb[0].mxu0
  %v579 = vpop.f32.mrb[0].mxu0
  %v580 = vadd.f32 %v126, %v579
  %v581 = vpop.f32.mrb[0].mxu0
  %582 = vmatprep.mubr.bf16.mxu0 %v263
  %583 = vmatmul.mubr.bf16.gmra.mrb[0].mxu0 %v262
  %v584 = vpop.f32.mrb[0].mxu0
  %v585 = vadd.f32 %v126, %v584
  %v586 = vpop.f32.mrb[0].mxu0
  %v587 = vpop.f32.mrb[0].mxu0
  %v588 = vadd.f32 %v126, %v587
  %v589 = vpop.f32.mrb[0].mxu0
  %590 = vmatprep.mubr.bf16.mxu0 %v267
  %591 = vmatmul.mubr.bf16.gmra.mrb[0].mxu0 %v266
  %v592 = vpop.f32.mrb[0].mxu0
  %v593 = vadd.f32 %v126, %v592
  %v594 = vpop.f32.mrb[0].mxu0
  %v595 = vpop.f32.mrb[0].mxu0
  %v596 = vadd.f32 %v126, %v595
  %v597 = vpop.f32.mrb[0].mxu0
  %598 = vmatprep.mubr.bf16.mxu0 %v271
  %599 = vmatmul.mubr.bf16.gmra.mrb[0].mxu0 %v270
  %v600 = vpop.f32.mrb[0].mxu0
  %v601 = vadd.f32 %v126, %v600
  %v602 = vpop.f32.mrb[0].mxu0
  %v603 = vpop.f32.mrb[0].mxu0
  %v604 = vadd.f32 %v126, %v603
  %v605 = vpop.f32.mrb[0].mxu0
  %606 = vmatprep.mubr.bf16.mxu0 %v275
  %607 = vmatmul.mubr.bf16.gmra.mrb[0].mxu0 %v274
  %v608 = vpop.f32.mrb[0].mxu0
  %v609 = vadd.f32 %v126, %v608
  %v610 = vpop.f32.mrb[0].mxu0
  %v611 = vpop.f32.mrb[0].mxu0
  %v612 = vadd.f32 %v126, %v611
  %v613 = vpop.f32.mrb[0].mxu0
  %614 = vmatprep.mubr.bf16.mxu0 %v279
  %615 = vmatmul.mubr.bf16.gmra.mrb[0].mxu0 %v278
  %v616 = vpop.f32.mrb[0].mxu0
  %v617 = vadd.f32 %v126, %v616
  %v618 = vpop.f32.mrb[0].mxu0
  %v619 = vpop.f32.mrb[0].mxu0
  %v620 = vadd.f32 %v126, %v619
  %v621 = vpop.f32.mrb[0].mxu0
  %622 = vmatprep.mubr.bf16.mxu0 %v283
  %623 = vmatmul.mubr.bf16.gmra.mrb[0].mxu0 %v282
  %v624 = vpop.f32.mrb[0].mxu0
  %v625 = vadd.f32 %v126, %v624
  %v626 = vpop.f32.mrb[0].mxu0
  %v627 = vpop.f32.mrb[0].mxu0
  %v628 = vadd.f32 %v126, %v627
  %v629 = vpop.f32.mrb[0].mxu0
  %630 = vmatprep.mubr.bf16.mxu0 %v287
  %631 = vmatmul.mubr.bf16.gmra.mrb[0].mxu0 %v286
  %v632 = vpop.f32.mrb[0].mxu0
  %v633 = vadd.f32 %v126, %v632
  %v634 = vpop.f32.mrb[0].mxu0
  %v635 = vpop.f32.mrb[0].mxu0
  %v636 = vadd.f32 %v126, %v635
  %v637 = vpop.f32.mrb[0].mxu0
  %638 = vmatprep.mubr.bf16.mxu0 %v291
  %639 = vmatmul.mubr.bf16.gmra.mrb[0].mxu0 %v290
  %v640 = vpop.f32.mrb[0].mxu0
  %v641 = vadd.f32 %v126, %v640
  %v642 = vpop.f32.mrb[0].mxu0
  %v643 = vpop.f32.mrb[0].mxu0
  %v644 = vadd.f32 %v126, %v643
  %v645 = vpop.f32.mrb[0].mxu0
  %646 = vmatprep.mubr.bf16.mxu0 %v295
  %647 = vmatmul.mubr.bf16.gmra.mrb[0].mxu0 %v294
  %v648 = vpop.f32.mrb[0].mxu0
  %v649 = vadd.f32 %v126, %v648
  %v650 = vpop.f32.mrb[0].mxu0
  %v651 = vpop.f32.mrb[0].mxu0
  %v652 = vpop.f32.mrb[0].mxu0
  %653 = vdwg.mxu0
  %654 = vmatprep.subr.bf16.mxu0 0
  %655 = vmatpush1.bf16.msra.mxu0 %v486
  %656 = vmatprep.subr.bf16.mxu0 0
  %657 = vmatpush1.bf16.msra.mxu0 %v487
  %658 = vmatprep.subr.bf16.mxu0 0
  %659 = vmatpush1.bf16.msra.mxu0 %v488
  %660 = vmatprep.subr.bf16.mxu0 0
  %661 = vmatpush1.bf16.msra.mxu0 %v489
  %662 = vmatprep.subr.bf16.mxu0 0
  %663 = vmatpush1.bf16.msra.mxu0 %v490
  %664 = vmatprep.subr.bf16.mxu0 0
  %665 = vmatpush1.bf16.msra.mxu0 %v491
  %666 = vmatprep.subr.bf16.mxu0 0
  %667 = vmatpush1.bf16.msra.mxu0 %v492
  %668 = vmatprep.subr.bf16.mxu0 0
  %669 = vmatpush1.bf16.msra.mxu0 %v493
  %670 = vmatprep.subr.bf16.mxu0 0
  %671 = vmatpush1.bf16.msra.mxu0 %v494
  %672 = vmatprep.subr.bf16.mxu0 0
  %673 = vmatpush1.bf16.msra.mxu0 %v495
  %674 = vmatprep.subr.bf16.mxu0 0
  %675 = vmatpush1.bf16.msra.mxu0 %v496
  %676 = vmatprep.subr.bf16.mxu0 0
  %677 = vmatpush1.bf16.msra.mxu0 %v497
  %678 = vmatprep.subr.bf16.mxu0 0
  %679 = vmatpush1.bf16.msra.mxu0 %v498
  %680 = vmatprep.subr.bf16.mxu0 0
  %681 = vmatpush1.bf16.msra.mxu0 %v499
  %682 = vmatprep.subr.bf16.mxu0 0
  %683 = vmatpush1.bf16.msra.mxu0 %v500
  %684 = vmatprep.subr.bf16.mxu0 0
  %685 = vmatpush1.bf16.msra.mxu0 %v501
  %686 = vmatprep.mubr.bf16.mxu0 %v257
  %687 = vmatmul.mubr.bf16.gmra.mrb[0].mxu0 %v256
  %v688 = vpop.f32.mrb[0].mxu0
  %v689 = vadd.f32 %v569, %v688
  %v690 = vpop.f32.mrb[0].mxu0
  %v691 = vpop.f32.mrb[0].mxu0
  %v692 = vadd.f32 %v572, %v691
  %v693 = vpop.f32.mrb[0].mxu0
  %694 = vmatprep.mubr.bf16.mxu0 %v261
  %695 = vmatmul.mubr.bf16.gmra.mrb[0].mxu0 %v260
  %v696 = vpop.f32.mrb[0].mxu0
  %v697 = vadd.f32 %v577, %v696
  %v698 = vpop.f32.mrb[0].mxu0
  %v699 = vpop.f32.mrb[0].mxu0
  %v700 = vadd.f32 %v580, %v699
  %v701 = vpop.f32.mrb[0].mxu0
  %702 = vmatprep.mubr.bf16.mxu0 %v265
  %703 = vmatmul.mubr.bf16.gmra.mrb[0].mxu0 %v264
  %v704 = vpop.f32.mrb[0].mxu0
  %v705 = vadd.f32 %v585, %v704
  %v706 = vpop.f32.mrb[0].mxu0
  %v707 = vpop.f32.mrb[0].mxu0
  %v708 = vadd.f32 %v588, %v707
  %v709 = vpop.f32.mrb[0].mxu0
  %710 = vmatprep.mubr.bf16.mxu0 %v269
  %711 = vmatmul.mubr.bf16.gmra.mrb[0].mxu0 %v268
  %v712 = vpop.f32.mrb[0].mxu0
  %v713 = vadd.f32 %v593, %v712
  %v714 = vpop.f32.mrb[0].mxu0
  %v715 = vpop.f32.mrb[0].mxu0
  %v716 = vadd.f32 %v596, %v715
  %v717 = vpop.f32.mrb[0].mxu0
  %718 = vmatprep.mubr.bf16.mxu0 %v273
  %719 = vmatmul.mubr.bf16.gmra.mrb[0].mxu0 %v272
  %v720 = vpop.f32.mrb[0].mxu0
  %v721 = vadd.f32 %v601, %v720
  %v722 = vpop.f32.mrb[0].mxu0
  %v723 = vpop.f32.mrb[0].mxu0
  %v724 = vadd.f32 %v604, %v723
  %v725 = vpop.f32.mrb[0].mxu0
  %726 = vmatprep.mubr.bf16.mxu0 %v277
  %727 = vmatmul.mubr.bf16.gmra.mrb[0].mxu0 %v276
  %v728 = vpop.f32.mrb[0].mxu0
  %v729 = vadd.f32 %v609, %v728
  %v730 = vpop.f32.mrb[0].mxu0
  %v731 = vpop.f32.mrb[0].mxu0
  %v732 = vadd.f32 %v612, %v731
  %v733 = vpop.f32.mrb[0].mxu0
  %734 = vmatprep.mubr.bf16.mxu0 %v281
  %735 = vmatmul.mubr.bf16.gmra.mrb[0].mxu0 %v280
  %v736 = vpop.f32.mrb[0].mxu0
  %v737 = vadd.f32 %v617, %v736
  %v738 = vpop.f32.mrb[0].mxu0
  %v739 = vpop.f32.mrb[0].mxu0
  %v740 = vadd.f32 %v620, %v739
  %v741 = vpop.f32.mrb[0].mxu0
  %742 = vmatprep.mubr.bf16.mxu0 %v285
  %743 = vmatmul.mubr.bf16.gmra.mrb[0].mxu0 %v284
  %v744 = vpop.f32.mrb[0].mxu0
  %v745 = vadd.f32 %v625, %v744
  %v746 = vpop.f32.mrb[0].mxu0
  %v747 = vpop.f32.mrb[0].mxu0
  %v748 = vadd.f32 %v628, %v747
  %v749 = vpop.f32.mrb[0].mxu0
  %750 = vmatprep.mubr.bf16.mxu0 %v289
  %751 = vmatmul.mubr.bf16.gmra.mrb[0].mxu0 %v288
  %v752 = vpop.f32.mrb[0].mxu0
  %v753 = vadd.f32 %v633, %v752
  %v754 = vpop.f32.mrb[0].mxu0
  %v755 = vpop.f32.mrb[0].mxu0
  %v756 = vadd.f32 %v636, %v755
  %v757 = vpop.f32.mrb[0].mxu0
  %758 = vmatprep.mubr.bf16.mxu0 %v293
  %759 = vmatmul.mubr.bf16.gmra.mrb[0].mxu0 %v292
  %v760 = vpop.f32.mrb[0].mxu0
  %v761 = vadd.f32 %v641, %v760
  %v762 = vpop.f32.mrb[0].mxu0
  %v763 = vpop.f32.mrb[0].mxu0
  %v764 = vadd.f32 %v644, %v763
  %v765 = vpop.f32.mrb[0].mxu0
  %766 = vmatprep.mubr.bf16.mxu0 %v297
  %767 = vmatmul.mubr.bf16.gmra.mrb[0].mxu0 %v296
  %v768 = vpop.f32.mrb[0].mxu0
  %v769 = vadd.f32 %v649, %v768
  %v770 = vpop.f32.mrb[0].mxu0
  %v771 = vpop.f32.mrb[0].mxu0
  %v772 = vpop.f32.mrb[0].mxu0
  %773 = vdwg.mxu0
  %v774 = vmax.f32 %v689, 0.0
  %v775 = vmax.f32 %v692, 0.0
  %v776 = vmax.f32 %v697, 0.0
  %v777 = vmax.f32 %v700, 0.0
  %v778 = vmax.f32 %v705, 0.0
  %v779 = vmax.f32 %v708, 0.0
  %v780 = vmax.f32 %v713, 0.0
  %v781 = vmax.f32 %v716, 0.0
  %v782 = vmax.f32 %v721, 0.0
  %v783 = vmax.f32 %v724, 0.0
  %v784 = vmax.f32 %v729, 0.0
  %v785 = vmax.f32 %v732, 0.0
  %v786 = vmax.f32 %v737, 0.0
  %v787 = vmax.f32 %v740, 0.0
  %v788 = vmax.f32 %v745, 0.0
  %v789 = vmax.f32 %v748, 0.0
  %v790 = vmax.f32 %v753, 0.0
  %v791 = vmax.f32 %v756, 0.0
  %v792 = vmax.f32 %v761, 0.0
  %v793 = vmax.f32 %v764, 0.0
  %v794 = vmax.f32 %v769, 0.0
  %v795 = vpack.c.bf16 %v775, %v774
  %v796 = vpack.c.bf16 %v777, %v776
  %v797 = vpack.c.bf16 %v779, %v778
  %v798 = vpack.c.bf16 %v781, %v780
  %v799 = vpack.c.bf16 %v783, %v782
  %v800 = vpack.c.bf16 %v785, %v784
  %v801 = vpack.c.bf16 %v787, %v786
  %v802 = vpack.c.bf16 %v789, %v788
  %v803 = vpack.c.bf16 %v791, %v790
  %v804 = vpack.c.bf16 %v793, %v792
  %v805 = vpack.c.bf16 %v794, %v794
  %v817 = vunpack.c.l.b16 %v795
  %v818 = vunpack.c.h.b16 %v795
  %v819 = vunpack.c.l.b16 %v796
  %v820 = vunpack.c.h.b16 %v796
  %v821 = vunpack.c.l.b16 %v797
  %v822 = vunpack.c.h.b16 %v797
  %v823 = vunpack.c.l.b16 %v798
  %v824 = vunpack.c.h.b16 %v798
  %v825 = vunpack.c.l.b16 %v799
  %v826 = vunpack.c.h.b16 %v799
  %v827 = vunpack.c.l.b16 %v800
  %v828 = vunpack.c.h.b16 %v800
  %v829 = vunpack.c.l.b16 %v801
  %v830 = vunpack.c.h.b16 %v801
  %v831 = vunpack.c.l.b16 %v802
  %v832 = vunpack.c.h.b16 %v802
  %v833 = vunpack.c.l.b16 %v803
  %v834 = vunpack.c.h.b16 %v803
  %v835 = vunpack.c.l.b16 %v804
  %v836 = vunpack.c.h.b16 %v804
  %v837 = vunpack.c.l.b16 %v805
  %v838 = vpack.c.b16 %v817, %v817
  %v839 = vpack.c.b16 %v818, %v818
  %v840 = vpack.c.b16 %v819, %v819
  %v841 = vpack.c.b16 %v820, %v820
  %v842 = vpack.c.b16 %v821, %v821
  %v843 = vpack.c.b16 %v822, %v822
  %v844 = vpack.c.b16 %v823, %v823
  %v845 = vpack.c.b16 %v824, %v824
  %v846 = vpack.c.b16 %v825, %v825
  %v847 = vpack.c.b16 %v826, %v826
  %v848 = vpack.c.b16 %v827, %v827
  %v849 = vpack.c.b16 %v828, %v828
  %v850 = vpack.c.b16 %v829, %v829
  %v851 = vpack.c.b16 %v830, %v830
  %v852 = vpack.c.b16 %v831, %v831
  %v853 = vpack.c.b16 %v832, %v832
  %v854 = vpack.c.b16 %v833, %v833
  %v855 = vpack.c.b16 %v834, %v834
  %v856 = vpack.c.b16 %v835, %v835
  %v857 = vpack.c.b16 %v836, %v836
  %v858 = vpack.c.b16 %v837, %v837
  %vm880 = vcmask 519168
  %881 = vst.msk [vmem:[%s3] sm:$0xf] %vm880, %v838
  %882 = vst.msk [vmem:[%s3 + $0x4] sm:$0xf] %vm880, %v839
  %883 = vst.msk [vmem:[%s3 + $0x8] sm:$0xf] %vm880, %v840
  %884 = vst.msk [vmem:[%s3 + $0xc] sm:$0xf] %vm880, %v841
  %885 = vst.msk [vmem:[%s3 + $0x10] sm:$0xf] %vm880, %v842
  %886 = vst.msk [vmem:[%s3 + $0x14] sm:$0xf] %vm880, %v843
  %887 = vst.msk [vmem:[%s3 + $0x18] sm:$0xf] %vm880, %v844
  %888 = vst.msk [vmem:[%s3 + $0x1c] sm:$0xf] %vm880, %v845
  %889 = vst.msk [vmem:[%s3 + $0x20] sm:$0xf] %vm880, %v846
  %890 = vst.msk [vmem:[%s3 + $0x24] sm:$0xf] %vm880, %v847
  %891 = vst.msk [vmem:[%s3 + $0x28] sm:$0xf] %vm880, %v848
  %892 = vst.msk [vmem:[%s3 + $0x2c] sm:$0xf] %vm880, %v849
  %893 = vst.msk [vmem:[%s3 + $0x30] sm:$0xf] %vm880, %v850
  %894 = vst.msk [vmem:[%s3 + $0x34] sm:$0xf] %vm880, %v851
  %895 = vst.msk [vmem:[%s3 + $0x38] sm:$0xf] %vm880, %v852
  %896 = vst.msk [vmem:[%s3 + $0x3c] sm:$0xf] %vm880, %v853
  %897 = vst.msk [vmem:[%s3 + $0x40] sm:$0xf] %vm880, %v854
  %898 = vst.msk [vmem:[%s3 + $0x44] sm:$0xf] %vm880, %v855
  %899 = vst.msk [vmem:[%s3 + $0x48] sm:$0xf] %vm880, %v856
  %900 = vst.msk [vmem:[%s3 + $0x4c] sm:$0xf] %vm880, %v857
  %vm901 = vcmask 516096
  %902 = vst.msk [vmem:[%s3 + $0x50] sm:$0x1] %vm901, %v858
  // Predicated region
  $region14: #{rainbow_dqn_forward.5} parent=0 // pred_check
    _
  $region15: #{rainbow_dqn_forward.5} parent=0 // pred_check_branch
    %904 = sbr.rel (0) target = $region17
  $region16: #{rainbow_dqn_forward.5} parent=0 // pred_region
    _
  $region17: #{rainbow_dqn_forward.5} parent=0 // pred_fallthru
    _
  // Predicated region
  $region18: #{rainbow_dqn_forward.5} parent=0 // pred_check
    _
  $region19: #{rainbow_dqn_forward.5} parent=0 // pred_check_branch
    %906 = sbr.rel (0) target = $region21
  $region20: #{rainbow_dqn_forward.5} parent=0 // pred_region
    _
  $region21: #{rainbow_dqn_forward.5} parent=0 // pred_fallthru
    _

// kernel: rainbow_dqn_forward.6
$region0: #{rainbow_dqn_forward.6}
  #allocation0 [shape = 'u32[]', space=smem, size = 0x4, offset = 0x4, fixed_abs, tag = 'smem constant byte address 0x4 - core index']
  #allocation1 [shape = 'u32[144,128]{1,0:T(1,128)}', space=vmem, size = 0x12000, scoped, tag = 'internal scratch']
  %s0 = inlined_call_operand.vmem [shape: bf16[98,640], index: 0, kind: input, shape index: {}]
  %s1 = inlined_call_operand.vmem [shape: bf16[640,64], index: 1, kind: input, shape index: {}]
  %s2 = inlined_call_operand.vmem [shape: f32[1,64], index: 2, kind: input, shape index: {}]
  %s3 = inlined_call_operand.vmem [shape: bf16[98,64], index: 3, kind: output, shape index: {}]
  %s4 = sld [smem:[#allocation0]]
  $region22: #{rainbow_dqn_forward.6} parent=0
    _
  %s6 = ssub.s32 1, %s4
  %s7 = scalar_select 0, %s6, %s4
  // Predicated region
  $region2: #{rainbow_dqn_forward.6} parent=0 // pred_check
    _
  $region3: #{rainbow_dqn_forward.6} parent=0 // pred_check_branch
    %9 = sbr.rel (0) target = $region5
  $region4: #{rainbow_dqn_forward.6} parent=0 // pred_region
    _
  $region5: #{rainbow_dqn_forward.6} parent=0 // pred_fallthru
    _
  // Predicated region
  $region6: #{rainbow_dqn_forward.6} parent=0 // pred_check
    _
  $region7: #{rainbow_dqn_forward.6} parent=0 // pred_check_branch
    %11 = sbr.rel (0) target = $region9
  $region8: #{rainbow_dqn_forward.6} parent=0 // pred_region
    _
  $region9: #{rainbow_dqn_forward.6} parent=0 // pred_fallthru
    _
  // Predicated region
  $region10: #{rainbow_dqn_forward.6} parent=0 // pred_check
    _
  $region11: #{rainbow_dqn_forward.6} parent=0 // pred_check_branch
    %13 = sbr.rel (0) target = $region13
  $region12: #{rainbow_dqn_forward.6} parent=0 // pred_region
    _
  $region13: #{rainbow_dqn_forward.6} parent=0 // pred_fallthru
    _
  %v15 = vld [vmem:[%s0] sm:$0xff]
  %v16 = vld [vmem:[%s0 + $0x8] sm:$0xff]
  %v17 = vld [vmem:[%s0 + $0x10] sm:$0xf]
  %v18 = vld [vmem:[%s0 + $0x14] sm:$0xff]
  %v19 = vld [vmem:[%s0 + $0x1c] sm:$0xff]
  %v20 = vld [vmem:[%s0 + $0x24] sm:$0xf]
  %v21 = vld [vmem:[%s0 + $0x28] sm:$0xff]
  %v22 = vld [vmem:[%s0 + $0x30] sm:$0xff]
  %v23 = vld [vmem:[%s0 + $0x38] sm:$0xf]
  %v24 = vld [vmem:[%s0 + $0x3c] sm:$0xff]
  %v25 = vld [vmem:[%s0 + $0x44] sm:$0xff]
  %v26 = vld [vmem:[%s0 + $0x4c] sm:$0xf]
  %v27 = vld [vmem:[%s0 + $0x50] sm:$0xff]
  %v28 = vld [vmem:[%s0 + $0x58] sm:$0xff]
  %v29 = vld [vmem:[%s0 + $0x60] sm:$0xf]
  %v30 = vld [vmem:[%s0 + $0x64] sm:$0xff]
  %v31 = vld [vmem:[%s0 + $0x6c] sm:$0xff]
  %v32 = vld [vmem:[%s0 + $0x74] sm:$0xf]
  %v33 = vld [vmem:[%s0 + $0x78] sm:$0xff]
  %v34 = vld [vmem:[%s0 + $0x80] sm:$0xff]
  %v35 = vld [vmem:[%s0 + $0x88] sm:$0xf]
  %v36 = vld [vmem:[%s0 + $0x8c] sm:$0xff]
  %v37 = vld [vmem:[%s0 + $0x94] sm:$0xff]
  %v38 = vld [vmem:[%s0 + $0x9c] sm:$0xf]
  %v39 = vld [vmem:[%s0 + $0xa0] sm:$0xff]
  %v40 = vld [vmem:[%s0 + $0xa8] sm:$0xff]
  %v41 = vld [vmem:[%s0 + $0xb0] sm:$0xf]
  %v42 = vld [vmem:[%s0 + $0xb4] sm:$0xff]
  %v43 = vld [vmem:[%s0 + $0xbc] sm:$0xff]
  %v44 = vld [vmem:[%s0 + $0xc4] sm:$0xf]
  %v45 = vld [vmem:[%s0 + $0xc8] sm:$0xff]
  %v46 = vld [vmem:[%s0 + $0xd0] sm:$0xff]
  %v47 = vld [vmem:[%s0 + $0xd8] sm:$0xf]
  %v48 = vld [vmem:[%s0 + $0xdc] sm:$0xff]
  %v49 = vld [vmem:[%s0 + $0xe4] sm:$0xff]
  %v50 = vld [vmem:[%s0 + $0xec] sm:$0xf]
  %v51 = vld [vmem:[%s0 + $0xf0] sm:$0x11]
  %v52 = vld [vmem:[%s0 + $0xf8] sm:$0x11]
  %v53 = vld [vmem:[%s0 + $0x100] sm:$0x1]
  %v54 = vld [vmem:[%s1] sm:$0xf]
  %v55 = vld [vmem:[%s1 + $0x4] sm:$0xf]
  %v56 = vld [vmem:[%s1 + $0x8] sm:$0xf]
  %v57 = vld [vmem:[%s1 + $0xc] sm:$0xf]
  %v58 = vld [vmem:[%s1 + $0x10] sm:$0xf]
  %v59 = vld [vmem:[%s1 + $0x14] sm:$0xf]
  %v60 = vld [vmem:[%s1 + $0x18] sm:$0xf]
  %v61 = vld [vmem:[%s1 + $0x1c] sm:$0xf]
  %v62 = vld [vmem:[%s1 + $0x20] sm:$0xf]
  %v63 = vld [vmem:[%s1 + $0x24] sm:$0xf]
  %v64 = vld [vmem:[%s1 + $0x28] sm:$0xf]
  %v65 = vld [vmem:[%s1 + $0x2c] sm:$0xf]
  %v66 = vld [vmem:[%s1 + $0x30] sm:$0xf]
  %v67 = vld [vmem:[%s1 + $0x34] sm:$0xf]
  %v68 = vld [vmem:[%s1 + $0x38] sm:$0xf]
  %v69 = vld [vmem:[%s1 + $0x3c] sm:$0xf]
  %v70 = vld [vmem:[%s1 + $0x40] sm:$0xf]
  %v71 = vld [vmem:[%s1 + $0x44] sm:$0xf]
  %v72 = vld [vmem:[%s1 + $0x48] sm:$0xf]
  %v73 = vld [vmem:[%s1 + $0x4c] sm:$0xf]
  %v74 = vld [vmem:[%s1 + $0x50] sm:$0xf]
  %v75 = vld [vmem:[%s1 + $0x54] sm:$0xf]
  %v76 = vld [vmem:[%s1 + $0x58] sm:$0xf]
  %v77 = vld [vmem:[%s1 + $0x5c] sm:$0xf]
  %v78 = vld [vmem:[%s1 + $0x60] sm:$0xf]
  %v79 = vld [vmem:[%s1 + $0x64] sm:$0xf]
  %v80 = vld [vmem:[%s1 + $0x68] sm:$0xf]
  %v81 = vld [vmem:[%s1 + $0x6c] sm:$0xf]
  %v82 = vld [vmem:[%s1 + $0x70] sm:$0xf]
  %v83 = vld [vmem:[%s1 + $0x74] sm:$0xf]
  %v84 = vld [vmem:[%s1 + $0x78] sm:$0xf]
  %v85 = vld [vmem:[%s1 + $0x7c] sm:$0xf]
  %v86 = vld [vmem:[%s1 + $0x80] sm:$0xf]
  %v87 = vld [vmem:[%s1 + $0x84] sm:$0xf]
  %v88 = vld [vmem:[%s1 + $0x88] sm:$0xf]
  %v89 = vld [vmem:[%s1 + $0x8c] sm:$0xf]
  %v90 = vld [vmem:[%s1 + $0x90] sm:$0xf]
  %v91 = vld [vmem:[%s1 + $0x94] sm:$0xf]
  %v92 = vld [vmem:[%s1 + $0x98] sm:$0xf]
  %v93 = vld [vmem:[%s1 + $0x9c] sm:$0xf]
  %v94 = vld [vmem:[%s1 + $0xa0] sm:$0xf]
  %v95 = vld [vmem:[%s1 + $0xa4] sm:$0xf]
  %v96 = vld [vmem:[%s1 + $0xa8] sm:$0xf]
  %v97 = vld [vmem:[%s1 + $0xac] sm:$0xf]
  %v98 = vld [vmem:[%s1 + $0xb0] sm:$0xf]
  %v99 = vld [vmem:[%s1 + $0xb4] sm:$0xf]
  %v100 = vld [vmem:[%s1 + $0xb8] sm:$0xf]
  %v101 = vld [vmem:[%s1 + $0xbc] sm:$0xf]
  %v102 = vld [vmem:[%s1 + $0xc0] sm:$0xf]
  %v103 = vld [vmem:[%s1 + $0xc4] sm:$0xf]
  %v104 = vld [vmem:[%s1 + $0xc8] sm:$0xf]
  %v105 = vld [vmem:[%s1 + $0xcc] sm:$0xf]
  %v106 = vld [vmem:[%s1 + $0xd0] sm:$0xf]
  %v107 = vld [vmem:[%s1 + $0xd4] sm:$0xf]
  %v108 = vld [vmem:[%s1 + $0xd8] sm:$0xf]
  %v109 = vld [vmem:[%s1 + $0xdc] sm:$0xf]
  %v110 = vld [vmem:[%s1 + $0xe0] sm:$0xf]
  %v111 = vld [vmem:[%s1 + $0xe4] sm:$0xf]
  %v112 = vld [vmem:[%s1 + $0xe8] sm:$0xf]
  %v113 = vld [vmem:[%s1 + $0xec] sm:$0xf]
  %v114 = vld [vmem:[%s1 + $0xf0] sm:$0xf]
  %v115 = vld [vmem:[%s1 + $0xf4] sm:$0xf]
  %v116 = vld [vmem:[%s1 + $0xf8] sm:$0xf]
  %v117 = vld [vmem:[%s1 + $0xfc] sm:$0xf]
  %v118 = vld [vmem:[%s1 + $0x100] sm:$0xf]
  %v119 = vld [vmem:[%s1 + $0x104] sm:$0xf]
  %v120 = vld [vmem:[%s1 + $0x108] sm:$0xf]
  %v121 = vld [vmem:[%s1 + $0x10c] sm:$0xf]
  %v122 = vld [vmem:[%s1 + $0x110] sm:$0xf]
  %v123 = vld [vmem:[%s1 + $0x114] sm:$0xf]
  %v124 = vld [vmem:[%s1 + $0x118] sm:$0xf]
  %v125 = vld [vmem:[%s1 + $0x11c] sm:$0xf]
  %v126 = vld [vmem:[%s1 + $0x120] sm:$0xf]
  %v127 = vld [vmem:[%s1 + $0x124] sm:$0xf]
  %v128 = vld [vmem:[%s1 + $0x128] sm:$0xf]
  %v129 = vld [vmem:[%s1 + $0x12c] sm:$0xf]
  %v130 = vld [vmem:[%s1 + $0x130] sm:$0xf]
  %v131 = vld [vmem:[%s1 + $0x134] sm:$0xf]
  %v132 = vld [vmem:[%s1 + $0x138] sm:$0xf]
  %v133 = vld [vmem:[%s1 + $0x13c] sm:$0xf]
  %v134 = vld [vmem:[%s2] sm:$0x1]
  %v136 = vlaneseq
  %v137 = vshrl.u32 %v136, 7
  %v138 = vsub.s32 0, %v137
  %v139 = vrot.slane %v134, %v138
  %v180 = vunpack.c.l.b16 %v15
  %v181 = vunpack.c.h.b16 %v15
  %v182 = vunpack.c.l.b16 %v16
  %v183 = vunpack.c.h.b16 %v16
  %v184 = vunpack.c.l.b16 %v17
  %v185 = vunpack.c.l.b16 %v18
  %v186 = vunpack.c.h.b16 %v18
  %v187 = vunpack.c.l.b16 %v19
  %v188 = vunpack.c.h.b16 %v19
  %v189 = vunpack.c.l.b16 %v20
  %v190 = vunpack.c.l.b16 %v21
  %v191 = vunpack.c.h.b16 %v21
  %v192 = vunpack.c.l.b16 %v22
  %v193 = vunpack.c.h.b16 %v22
  %v194 = vunpack.c.l.b16 %v23
  %v195 = vunpack.c.l.b16 %v24
  %v196 = vunpack.c.h.b16 %v24
  %v197 = vunpack.c.l.b16 %v25
  %v198 = vunpack.c.h.b16 %v25
  %v199 = vunpack.c.l.b16 %v26
  %v200 = vunpack.c.l.b16 %v27
  %v201 = vunpack.c.h.b16 %v27
  %v202 = vunpack.c.l.b16 %v28
  %v203 = vunpack.c.h.b16 %v28
  %v204 = vunpack.c.l.b16 %v29
  %v205 = vunpack.c.l.b16 %v30
  %v206 = vunpack.c.h.b16 %v30
  %v207 = vunpack.c.l.b16 %v31
  %v208 = vunpack.c.h.b16 %v31
  %v209 = vunpack.c.l.b16 %v32
  %v210 = vunpack.c.l.b16 %v33
  %v211 = vunpack.c.h.b16 %v33
  %v212 = vunpack.c.l.b16 %v34
  %v213 = vunpack.c.h.b16 %v34
  %v214 = vunpack.c.l.b16 %v35
  %v215 = vunpack.c.l.b16 %v36
  %v216 = vunpack.c.h.b16 %v36
  %v217 = vunpack.c.l.b16 %v37
  %v218 = vunpack.c.h.b16 %v37
  %v219 = vunpack.c.l.b16 %v38
  %v220 = vunpack.c.l.b16 %v39
  %v221 = vunpack.c.h.b16 %v39
  %v222 = vunpack.c.l.b16 %v40
  %v223 = vunpack.c.h.b16 %v40
  %v224 = vunpack.c.l.b16 %v41
  %v225 = vunpack.c.l.b16 %v42
  %v226 = vunpack.c.h.b16 %v42
  %v227 = vunpack.c.l.b16 %v43
  %v228 = vunpack.c.h.b16 %v43
  %v229 = vunpack.c.l.b16 %v44
  %v230 = vunpack.c.l.b16 %v45
  %v231 = vunpack.c.h.b16 %v45
  %v232 = vunpack.c.l.b16 %v46
  %v233 = vunpack.c.h.b16 %v46
  %v234 = vunpack.c.l.b16 %v47
  %v235 = vunpack.c.l.b16 %v48
  %v236 = vunpack.c.h.b16 %v48
  %v237 = vunpack.c.l.b16 %v49
  %v238 = vunpack.c.h.b16 %v49
  %v239 = vunpack.c.l.b16 %v50
  %v240 = vunpack.c.l.b16 %v51
  %v241 = vunpack.c.h.b16 %v51
  %v242 = vunpack.c.l.b16 %v52
  %v243 = vunpack.c.h.b16 %v52
  %v244 = vunpack.c.l.b16 %v53
  %v245 = vpack.c.b16 %v185, %v180
  %v246 = vpack.c.b16 %v186, %v181
  %v247 = vpack.c.b16 %v187, %v182
  %v248 = vpack.c.b16 %v188, %v183
  %v249 = vpack.c.b16 %v189, %v184
  %v250 = vpack.c.b16 %v195, %v190
  %v251 = vpack.c.b16 %v196, %v191
  %v252 = vpack.c.b16 %v197, %v192
  %v253 = vpack.c.b16 %v198, %v193
  %v254 = vpack.c.b16 %v199, %v194
  %v255 = vpack.c.b16 %v205, %v200
  %v256 = vpack.c.b16 %v206, %v201
  %v257 = vpack.c.b16 %v207, %v202
  %v258 = vpack.c.b16 %v208, %v203
  %v259 = vpack.c.b16 %v209, %v204
  %v260 = vpack.c.b16 %v215, %v210
  %v261 = vpack.c.b16 %v216, %v211
  %v262 = vpack.c.b16 %v217, %v212
  %v263 = vpack.c.b16 %v218, %v213
  %v264 = vpack.c.b16 %v219, %v214
  %v265 = vpack.c.b16 %v225, %v220
  %v266 = vpack.c.b16 %v226, %v221
  %v267 = vpack.c.b16 %v227, %v222
  %v268 = vpack.c.b16 %v228, %v223
  %v269 = vpack.c.b16 %v229, %v224
  %v270 = vpack.c.b16 %v235, %v230
  %v271 = vpack.c.b16 %v236, %v231
  %v272 = vpack.c.b16 %v237, %v232
  %v273 = vpack.c.b16 %v238, %v233
  %v274 = vpack.c.b16 %v239, %v234
  %v275 = vpack.c.b16 %v240, %v240
  %v276 = vpack.c.b16 %v241, %v241
  %v277 = vpack.c.b16 %v242, %v242
  %v278 = vpack.c.b16 %v243, %v243
  %v279 = vpack.c.b16 %v244, %v244
  %v395 = vunpack.c.l.b16 %v54
  %v396 = vunpack.c.l.b16 %v55
  %v397 = vunpack.c.l.b16 %v56
  %v398 = vunpack.c.l.b16 %v57
  %v399 = vunpack.c.l.b16 %v58
  %v400 = vunpack.c.l.b16 %v59
  %v401 = vunpack.c.l.b16 %v60
  %v402 = vunpack.c.l.b16 %v61
  %v403 = vunpack.c.l.b16 %v62
  %v404 = vunpack.c.l.b16 %v63
  %v405 = vunpack.c.l.b16 %v64
  %v406 = vunpack.c.l.b16 %v65
  %v407 = vunpack.c.l.b16 %v66
  %v408 = vunpack.c.l.b16 %v67
  %v409 = vunpack.c.l.b16 %v68
  %v410 = vunpack.c.l.b16 %v69
  %v411 = vunpack.c.l.b16 %v70
  %v412 = vunpack.c.l.b16 %v71
  %v413 = vunpack.c.l.b16 %v72
  %v414 = vunpack.c.l.b16 %v73
  %v415 = vunpack.c.l.b16 %v74
  %v416 = vunpack.c.l.b16 %v75
  %v417 = vunpack.c.l.b16 %v76
  %v418 = vunpack.c.l.b16 %v77
  %v419 = vunpack.c.l.b16 %v78
  %v420 = vunpack.c.l.b16 %v79
  %v421 = vunpack.c.l.b16 %v80
  %v422 = vunpack.c.l.b16 %v81
  %v423 = vunpack.c.l.b16 %v82
  %v424 = vunpack.c.l.b16 %v83
  %v425 = vunpack.c.l.b16 %v84
  %v426 = vunpack.c.l.b16 %v85
  %v427 = vunpack.c.l.b16 %v86
  %v428 = vunpack.c.l.b16 %v87
  %v429 = vunpack.c.l.b16 %v88
  %v430 = vunpack.c.l.b16 %v89
  %v431 = vunpack.c.l.b16 %v90
  %v432 = vunpack.c.l.b16 %v91
  %v433 = vunpack.c.l.b16 %v92
  %v434 = vunpack.c.l.b16 %v93
  %v435 = vunpack.c.l.b16 %v94
  %v436 = vunpack.c.l.b16 %v95
  %v437 = vunpack.c.l.b16 %v96
  %v438 = vunpack.c.l.b16 %v97
  %v439 = vunpack.c.l.b16 %v98
  %v440 = vunpack.c.l.b16 %v99
  %v441 = vunpack.c.l.b16 %v100
  %v442 = vunpack.c.l.b16 %v101
  %v443 = vunpack.c.l.b16 %v102
  %v444 = vunpack.c.l.b16 %v103
  %v445 = vunpack.c.l.b16 %v104
  %v446 = vunpack.c.l.b16 %v105
  %v447 = vunpack.c.l.b16 %v106
  %v448 = vunpack.c.l.b16 %v107
  %v449 = vunpack.c.l.b16 %v108
  %v450 = vunpack.c.l.b16 %v109
  %v451 = vunpack.c.l.b16 %v110
  %v452 = vunpack.c.l.b16 %v111
  %v453 = vunpack.c.l.b16 %v112
  %v454 = vunpack.c.l.b16 %v113
  %v455 = vunpack.c.l.b16 %v114
  %v456 = vunpack.c.l.b16 %v115
  %v457 = vunpack.c.l.b16 %v116
  %v458 = vunpack.c.l.b16 %v117
  %v459 = vunpack.c.l.b16 %v118
  %v460 = vunpack.c.l.b16 %v119
  %v461 = vunpack.c.l.b16 %v120
  %v462 = vunpack.c.l.b16 %v121
  %v463 = vunpack.c.l.b16 %v122
  %v464 = vunpack.c.l.b16 %v123
  %v465 = vunpack.c.l.b16 %v124
  %v466 = vunpack.c.l.b16 %v125
  %v467 = vunpack.c.l.b16 %v126
  %v468 = vunpack.c.l.b16 %v127
  %v469 = vunpack.c.l.b16 %v128
  %v470 = vunpack.c.l.b16 %v129
  %v471 = vunpack.c.l.b16 %v130
  %v472 = vunpack.c.l.b16 %v131
  %v473 = vunpack.c.l.b16 %v132
  %v474 = vunpack.c.l.b16 %v133
  %v475 = vpack.c.b16 %v396, %v395
  %v476 = vpack.c.b16 %v398, %v397
  %v477 = vpack.c.b16 %v400, %v399
  %v478 = vpack.c.b16 %v402, %v401
  %v479 = vpack.c.b16 %v404, %v403
  %v480 = vpack.c.b16 %v406, %v405
  %v481 = vpack.c.b16 %v408, %v407
  %v482 = vpack.c.b16 %v410, %v409
  %v483 = vpack.c.b16 %v412, %v411
  %v484 = vpack.c.b16 %v414, %v413
  %v485 = vpack.c.b16 %v416, %v415
  %v486 = vpack.c.b16 %v418, %v417
  %v487 = vpack.c.b16 %v420, %v419
  %v488 = vpack.c.b16 %v422, %v421
  %v489 = vpack.c.b16 %v424, %v423
  %v490 = vpack.c.b16 %v426, %v425
  %v491 = vpack.c.b16 %v428, %v427
  %v492 = vpack.c.b16 %v430, %v429
  %v493 = vpack.c.b16 %v432, %v431
  %v494 = vpack.c.b16 %v434, %v433
  %v495 = vpack.c.b16 %v436, %v435
  %v496 = vpack.c.b16 %v438, %v437
  %v497 = vpack.c.b16 %v440, %v439
  %v498 = vpack.c.b16 %v442, %v441
  %v499 = vpack.c.b16 %v444, %v443
  %v500 = vpack.c.b16 %v446, %v445
  %v501 = vpack.c.b16 %v448, %v447
  %v502 = vpack.c.b16 %v450, %v449
  %v503 = vpack.c.b16 %v452, %v451
  %v504 = vpack.c.b16 %v454, %v453
  %v505 = vpack.c.b16 %v456, %v455
  %v506 = vpack.c.b16 %v458, %v457
  %v507 = vpack.c.b16 %v460, %v459
  %v508 = vpack.c.b16 %v462, %v461
  %v509 = vpack.c.b16 %v464, %v463
  %v510 = vpack.c.b16 %v466, %v465
  %v511 = vpack.c.b16 %v468, %v467
  %v512 = vpack.c.b16 %v470, %v469
  %v513 = vpack.c.b16 %v472, %v471
  %v514 = vpack.c.b16 %v474, %v473
  %555 = vmatprep.subr.bf16.mxu0 0
  %556 = vmatpush1.bf16.msra.mxu0 %v475
  %557 = vmatprep.subr.bf16.mxu0 0
  %558 = vmatpush1.bf16.msra.mxu0 %v476
  %559 = vmatprep.subr.bf16.mxu0 0
  %560 = vmatpush1.bf16.msra.mxu0 %v477
  %561 = vmatprep.subr.bf16.mxu0 0
  %562 = vmatpush1.bf16.msra.mxu0 %v478
  %563 = vmatprep.subr.bf16.mxu0 0
  %564 = vmatpush1.bf16.msra.mxu0 %v479
  %565 = vmatprep.subr.bf16.mxu0 0
  %566 = vmatpush1.bf16.msra.mxu0 %v480
  %567 = vmatprep.subr.bf16.mxu0 0
  %568 = vmatpush1.bf16.msra.mxu0 %v481
  %569 = vmatprep.subr.bf16.mxu0 0
  %570 = vmatpush1.bf16.msra.mxu0 %v482
  %571 = vmatprep.subr.bf16.mxu0 0
  %572 = vmatpush1.bf16.msra.mxu0 %v483
  %573 = vmatprep.subr.bf16.mxu0 0
  %574 = vmatpush1.bf16.msra.mxu0 %v484
  %575 = vmatprep.subr.bf16.mxu0 0
  %576 = vmatpush1.bf16.msra.mxu0 %v485
  %577 = vmatprep.subr.bf16.mxu0 0
  %578 = vmatpush1.bf16.msra.mxu0 %v486
  %579 = vmatprep.subr.bf16.mxu0 0
  %580 = vmatpush1.bf16.msra.mxu0 %v487
  %581 = vmatprep.subr.bf16.mxu0 0
  %582 = vmatpush1.bf16.msra.mxu0 %v488
  %583 = vmatprep.subr.bf16.mxu0 0
  %584 = vmatpush1.bf16.msra.mxu0 %v489
  %585 = vmatprep.subr.bf16.mxu0 0
  %586 = vmatpush1.bf16.msra.mxu0 %v490
  %587 = vmatprep.mubr.bf16.mxu0 %v246
  %588 = vmatmul.mubr.bf16.gmra.mrb[0].mxu0 %v245
  %v589 = vpop.f32.mrb[0].mxu0
  %v590 = vadd.f32 %v139, %v589
  %v591 = vpop.f32.mrb[0].mxu0
  %v592 = vpop.f32.mrb[0].mxu0
  %v593 = vadd.f32 %v139, %v592
  %v594 = vpop.f32.mrb[0].mxu0
  %595 = vmatprep.mubr.bf16.mxu0 %v251
  %596 = vmatmul.mubr.bf16.gmra.mrb[0].mxu0 %v250
  %v597 = vpop.f32.mrb[0].mxu0
  %v598 = vadd.f32 %v139, %v597
  %v599 = vpop.f32.mrb[0].mxu0
  %v600 = vpop.f32.mrb[0].mxu0
  %v601 = vadd.f32 %v139, %v600
  %v602 = vpop.f32.mrb[0].mxu0
  %603 = vmatprep.mubr.bf16.mxu0 %v256
  %604 = vmatmul.mubr.bf16.gmra.mrb[0].mxu0 %v255
  %v605 = vpop.f32.mrb[0].mxu0
  %v606 = vadd.f32 %v139, %v605
  %v607 = vpop.f32.mrb[0].mxu0
  %v608 = vpop.f32.mrb[0].mxu0
  %v609 = vadd.f32 %v139, %v608
  %v610 = vpop.f32.mrb[0].mxu0
  %611 = vmatprep.mubr.bf16.mxu0 %v261
  %612 = vmatmul.mubr.bf16.gmra.mrb[0].mxu0 %v260
  %v613 = vpop.f32.mrb[0].mxu0
  %v614 = vadd.f32 %v139, %v613
  %v615 = vpop.f32.mrb[0].mxu0
  %v616 = vpop.f32.mrb[0].mxu0
  %v617 = vadd.f32 %v139, %v616
  %v618 = vpop.f32.mrb[0].mxu0
  %619 = vmatprep.mubr.bf16.mxu0 %v266
  %620 = vmatmul.mubr.bf16.gmra.mrb[0].mxu0 %v265
  %v621 = vpop.f32.mrb[0].mxu0
  %v622 = vadd.f32 %v139, %v621
  %v623 = vpop.f32.mrb[0].mxu0
  %v624 = vpop.f32.mrb[0].mxu0
  %v625 = vadd.f32 %v139, %v624
  %v626 = vpop.f32.mrb[0].mxu0
  %627 = vmatprep.mubr.bf16.mxu0 %v271
  %628 = vmatmul.mubr.bf16.gmra.mrb[0].mxu0 %v270
  %v629 = vpop.f32.mrb[0].mxu0
  %v630 = vadd.f32 %v139, %v629
  %v631 = vpop.f32.mrb[0].mxu0
  %v632 = vpop.f32.mrb[0].mxu0
  %v633 = vadd.f32 %v139, %v632
  %v634 = vpop.f32.mrb[0].mxu0
  %635 = vmatprep.mubr.bf16.mxu0 %v276
  %636 = vmatmul.mubr.bf16.gmra.mrb[0].mxu0 %v275
  %v637 = vpop.f32.mrb[0].mxu0
  %v638 = vadd.f32 %v139, %v637
  %v639 = vpop.f32.mrb[0].mxu0
  %v640 = vpop.f32.mrb[0].mxu0
  %v641 = vpop.f32.mrb[0].mxu0
  %642 = vdwg.mxu0
  %643 = vmatprep.subr.bf16.mxu0 0
  %644 = vmatpush1.bf16.msra.mxu0 %v491
  %645 = vmatprep.subr.bf16.mxu0 0
  %646 = vmatpush1.bf16.msra.mxu0 %v492
  %647 = vmatprep.subr.bf16.mxu0 0
  %648 = vmatpush1.bf16.msra.mxu0 %v493
  %649 = vmatprep.subr.bf16.mxu0 0
  %650 = vmatpush1.bf16.msra.mxu0 %v494
  %651 = vmatprep.subr.bf16.mxu0 0
  %652 = vmatpush1.bf16.msra.mxu0 %v495
  %653 = vmatprep.subr.bf16.mxu0 0
  %654 = vmatpush1.bf16.msra.mxu0 %v496
  %655 = vmatprep.subr.bf16.mxu0 0
  %656 = vmatpush1.bf16.msra.mxu0 %v497
  %657 = vmatprep.subr.bf16.mxu0 0
  %658 = vmatpush1.bf16.msra.mxu0 %v498
  %659 = vmatprep.subr.bf16.mxu0 0
  %660 = vmatpush1.bf16.msra.mxu0 %v499
  %661 = vmatprep.subr.bf16.mxu0 0
  %662 = vmatpush1.bf16.msra.mxu0 %v500
  %663 = vmatprep.subr.bf16.mxu0 0
  %664 = vmatpush1.bf16.msra.mxu0 %v501
  %665 = vmatprep.subr.bf16.mxu0 0
  %666 = vmatpush1.bf16.msra.mxu0 %v502
  %667 = vmatprep.subr.bf16.mxu0 0
  %668 = vmatpush1.bf16.msra.mxu0 %v503
  %669 = vmatprep.subr.bf16.mxu0 0
  %670 = vmatpush1.bf16.msra.mxu0 %v504
  %671 = vmatprep.subr.bf16.mxu0 0
  %672 = vmatpush1.bf16.msra.mxu0 %v505
  %673 = vmatprep.subr.bf16.mxu0 0
  %674 = vmatpush1.bf16.msra.mxu0 %v506
  %675 = vmatprep.mubr.bf16.mxu0 %v248
  %676 = vmatmul.mubr.bf16.gmra.mrb[0].mxu0 %v247
  %v677 = vpop.f32.mrb[0].mxu0
  %v678 = vadd.f32 %v590, %v677
  %v679 = vpop.f32.mrb[0].mxu0
  %v680 = vpop.f32.mrb[0].mxu0
  %v681 = vadd.f32 %v593, %v680
  %v682 = vpop.f32.mrb[0].mxu0
  %683 = vmatprep.mubr.bf16.mxu0 %v253
  %684 = vmatmul.mubr.bf16.gmra.mrb[0].mxu0 %v252
  %v685 = vpop.f32.mrb[0].mxu0
  %v686 = vadd.f32 %v598, %v685
  %v687 = vpop.f32.mrb[0].mxu0
  %v688 = vpop.f32.mrb[0].mxu0
  %v689 = vadd.f32 %v601, %v688
  %v690 = vpop.f32.mrb[0].mxu0
  %691 = vmatprep.mubr.bf16.mxu0 %v258
  %692 = vmatmul.mubr.bf16.gmra.mrb[0].mxu0 %v257
  %v693 = vpop.f32.mrb[0].mxu0
  %v694 = vadd.f32 %v606, %v693
  %v695 = vpop.f32.mrb[0].mxu0
  %v696 = vpop.f32.mrb[0].mxu0
  %v697 = vadd.f32 %v609, %v696
  %v698 = vpop.f32.mrb[0].mxu0
  %699 = vmatprep.mubr.bf16.mxu0 %v263
  %700 = vmatmul.mubr.bf16.gmra.mrb[0].mxu0 %v262
  %v701 = vpop.f32.mrb[0].mxu0
  %v702 = vadd.f32 %v614, %v701
  %v703 = vpop.f32.mrb[0].mxu0
  %v704 = vpop.f32.mrb[0].mxu0
  %v705 = vadd.f32 %v617, %v704
  %v706 = vpop.f32.mrb[0].mxu0
  %707 = vmatprep.mubr.bf16.mxu0 %v268
  %708 = vmatmul.mubr.bf16.gmra.mrb[0].mxu0 %v267
  %v709 = vpop.f32.mrb[0].mxu0
  %v710 = vadd.f32 %v622, %v709
  %v711 = vpop.f32.mrb[0].mxu0
  %v712 = vpop.f32.mrb[0].mxu0
  %v713 = vadd.f32 %v625, %v712
  %v714 = vpop.f32.mrb[0].mxu0
  %715 = vmatprep.mubr.bf16.mxu0 %v273
  %716 = vmatmul.mubr.bf16.gmra.mrb[0].mxu0 %v272
  %v717 = vpop.f32.mrb[0].mxu0
  %v718 = vadd.f32 %v630, %v717
  %v719 = vpop.f32.mrb[0].mxu0
  %v720 = vpop.f32.mrb[0].mxu0
  %v721 = vadd.f32 %v633, %v720
  %v722 = vpop.f32.mrb[0].mxu0
  %723 = vmatprep.mubr.bf16.mxu0 %v278
  %724 = vmatmul.mubr.bf16.gmra.mrb[0].mxu0 %v277
  %v725 = vpop.f32.mrb[0].mxu0
  %v726 = vadd.f32 %v638, %v725
  %v727 = vpop.f32.mrb[0].mxu0
  %v728 = vpop.f32.mrb[0].mxu0
  %v729 = vpop.f32.mrb[0].mxu0
  %730 = vdwg.mxu0
  %731 = vmatprep.subr.bf16.mxu0 0
  %732 = vmatpush1.bf16.msra.mxu0 %v507
  %733 = vmatprep.subr.bf16.mxu0 0
  %734 = vmatpush1.bf16.msra.mxu0 %v508
  %735 = vmatprep.subr.bf16.mxu0 0
  %736 = vmatpush1.bf16.msra.mxu0 %v509
  %737 = vmatprep.subr.bf16.mxu0 0
  %738 = vmatpush1.bf16.msra.mxu0 %v510
  %739 = vmatprep.subr.bf16.mxu0 0
  %740 = vmatpush1.bf16.msra.mxu0 %v511
  %741 = vmatprep.subr.bf16.mxu0 0
  %742 = vmatpush1.bf16.msra.mxu0 %v512
  %743 = vmatprep.subr.bf16.mxu0 0
  %744 = vmatpush1.bf16.msra.mxu0 %v513
  %745 = vmatprep.subr.bf16.mxu0 0
  %746 = vmatpush1.bf16.msra.mxu0 %v514
  %747 = vmatprep.subr.bf16.mxu0 0
  %748 = vmatpush1.bf16.msra.mxu0 0
  %749 = vmatprep.subr.bf16.mxu0 0
  %750 = vmatpush1.bf16.msra.mxu0 0
  %751 = vmatprep.subr.bf16.mxu0 0
  %752 = vmatpush1.bf16.msra.mxu0 0
  %753 = vmatprep.subr.bf16.mxu0 0
  %754 = vmatpush1.bf16.msra.mxu0 0
  %755 = vmatprep.subr.bf16.mxu0 0
  %756 = vmatpush1.bf16.msra.mxu0 0
  %757 = vmatprep.subr.bf16.mxu0 0
  %758 = vmatpush1.bf16.msra.mxu0 0
  %759 = vmatprep.subr.bf16.mxu0 0
  %760 = vmatpush1.bf16.msra.mxu0 0
  %761 = vmatprep.subr.bf16.mxu0 0
  %762 = vmatpush1.bf16.msra.mxu0 0
  %763 = vmatprep.mubr.bf16.mxu0 0
  %764 = vmatmul.mubr.bf16.gmra.mrb[0].mxu0 %v249
  %v765 = vpop.f32.mrb[0].mxu0
  %v766 = vadd.f32 %v678, %v765
  %v767 = vpop.f32.mrb[0].mxu0
  %v768 = vpop.f32.mrb[0].mxu0
  %v769 = vadd.f32 %v681, %v768
  %v770 = vpop.f32.mrb[0].mxu0
  %771 = vmatprep.mubr.bf16.mxu0 0
  %772 = vmatmul.mubr.bf16.gmra.mrb[0].mxu0 %v254
  %v773 = vpop.f32.mrb[0].mxu0
  %v774 = vadd.f32 %v686, %v773
  %v775 = vpop.f32.mrb[0].mxu0
  %v776 = vpop.f32.mrb[0].mxu0
  %v777 = vadd.f32 %v689, %v776
  %v778 = vpop.f32.mrb[0].mxu0
  %779 = vmatprep.mubr.bf16.mxu0 0
  %780 = vmatmul.mubr.bf16.gmra.mrb[0].mxu0 %v259
  %v781 = vpop.f32.mrb[0].mxu0
  %v782 = vadd.f32 %v694, %v781
  %v783 = vpop.f32.mrb[0].mxu0
  %v784 = vpop.f32.mrb[0].mxu0
  %v785 = vadd.f32 %v697, %v784
  %v786 = vpop.f32.mrb[0].mxu0
  %787 = vmatprep.mubr.bf16.mxu0 0
  %788 = vmatmul.mubr.bf16.gmra.mrb[0].mxu0 %v264
  %v789 = vpop.f32.mrb[0].mxu0
  %v790 = vadd.f32 %v702, %v789
  %v791 = vpop.f32.mrb[0].mxu0
  %v792 = vpop.f32.mrb[0].mxu0
  %v793 = vadd.f32 %v705, %v792
  %v794 = vpop.f32.mrb[0].mxu0
  %795 = vmatprep.mubr.bf16.mxu0 0
  %796 = vmatmul.mubr.bf16.gmra.mrb[0].mxu0 %v269
  %v797 = vpop.f32.mrb[0].mxu0
  %v798 = vadd.f32 %v710, %v797
  %v799 = vpop.f32.mrb[0].mxu0
  %v800 = vpop.f32.mrb[0].mxu0
  %v801 = vadd.f32 %v713, %v800
  %v802 = vpop.f32.mrb[0].mxu0
  %803 = vmatprep.mubr.bf16.mxu0 0
  %804 = vmatmul.mubr.bf16.gmra.mrb[0].mxu0 %v274
  %v805 = vpop.f32.mrb[0].mxu0
  %v806 = vadd.f32 %v718, %v805
  %v807 = vpop.f32.mrb[0].mxu0
  %v808 = vpop.f32.mrb[0].mxu0
  %v809 = vadd.f32 %v721, %v808
  %v810 = vpop.f32.mrb[0].mxu0
  %811 = vmatprep.mubr.bf16.mxu0 0
  %812 = vmatmul.mubr.bf16.gmra.mrb[0].mxu0 %v279
  %v813 = vpop.f32.mrb[0].mxu0
  %v814 = vadd.f32 %v726, %v813
  %v815 = vpop.f32.mrb[0].mxu0
  %v816 = vpop.f32.mrb[0].mxu0
  %v817 = vpop.f32.mrb[0].mxu0
  %818 = vdwg.mxu0
  %v819 = vmax.f32 %v766, 0.0
  %v820 = vmax.f32 %v769, 0.0
  %v821 = vmax.f32 %v774, 0.0
  %v822 = vmax.f32 %v777, 0.0
  %v823 = vmax.f32 %v782, 0.0
  %v824 = vmax.f32 %v785, 0.0
  %v825 = vmax.f32 %v790, 0.0
  %v826 = vmax.f32 %v793, 0.0
  %v827 = vmax.f32 %v798, 0.0
  %v828 = vmax.f32 %v801, 0.0
  %v829 = vmax.f32 %v806, 0.0
  %v830 = vmax.f32 %v809, 0.0
  %v831 = vmax.f32 %v814, 0.0
  %v832 = vpack.c.bf16 %v820, %v819
  %v833 = vpack.c.bf16 %v822, %v821
  %v834 = vpack.c.bf16 %v824, %v823
  %v835 = vpack.c.bf16 %v826, %v825
  %v836 = vpack.c.bf16 %v828, %v827
  %v837 = vpack.c.bf16 %v830, %v829
  %v838 = vpack.c.bf16 %v831, %v831
  %v846 = vunpack.c.l.b16 %v832
  %v847 = vunpack.c.h.b16 %v832
  %v848 = vunpack.c.l.b16 %v833
  %v849 = vunpack.c.h.b16 %v833
  %v850 = vunpack.c.l.b16 %v834
  %v851 = vunpack.c.h.b16 %v834
  %v852 = vunpack.c.l.b16 %v835
  %v853 = vunpack.c.h.b16 %v835
  %v854 = vunpack.c.l.b16 %v836
  %v855 = vunpack.c.h.b16 %v836
  %v856 = vunpack.c.l.b16 %v837
  %v857 = vunpack.c.h.b16 %v837
  %v858 = vunpack.c.l.b16 %v838
  %v859 = vpack.c.b16 %v846, %v846
  %v860 = vpack.c.b16 %v847, %v847
  %v861 = vpack.c.b16 %v848, %v848
  %v862 = vpack.c.b16 %v849, %v849
  %v863 = vpack.c.b16 %v850, %v850
  %v864 = vpack.c.b16 %v851, %v851
  %v865 = vpack.c.b16 %v852, %v852
  %v866 = vpack.c.b16 %v853, %v853
  %v867 = vpack.c.b16 %v854, %v854
  %v868 = vpack.c.b16 %v855, %v855
  %v869 = vpack.c.b16 %v856, %v856
  %v870 = vpack.c.b16 %v857, %v857
  %v871 = vpack.c.b16 %v858, %v858
  %vm885 = vcmask 519168
  %886 = vst.msk [vmem:[%s3] sm:$0xf] %vm885, %v859
  %887 = vst.msk [vmem:[%s3 + $0x4] sm:$0xf] %vm885, %v860
  %888 = vst.msk [vmem:[%s3 + $0x8] sm:$0xf] %vm885, %v861
  %889 = vst.msk [vmem:[%s3 + $0xc] sm:$0xf] %vm885, %v862
  %890 = vst.msk [vmem:[%s3 + $0x10] sm:$0xf] %vm885, %v863
  %891 = vst.msk [vmem:[%s3 + $0x14] sm:$0xf] %vm885, %v864
  %892 = vst.msk [vmem:[%s3 + $0x18] sm:$0xf] %vm885, %v865
  %893 = vst.msk [vmem:[%s3 + $0x1c] sm:$0xf] %vm885, %v866
  %894 = vst.msk [vmem:[%s3 + $0x20] sm:$0xf] %vm885, %v867
  %895 = vst.msk [vmem:[%s3 + $0x24] sm:$0xf] %vm885, %v868
  %896 = vst.msk [vmem:[%s3 + $0x28] sm:$0xf] %vm885, %v869
  %897 = vst.msk [vmem:[%s3 + $0x2c] sm:$0xf] %vm885, %v870
  %vm898 = vcmask 516096
  %899 = vst.msk [vmem:[%s3 + $0x30] sm:$0x1] %vm898, %v871
  // Predicated region
  $region14: #{rainbow_dqn_forward.6} parent=0 // pred_check
    _
  $region15: #{rainbow_dqn_forward.6} parent=0 // pred_check_branch
    %901 = sbr.rel (0) target = $region17
  $region16: #{rainbow_dqn_forward.6} parent=0 // pred_region
    _
  $region17: #{rainbow_dqn_forward.6} parent=0 // pred_fallthru
    _
  // Predicated region
  $region18: #{rainbow_dqn_forward.6} parent=0 // pred_check
    _
  $region19: #{rainbow_dqn_forward.6} parent=0 // pred_check_branch
    %903 = sbr.rel (0) target = $region21
  $region20: #{rainbow_dqn_forward.6} parent=0 // pred_region
    _
  $region21: #{rainbow_dqn_forward.6} parent=0 // pred_fallthru
    _

// kernel: rainbow_dqn_forward.7
$region0: #{rainbow_dqn_forward.7}
  #allocation0 [shape = 'u32[]', space=smem, size = 0x4, offset = 0x4, fixed_abs, tag = 'smem constant byte address 0x4 - core index']
  #allocation1 [shape = 'u32[144,128]{1,0:T(1,128)}', space=vmem, size = 0x12000, scoped, tag = 'internal scratch']
  #allocation2 [shape = 'f32[2,1024]{1,0:T(2,128)}', space=vmem, size = 0x2000, scoped, tag = 'scratch operand']
  %s0 = inlined_call_operand.vmem [shape: bf16[2,3200], index: 0, kind: input, shape index: {}]
  %s1 = inlined_call_operand.vmem [shape: bf16[3200,1024], index: 1, kind: input, shape index: {}]
  %s2 = inlined_call_operand.vmem [shape: f32[1,1024], index: 2, kind: input, shape index: {}]
  %s3 = inlined_call_operand.vmem [shape: bf16[512,51], index: 3, kind: input, shape index: {}]
  %s4 = inlined_call_operand.vmem [shape: f32[1,51], index: 4, kind: input, shape index: {}]
  %s5 = inlined_call_operand.vmem [shape: bf16[512,306], index: 5, kind: input, shape index: {}]
  %s6 = inlined_call_operand.vmem [shape: f32[1,306], index: 6, kind: input, shape index: {}]
  %s7 = inlined_call_operand.vmem [shape: f32[2,306], index: 7, kind: output, shape index: {}]
  %s8 = sld [smem:[#allocation0]]
  $region69: #{rainbow_dqn_forward.7} parent=0
    _
  %s10 = ssub.s32 1, %s8
  %s11 = scalar_select 0, %s10, %s8
  loop: start=0, step=1, limit=7
  $region2: #{rainbow_dqn_forward.7} parent=0 // loop_pre_header
    _
  $region3: #{rainbow_dqn_forward.7} parent=0 // loop_header
    %s13 = sphi 0, %s17
    %p14 = scmp.ge.s32.totalorder %s13, 7
    %s23 = sphi 0, %s25
    %s26 = sphi 0, %s23
    %s27 = sphi 0, %s26
    %s43 = sphi 0, %s27
    %s49 = sphi 0, %s51
    %s52 = sphi 0, %s49
    %s53 = sphi 0, %s52
    %s69 = sphi 0, %s53
    %s73 = sphi 0, %s73
    %s75 = sphi 0, %s73
    %s76 = sphi 0, %s75
    %s90 = sphi 0, %s76
    %s94 = sphi 0, %s94
    %s96 = sphi 0, %s94
    %s97 = sphi 0, %s96
    %s111 = sphi 0, %s97
    %s115 = sphi 0, %s115
    %s117 = sphi 0, %s115
    %s118 = sphi 0, %s117
    %s132 = sphi 0, %s118
    %s136 = sphi 0, %s136
    %s138 = sphi 0, %s136
    %s139 = sphi 0, %s138
    %s153 = sphi 0, %s139
    %s157 = sphi 0, %s157
    %s159 = sphi 0, %s157
    %s160 = sphi 0, %s159
    %s174 = sphi 0, %s160
    %s178 = sphi 0, %s178
    %s180 = sphi 0, %s178
    %s181 = sphi 0, %s180
    %s195 = sphi 0, %s181
  $region4: #{rainbow_dqn_forward.7} parent=0 // loop_header_branch
    %16 = sbr.rel (%p14) target = $region8
  $region5: #{rainbow_dqn_forward.7} parent=0 // loop_body
    %s18 = ssub.s32 %s13, 1
    %s19 = ssub.s32 %s13, 2
    %s20 = sadd.s32 %s13, 1
    %s21 = ssub.s32 %s13, %s20
    %p22 = scmp.eq.s32.totalorder %s21, 0
    %s24 = sadd.s32 %s23, 1
    %s25 = scalar_select %p22, %s23, %s24
    %p28 = pneg %p22
    %p29 = scmp.eq.s32.totalorder %s13, 4
    %p30 = por %p28, %p29
    %p31 = scmp.ne.s32.totalorder %s23, %s26
    %p32 = scmp.eq.s32.totalorder %s13, 0
    %p33 = por %p31, %p32
    %p34 = scmp.ne.s32.totalorder %s23, %s26
    %p35 = scmp.eq.s32.totalorder %s18, 4
    %p36 = por %p34, %p35
    %p37 = scmp.ne.s32.totalorder %s26, %s27
    %p38 = scmp.eq.s32.totalorder %s18, 0
    %p39 = por %p37, %p38
    %p40 = scmp.ne.s32.totalorder %s26, %s27
    %p41 = scmp.eq.s32.totalorder %s19, 4
    %p42 = por %p40, %p41
    %p44 = scmp.ne.s32.totalorder %s27, %s43
    %p45 = scmp.eq.s32.totalorder %s19, 0
    %p46 = por %p44, %p45
    %s47 = ssub.s32 %s13, %s20
    %p48 = scmp.eq.s32.totalorder %s47, 0
    %s50 = sadd.s32 %s49, 1
    %s51 = scalar_select %p48, %s49, %s50
    %p54 = pneg %p48
    %p55 = scmp.eq.s32.totalorder %s13, 4
    %p56 = por %p54, %p55
    %p57 = scmp.ne.s32.totalorder %s49, %s52
    %p58 = scmp.eq.s32.totalorder %s13, 0
    %p59 = por %p57, %p58
    %p60 = scmp.ne.s32.totalorder %s49, %s52
    %p61 = scmp.eq.s32.totalorder %s18, 4
    %p62 = por %p60, %p61
    %p63 = scmp.ne.s32.totalorder %s52, %s53
    %p64 = scmp.eq.s32.totalorder %s18, 0
    %p65 = por %p63, %p64
    %p66 = scmp.ne.s32.totalorder %s52, %s53
    %p67 = scmp.eq.s32.totalorder %s19, 4
    %p68 = por %p66, %p67
    %p70 = scmp.ne.s32.totalorder %s53, %s69
    %p71 = scmp.eq.s32.totalorder %s19, 0
    %p72 = por %p70, %p71
    %s74 = sadd.s32 %s73, 1
    %p77 = scmp.eq.s32.totalorder %s13, 4
    %p78 = scmp.ne.s32.totalorder %s73, %s75
    %p79 = scmp.eq.s32.totalorder %s13, 0
    %p80 = por %p78, %p79
    %p81 = scmp.ne.s32.totalorder %s73, %s75
    %p82 = scmp.eq.s32.totalorder %s18, 4
    %p83 = por %p81, %p82
    %p84 = scmp.ne.s32.totalorder %s75, %s76
    %p85 = scmp.eq.s32.totalorder %s18, 0
    %p86 = por %p84, %p85
    %p87 = scmp.ne.s32.totalorder %s75, %s76
    %p88 = scmp.eq.s32.totalorder %s19, 4
    %p89 = por %p87, %p88
    %p91 = scmp.ne.s32.totalorder %s76, %s90
    %p92 = scmp.eq.s32.totalorder %s19, 0
    %p93 = por %p91, %p92
    %s95 = sadd.s32 %s94, 1
    %p98 = scmp.eq.s32.totalorder %s13, 4
    %p99 = scmp.ne.s32.totalorder %s94, %s96
    %p100 = scmp.eq.s32.totalorder %s13, 0
    %p101 = por %p99, %p100
    %p102 = scmp.ne.s32.totalorder %s94, %s96
    %p103 = scmp.eq.s32.totalorder %s18, 4
    %p104 = por %p102, %p103
    %p105 = scmp.ne.s32.totalorder %s96, %s97
    %p106 = scmp.eq.s32.totalorder %s18, 0
    %p107 = por %p105, %p106
    %p108 = scmp.ne.s32.totalorder %s96, %s97
    %p109 = scmp.eq.s32.totalorder %s19, 4
    %p110 = por %p108, %p109
    %p112 = scmp.ne.s32.totalorder %s97, %s111
    %p113 = scmp.eq.s32.totalorder %s19, 0
    %p114 = por %p112, %p113
    %s116 = sadd.s32 %s115, 1
    %p119 = scmp.eq.s32.totalorder %s13, 4
    %p120 = scmp.ne.s32.totalorder %s115, %s117
    %p121 = scmp.eq.s32.totalorder %s13, 0
    %p122 = por %p120, %p121
    %p123 = scmp.ne.s32.totalorder %s115, %s117
    %p124 = scmp.eq.s32.totalorder %s18, 4
    %p125 = por %p123, %p124
    %p126 = scmp.ne.s32.totalorder %s117, %s118
    %p127 = scmp.eq.s32.totalorder %s18, 0
    %p128 = por %p126, %p127
    %p129 = scmp.ne.s32.totalorder %s117, %s118
    %p130 = scmp.eq.s32.totalorder %s19, 4
    %p131 = por %p129, %p130
    %p133 = scmp.ne.s32.totalorder %s118, %s132
    %p134 = scmp.eq.s32.totalorder %s19, 0
    %p135 = por %p133, %p134
    %s137 = sadd.s32 %s136, 1
    %p140 = scmp.eq.s32.totalorder %s13, 4
    %p141 = scmp.ne.s32.totalorder %s136, %s138
    %p142 = scmp.eq.s32.totalorder %s13, 0
    %p143 = por %p141, %p142
    %p144 = scmp.ne.s32.totalorder %s136, %s138
    %p145 = scmp.eq.s32.totalorder %s18, 4
    %p146 = por %p144, %p145
    %p147 = scmp.ne.s32.totalorder %s138, %s139
    %p148 = scmp.eq.s32.totalorder %s18, 0
    %p149 = por %p147, %p148
    %p150 = scmp.ne.s32.totalorder %s138, %s139
    %p151 = scmp.eq.s32.totalorder %s19, 4
    %p152 = por %p150, %p151
    %p154 = scmp.ne.s32.totalorder %s139, %s153
    %p155 = scmp.eq.s32.totalorder %s19, 0
    %p156 = por %p154, %p155
    %s158 = sadd.s32 %s157, 1
    %p161 = scmp.eq.s32.totalorder %s13, 4
    %p162 = scmp.ne.s32.totalorder %s157, %s159
    %p163 = scmp.eq.s32.totalorder %s13, 0
    %p164 = por %p162, %p163
    %p165 = scmp.ne.s32.totalorder %s157, %s159
    %p166 = scmp.eq.s32.totalorder %s18, 4
    %p167 = por %p165, %p166
    %p168 = scmp.ne.s32.totalorder %s159, %s160
    %p169 = scmp.eq.s32.totalorder %s18, 0
    %p170 = por %p168, %p169
    %p171 = scmp.ne.s32.totalorder %s159, %s160
    %p172 = scmp.eq.s32.totalorder %s19, 4
    %p173 = por %p171, %p172
    %p175 = scmp.ne.s32.totalorder %s160, %s174
    %p176 = scmp.eq.s32.totalorder %s19, 0
    %p177 = por %p175, %p176
    %s179 = sadd.s32 %s178, 1
    %p182 = scmp.eq.s32.totalorder %s13, 4
    %p183 = scmp.ne.s32.totalorder %s178, %s180
    %p184 = scmp.eq.s32.totalorder %s13, 0
    %p185 = por %p183, %p184
    %p186 = scmp.ne.s32.totalorder %s178, %s180
    %p187 = scmp.eq.s32.totalorder %s18, 4
    %p188 = por %p186, %p187
    %p189 = scmp.ne.s32.totalorder %s180, %s181
    %p190 = scmp.eq.s32.totalorder %s18, 0
    %p191 = por %p189, %p190
    %p192 = scmp.ne.s32.totalorder %s180, %s181
    %p193 = scmp.eq.s32.totalorder %s19, 4
    %p194 = por %p192, %p193
    %p196 = scmp.ne.s32.totalorder %s181, %s195
    %p197 = scmp.eq.s32.totalorder %s19, 0
    %p198 = por %p196, %p197
    %p199 = scmp.le.s32.totalorder 1, %s13
    %p200 = scmp.lt.s32.totalorder %s13, 6
    %p201 = pnand %p199, %p200
    %p202 = pneg %p201
    // Predicated region
    $region9: #{rainbow_dqn_forward.7} parent=5 // pred_check
      _
    $region10: #{rainbow_dqn_forward.7} parent=5 // pred_check_branch
      %204 = sbr.rel (%p201) target = $region12
    $region11: #{rainbow_dqn_forward.7} parent=5 // pred_region
      %s205 = ssub.s32 %s13, 1
      // Predicated region
      $region13: #{rainbow_dqn_forward.7} parent=11 // pred_check
        %p206 = pneg %p86
      $region14: #{rainbow_dqn_forward.7} parent=11 // pred_check_branch
        %208 = sbr.rel (%p206) target = $region16
      $region15: #{rainbow_dqn_forward.7} parent=11 // pred_region
        _
      $region16: #{rainbow_dqn_forward.7} parent=11 // pred_fallthru
        _
      // Predicated region
      $region17: #{rainbow_dqn_forward.7} parent=11 // pred_check
        %p209 = pneg %p107
      $region18: #{rainbow_dqn_forward.7} parent=11 // pred_check_branch
        %211 = sbr.rel (%p209) target = $region20
      $region19: #{rainbow_dqn_forward.7} parent=11 // pred_region
        _
      $region20: #{rainbow_dqn_forward.7} parent=11 // pred_fallthru
        _
      // Predicated region
      $region21: #{rainbow_dqn_forward.7} parent=11 // pred_check
        %p212 = pneg %p128
      $region22: #{rainbow_dqn_forward.7} parent=11 // pred_check_branch
        %214 = sbr.rel (%p212) target = $region24
      $region23: #{rainbow_dqn_forward.7} parent=11 // pred_region
        _
      $region24: #{rainbow_dqn_forward.7} parent=11 // pred_fallthru
        _
      // Predicated region
      $region25: #{rainbow_dqn_forward.7} parent=11 // pred_check
        %p215 = pneg %p149
      $region26: #{rainbow_dqn_forward.7} parent=11 // pred_check_branch
        %217 = sbr.rel (%p215) target = $region28
      $region27: #{rainbow_dqn_forward.7} parent=11 // pred_region
        _
      $region28: #{rainbow_dqn_forward.7} parent=11 // pred_fallthru
        _
      // Predicated region
      $region29: #{rainbow_dqn_forward.7} parent=11 // pred_check
        %p218 = pneg %p170
      $region30: #{rainbow_dqn_forward.7} parent=11 // pred_check_branch
        %220 = sbr.rel (%p218) target = $region32
      $region31: #{rainbow_dqn_forward.7} parent=11 // pred_region
        _
      $region32: #{rainbow_dqn_forward.7} parent=11 // pred_fallthru
        _
    $region12: #{rainbow_dqn_forward.7} parent=5 // pred_fallthru
      _
    %p221 = scmp.lt.s32.totalorder %s13, 5
    // Predicated region
    $region33: #{rainbow_dqn_forward.7} parent=5 // pred_check
      %p222 = pneg %p221
    $region34: #{rainbow_dqn_forward.7} parent=5 // pred_check_branch
      %224 = sbr.rel (%p222) target = $region36
    $region35: #{rainbow_dqn_forward.7} parent=5 // pred_region
      // Predicated region
      $region37: #{rainbow_dqn_forward.7} parent=35 // pred_check
        %p225 = pneg %p33
      $region38: #{rainbow_dqn_forward.7} parent=35 // pred_check_branch
        %227 = sbr.rel (%p225) target = $region40
      $region39: #{rainbow_dqn_forward.7} parent=35 // pred_region
        %s228 = smul.u32 5, %s13
        %p229 = scmp.lt.s32.totalorder %s228, 24
        %s230 = scalar_select %p229, %s228, 24
        %s231 = scalar_lea.vmem %s0, %s230
        %s232 = smul.u32 5, %s13
      $region40: #{rainbow_dqn_forward.7} parent=35 // pred_fallthru
        _
      // Predicated region
      $region41: #{rainbow_dqn_forward.7} parent=35 // pred_check
        %p233 = pneg %p59
      $region42: #{rainbow_dqn_forward.7} parent=35 // pred_check_branch
        %235 = sbr.rel (%p233) target = $region44
      $region43: #{rainbow_dqn_forward.7} parent=35 // pred_region
        %s236 = smul.u32 80, %s13
        %p237 = scmp.lt.s32.totalorder %s236, 399
        %s238 = scalar_select %p237, %s236, 399
        %s239 = smul.addr %s238, 8
        %s240 = smul.addr %s239, 4
        %s241 = scalar_lea.vmem %s1, %s240
        %s242 = smul.u32 80, %s13
      $region44: #{rainbow_dqn_forward.7} parent=35 // pred_fallthru
        _
    $region36: #{rainbow_dqn_forward.7} parent=5 // pred_fallthru
      _
    %p243 = scmp.le.s32.totalorder 1, %s13
    %p244 = scmp.lt.s32.totalorder %s13, 6
    %p245 = pnand %p243, %p244
    %p246 = pneg %p245
    // Predicated region
    $region45: #{rainbow_dqn_forward.7} parent=5 // pred_check
      _
    $region46: #{rainbow_dqn_forward.7} parent=5 // pred_check_branch
      %248 = sbr.rel (%p245) target = $region48
    $region47: #{rainbow_dqn_forward.7} parent=5 // pred_region
      %s249 = ssub.s32 %s13, 1
      %s250 = smul.u32 5, %s18
      %p251 = scmp.lt.s32.totalorder %s250, 24
      %s252 = scalar_select %p251, %s250, 24
      %s253 = scalar_lea.vmem %s0, %s252
      %p254 = pneg %p39
      %p255 = pneg %p36
      %s256 = smul.u32 80, %s18
      %p257 = scmp.lt.s32.totalorder %s256, 399
      %s258 = scalar_select %p257, %s256, 399
      %s259 = smul.addr %s258, 8
      %s260 = smul.addr %s259, 4
      %s261 = scalar_lea.vmem %s1, %s260
      %p262 = pneg %p65
      %p263 = pneg %p62
      %p264 = pneg %p86
      %p265 = pneg %p83
      %p266 = pneg %p107
      %p267 = pneg %p104
      %p268 = pneg %p128
      %p269 = pneg %p125
      %p270 = pneg %p149
      %p271 = pneg %p146
      %p272 = pneg %p170
      %p273 = pneg %p167
      %p274 = pneg %p191
      %p275 = pneg %p188
      %s276 = smul.u32 5, %s18
      %p277 = scmp.lt.s32.totalorder %s276, 24
      %s278 = scalar_select %p277, %s276, 24
      %s279 = scalar_lea.vmem %s0, %s278
      %s280 = smul.u32 5, %s18
      %s281 = smul.u32 80, %s18
      %p282 = scmp.lt.s32.totalorder %s281, 399
      %s283 = scalar_select %p282, %s281, 399
      %s284 = smul.addr %s283, 8
      %s285 = smul.addr %s284, 4
      %s286 = scalar_lea.vmem %s1, %s285
      %s287 = smul.u32 80, %s18
      %p289 = scmp.eq.s32.totalorder %s18, 0
      // Predicated region
      $region49: #{rainbow_dqn_forward.7} parent=47 // pred_check
        %p290 = pneg %p289
      $region50: #{rainbow_dqn_forward.7} parent=47 // pred_check_branch
        %292 = sbr.rel (%p290) target = $region52
      $region51: #{rainbow_dqn_forward.7} parent=47 // pred_region
        %293 = vst [vmem:[#allocation2] sm:$0xff] 0.0
        %294 = vst [vmem:[#allocation2 + $0x8] sm:$0xff] 0.0
      $region52: #{rainbow_dqn_forward.7} parent=47 // pred_fallthru
        _
      %v295 = vld [vmem:[#allocation2] sm:$0xff]
      %v296 = vld [vmem:[#allocation2 + $0x8] sm:$0xff]
      %v297 = vld [vmem:[%s279] sm:$0x1f]
      %v298 = vld [vmem:[%s286] sm:$0xff]
      %v299 = vld [vmem:[%s286 + $0x8] sm:$0xff]
      %v300 = vld [vmem:[%s286 + $0x10] sm:$0xff]
      %v301 = vld [vmem:[%s286 + $0x18] sm:$0xff]
      %v302 = vld [vmem:[%s286 + $0x20] sm:$0xff]
      %v303 = vld [vmem:[%s286 + $0x28] sm:$0xff]
      %v304 = vld [vmem:[%s286 + $0x30] sm:$0xff]
      %v305 = vld [vmem:[%s286 + $0x38] sm:$0xff]
      %v306 = vld [vmem:[%s286 + $0x40] sm:$0xff]
      %v307 = vld [vmem:[%s286 + $0x48] sm:$0xff]
      %v308 = vld [vmem:[%s286 + $0x50] sm:$0xff]
      %v309 = vld [vmem:[%s286 + $0x58] sm:$0xff]
      %v310 = vld [vmem:[%s286 + $0x60] sm:$0xff]
      %v311 = vld [vmem:[%s286 + $0x68] sm:$0xff]
      %v312 = vld [vmem:[%s286 + $0x70] sm:$0xff]
      %v313 = vld [vmem:[%s286 + $0x78] sm:$0xff]
      %v314 = vld [vmem:[%s286 + $0x80] sm:$0xff]
      %v315 = vld [vmem:[%s286 + $0x88] sm:$0xff]
      %v316 = vld [vmem:[%s286 + $0x90] sm:$0xff]
      %v317 = vld [vmem:[%s286 + $0x98] sm:$0xff]
      %v318 = vld [vmem:[%s286 + $0xa0] sm:$0xff]
      %v319 = vld [vmem:[%s286 + $0xa8] sm:$0xff]
      %v320 = vld [vmem:[%s286 + $0xb0] sm:$0xff]
      %v321 = vld [vmem:[%s286 + $0xb8] sm:$0xff]
      %v322 = vld [vmem:[%s286 + $0xc0] sm:$0xff]
      %v323 = vld [vmem:[%s286 + $0xc8] sm:$0xff]
      %v324 = vld [vmem:[%s286 + $0xd0] sm:$0xff]
      %v325 = vld [vmem:[%s286 + $0xd8] sm:$0xff]
      %v326 = vld [vmem:[%s286 + $0xe0] sm:$0xff]
      %v327 = vld [vmem:[%s286 + $0xe8] sm:$0xff]
      %v328 = vld [vmem:[%s286 + $0xf0] sm:$0xff]
      %v329 = vld [vmem:[%s286 + $0xf8] sm:$0xff]
      %v330 = vld [vmem:[%s286 + $0x100] sm:$0xff]
      %v331 = vld [vmem:[%s286 + $0x108] sm:$0xff]
      %v332 = vld [vmem:[%s286 + $0x110] sm:$0xff]
      %v333 = vld [vmem:[%s286 + $0x118] sm:$0xff]
      %v334 = vld [vmem:[%s286 + $0x120] sm:$0xff]
      %v335 = vld [vmem:[%s286 + $0x128] sm:$0xff]
      %v336 = vld [vmem:[%s286 + $0x130] sm:$0xff]
      %v337 = vld [vmem:[%s286 + $0x138] sm:$0xff]
      %v338 = vld [vmem:[%s286 + $0x140] sm:$0xff]
      %v339 = vld [vmem:[%s286 + $0x148] sm:$0xff]
      %v340 = vld [vmem:[%s286 + $0x150] sm:$0xff]
      %v341 = vld [vmem:[%s286 + $0x158] sm:$0xff]
      %v342 = vld [vmem:[%s286 + $0x160] sm:$0xff]
      %v343 = vld [vmem:[%s286 + $0x168] sm:$0xff]
      %v344 = vld [vmem:[%s286 + $0x170] sm:$0xff]
      %v345 = vld [vmem:[%s286 + $0x178] sm:$0xff]
      %v346 = vld [vmem:[%s286 + $0x180] sm:$0xff]
      %v347 = vld [vmem:[%s286 + $0x188] sm:$0xff]
      %v348 = vld [vmem:[%s286 + $0x190] sm:$0xff]
      %v349 = vld [vmem:[%s286 + $0x198] sm:$0xff]
      %v350 = vld [vmem:[%s286 + $0x1a0] sm:$0xff]
      %v351 = vld [vmem:[%s286 + $0x1a8] sm:$0xff]
      %v352 = vld [vmem:[%s286 + $0x1b0] sm:$0xff]
      %v353 = vld [vmem:[%s286 + $0x1b8] sm:$0xff]
      %v354 = vld [vmem:[%s286 + $0x1c0] sm:$0xff]
      %v355 = vld [vmem:[%s286 + $0x1c8] sm:$0xff]
      %v356 = vld [vmem:[%s286 + $0x1d0] sm:$0xff]
      %v357 = vld [vmem:[%s286 + $0x1d8] sm:$0xff]
      %v358 = vld [vmem:[%s286 + $0x1e0] sm:$0xff]
      %v359 = vld [vmem:[%s286 + $0x1e8] sm:$0xff]
      %v360 = vld [vmem:[%s286 + $0x1f0] sm:$0xff]
      %v361 = vld [vmem:[%s286 + $0x1f8] sm:$0xff]
      %v362 = vld [vmem:[%s286 + $0x200] sm:$0xff]
      %v363 = vld [vmem:[%s286 + $0x208] sm:$0xff]
      %v364 = vld [vmem:[%s286 + $0x210] sm:$0xff]
      %v365 = vld [vmem:[%s286 + $0x218] sm:$0xff]
      %v366 = vld [vmem:[%s286 + $0x220] sm:$0xff]
      %v367 = vld [vmem:[%s286 + $0x228] sm:$0xff]
      %v368 = vld [vmem:[%s286 + $0x230] sm:$0xff]
      %v369 = vld [vmem:[%s286 + $0x238] sm:$0xff]
      %v370 = vld [vmem:[%s286 + $0x240] sm:$0xff]
      %v371 = vld [vmem:[%s286 + $0x248] sm:$0xff]
      %v372 = vld [vmem:[%s286 + $0x250] sm:$0xff]
      %v373 = vld [vmem:[%s286 + $0x258] sm:$0xff]
      %v374 = vld [vmem:[%s286 + $0x260] sm:$0xff]
      %v375 = vld [vmem:[%s286 + $0x268] sm:$0xff]
      %v376 = vld [vmem:[%s286 + $0x270] sm:$0xff]
      %v377 = vld [vmem:[%s286 + $0x278] sm:$0xff]
      %v378 = vld [vmem:[%s286 + $0x280] sm:$0xff]
      %v379 = vld [vmem:[%s286 + $0x288] sm:$0xff]
      %v380 = vld [vmem:[%s286 + $0x290] sm:$0xff]
      %v381 = vld [vmem:[%s286 + $0x298] sm:$0xff]
      %v382 = vld [vmem:[%s286 + $0x2a0] sm:$0xff]
      %v383 = vld [vmem:[%s286 + $0x2a8] sm:$0xff]
      %v384 = vld [vmem:[%s286 + $0x2b0] sm:$0xff]
      %v385 = vld [vmem:[%s286 + $0x2b8] sm:$0xff]
      %v386 = vld [vmem:[%s286 + $0x2c0] sm:$0xff]
      %v387 = vld [vmem:[%s286 + $0x2c8] sm:$0xff]
      %v388 = vld [vmem:[%s286 + $0x2d0] sm:$0xff]
      %v389 = vld [vmem:[%s286 + $0x2d8] sm:$0xff]
      %v390 = vld [vmem:[%s286 + $0x2e0] sm:$0xff]
      %v391 = vld [vmem:[%s286 + $0x2e8] sm:$0xff]
      %v392 = vld [vmem:[%s286 + $0x2f0] sm:$0xff]
      %v393 = vld [vmem:[%s286 + $0x2f8] sm:$0xff]
      %v394 = vld [vmem:[%s286 + $0x300] sm:$0xff]
      %v395 = vld [vmem:[%s286 + $0x308] sm:$0xff]
      %v396 = vld [vmem:[%s286 + $0x310] sm:$0xff]
      %v397 = vld [vmem:[%s286 + $0x318] sm:$0xff]
      %v398 = vld [vmem:[%s286 + $0x320] sm:$0xff]
      %v399 = vld [vmem:[%s286 + $0x328] sm:$0xff]
      %v400 = vld [vmem:[%s286 + $0x330] sm:$0xff]
      %v401 = vld [vmem:[%s286 + $0x338] sm:$0xff]
      %v402 = vld [vmem:[%s286 + $0x340] sm:$0xff]
      %v403 = vld [vmem:[%s286 + $0x348] sm:$0xff]
      %v404 = vld [vmem:[%s286 + $0x350] sm:$0xff]
      %v405 = vld [vmem:[%s286 + $0x358] sm:$0xff]
      %v406 = vld [vmem:[%s286 + $0x360] sm:$0xff]
      %v407 = vld [vmem:[%s286 + $0x368] sm:$0xff]
      %v408 = vld [vmem:[%s286 + $0x370] sm:$0xff]
      %v409 = vld [vmem:[%s286 + $0x378] sm:$0xff]
      %v410 = vld [vmem:[%s286 + $0x380] sm:$0xff]
      %v411 = vld [vmem:[%s286 + $0x388] sm:$0xff]
      %v412 = vld [vmem:[%s286 + $0x390] sm:$0xff]
      %v413 = vld [vmem:[%s286 + $0x398] sm:$0xff]
      %v414 = vld [vmem:[%s286 + $0x3a0] sm:$0xff]
      %v415 = vld [vmem:[%s286 + $0x3a8] sm:$0xff]
      %v416 = vld [vmem:[%s286 + $0x3b0] sm:$0xff]
      %v417 = vld [vmem:[%s286 + $0x3b8] sm:$0xff]
      %v418 = vld [vmem:[%s286 + $0x3c0] sm:$0xff]
      %v419 = vld [vmem:[%s286 + $0x3c8] sm:$0xff]
      %v420 = vld [vmem:[%s286 + $0x3d0] sm:$0xff]
      %v421 = vld [vmem:[%s286 + $0x3d8] sm:$0xff]
      %v422 = vld [vmem:[%s286 + $0x3e0] sm:$0xff]
      %v423 = vld [vmem:[%s286 + $0x3e8] sm:$0xff]
      %v424 = vld [vmem:[%s286 + $0x3f0] sm:$0xff]
      %v425 = vld [vmem:[%s286 + $0x3f8] sm:$0xff]
      %v426 = vld [vmem:[%s286 + $0x400] sm:$0xff]
      %v427 = vld [vmem:[%s286 + $0x408] sm:$0xff]
      %v428 = vld [vmem:[%s286 + $0x410] sm:$0xff]
      %v429 = vld [vmem:[%s286 + $0x418] sm:$0xff]
      %v430 = vld [vmem:[%s286 + $0x420] sm:$0xff]
      %v431 = vld [vmem:[%s286 + $0x428] sm:$0xff]
      %v432 = vld [vmem:[%s286 + $0x430] sm:$0xff]
      %v433 = vld [vmem:[%s286 + $0x438] sm:$0xff]
      %v434 = vld [vmem:[%s286 + $0x440] sm:$0xff]
      %v435 = vld [vmem:[%s286 + $0x448] sm:$0xff]
      %v436 = vld [vmem:[%s286 + $0x450] sm:$0xff]
      %v437 = vld [vmem:[%s286 + $0x458] sm:$0xff]
      %v438 = vld [vmem:[%s286 + $0x460] sm:$0xff]
      %v439 = vld [vmem:[%s286 + $0x468] sm:$0xff]
      %v440 = vld [vmem:[%s286 + $0x470] sm:$0xff]
      %v441 = vld [vmem:[%s286 + $0x478] sm:$0xff]
      %v442 = vld [vmem:[%s286 + $0x480] sm:$0xff]
      %v443 = vld [vmem:[%s286 + $0x488] sm:$0xff]
      %v444 = vld [vmem:[%s286 + $0x490] sm:$0xff]
      %v445 = vld [vmem:[%s286 + $0x498] sm:$0xff]
      %v446 = vld [vmem:[%s286 + $0x4a0] sm:$0xff]
      %v447 = vld [vmem:[%s286 + $0x4a8] sm:$0xff]
      %v448 = vld [vmem:[%s286 + $0x4b0] sm:$0xff]
      %v449 = vld [vmem:[%s286 + $0x4b8] sm:$0xff]
      %v450 = vld [vmem:[%s286 + $0x4c0] sm:$0xff]
      %v451 = vld [vmem:[%s286 + $0x4c8] sm:$0xff]
      %v452 = vld [vmem:[%s286 + $0x4d0] sm:$0xff]
      %v453 = vld [vmem:[%s286 + $0x4d8] sm:$0xff]
      %v454 = vld [vmem:[%s286 + $0x4e0] sm:$0xff]
      %v455 = vld [vmem:[%s286 + $0x4e8] sm:$0xff]
      %v456 = vld [vmem:[%s286 + $0x4f0] sm:$0xff]
      %v457 = vld [vmem:[%s286 + $0x4f8] sm:$0xff]
      %v458 = vld [vmem:[%s286 + $0x500] sm:$0xff]
      %v459 = vld [vmem:[%s286 + $0x508] sm:$0xff]
      %v460 = vld [vmem:[%s286 + $0x510] sm:$0xff]
      %v461 = vld [vmem:[%s286 + $0x518] sm:$0xff]
      %v462 = vld [vmem:[%s286 + $0x520] sm:$0xff]
      %v463 = vld [vmem:[%s286 + $0x528] sm:$0xff]
      %v464 = vld [vmem:[%s286 + $0x530] sm:$0xff]
      %v465 = vld [vmem:[%s286 + $0x538] sm:$0xff]
      %v466 = vld [vmem:[%s286 + $0x540] sm:$0xff]
      %v467 = vld [vmem:[%s286 + $0x548] sm:$0xff]
      %v468 = vld [vmem:[%s286 + $0x550] sm:$0xff]
      %v469 = vld [vmem:[%s286 + $0x558] sm:$0xff]
      %v470 = vld [vmem:[%s286 + $0x560] sm:$0xff]
      %v471 = vld [vmem:[%s286 + $0x568] sm:$0xff]
      %v472 = vld [vmem:[%s286 + $0x570] sm:$0xff]
      %v473 = vld [vmem:[%s286 + $0x578] sm:$0xff]
      %v474 = vld [vmem:[%s286 + $0x580] sm:$0xff]
      %v475 = vld [vmem:[%s286 + $0x588] sm:$0xff]
      %v476 = vld [vmem:[%s286 + $0x590] sm:$0xff]
      %v477 = vld [vmem:[%s286 + $0x598] sm:$0xff]
      %v478 = vld [vmem:[%s286 + $0x5a0] sm:$0xff]
      %v479 = vld [vmem:[%s286 + $0x5a8] sm:$0xff]
      %v480 = vld [vmem:[%s286 + $0x5b0] sm:$0xff]
      %v481 = vld [vmem:[%s286 + $0x5b8] sm:$0xff]
      %v482 = vld [vmem:[%s286 + $0x5c0] sm:$0xff]
      %v483 = vld [vmem:[%s286 + $0x5c8] sm:$0xff]
      %v484 = vld [vmem:[%s286 + $0x5d0] sm:$0xff]
      %v485 = vld [vmem:[%s286 + $0x5d8] sm:$0xff]
      %v486 = vld [vmem:[%s286 + $0x5e0] sm:$0xff]
      %v487 = vld [vmem:[%s286 + $0x5e8] sm:$0xff]
      %v488 = vld [vmem:[%s286 + $0x5f0] sm:$0xff]
      %v489 = vld [vmem:[%s286 + $0x5f8] sm:$0xff]
      %v490 = vld [vmem:[%s286 + $0x600] sm:$0xff]
      %v491 = vld [vmem:[%s286 + $0x608] sm:$0xff]
      %v492 = vld [vmem:[%s286 + $0x610] sm:$0xff]
      %v493 = vld [vmem:[%s286 + $0x618] sm:$0xff]
      %v494 = vld [vmem:[%s286 + $0x620] sm:$0xff]
      %v495 = vld [vmem:[%s286 + $0x628] sm:$0xff]
      %v496 = vld [vmem:[%s286 + $0x630] sm:$0xff]
      %v497 = vld [vmem:[%s286 + $0x638] sm:$0xff]
      %v498 = vld [vmem:[%s286 + $0x640] sm:$0xff]
      %v499 = vld [vmem:[%s286 + $0x648] sm:$0xff]
      %v500 = vld [vmem:[%s286 + $0x650] sm:$0xff]
      %v501 = vld [vmem:[%s286 + $0x658] sm:$0xff]
      %v502 = vld [vmem:[%s286 + $0x660] sm:$0xff]
      %v503 = vld [vmem:[%s286 + $0x668] sm:$0xff]
      %v504 = vld [vmem:[%s286 + $0x670] sm:$0xff]
      %v505 = vld [vmem:[%s286 + $0x678] sm:$0xff]
      %v506 = vld [vmem:[%s286 + $0x680] sm:$0xff]
      %v507 = vld [vmem:[%s286 + $0x688] sm:$0xff]
      %v508 = vld [vmem:[%s286 + $0x690] sm:$0xff]
      %v509 = vld [vmem:[%s286 + $0x698] sm:$0xff]
      %v510 = vld [vmem:[%s286 + $0x6a0] sm:$0xff]
      %v511 = vld [vmem:[%s286 + $0x6a8] sm:$0xff]
      %v512 = vld [vmem:[%s286 + $0x6b0] sm:$0xff]
      %v513 = vld [vmem:[%s286 + $0x6b8] sm:$0xff]
      %v514 = vld [vmem:[%s286 + $0x6c0] sm:$0xff]
      %v515 = vld [vmem:[%s286 + $0x6c8] sm:$0xff]
      %v516 = vld [vmem:[%s286 + $0x6d0] sm:$0xff]
      %v517 = vld [vmem:[%s286 + $0x6d8] sm:$0xff]
      %v518 = vld [vmem:[%s286 + $0x6e0] sm:$0xff]
      %v519 = vld [vmem:[%s286 + $0x6e8] sm:$0xff]
      %v520 = vld [vmem:[%s286 + $0x6f0] sm:$0xff]
      %v521 = vld [vmem:[%s286 + $0x6f8] sm:$0xff]
      %v522 = vld [vmem:[%s286 + $0x700] sm:$0xff]
      %v523 = vld [vmem:[%s286 + $0x708] sm:$0xff]
      %v524 = vld [vmem:[%s286 + $0x710] sm:$0xff]
      %v525 = vld [vmem:[%s286 + $0x718] sm:$0xff]
      %v526 = vld [vmem:[%s286 + $0x720] sm:$0xff]
      %v527 = vld [vmem:[%s286 + $0x728] sm:$0xff]
      %v528 = vld [vmem:[%s286 + $0x730] sm:$0xff]
      %v529 = vld [vmem:[%s286 + $0x738] sm:$0xff]
      %v530 = vld [vmem:[%s286 + $0x740] sm:$0xff]
      %v531 = vld [vmem:[%s286 + $0x748] sm:$0xff]
      %v532 = vld [vmem:[%s286 + $0x750] sm:$0xff]
      %v533 = vld [vmem:[%s286 + $0x758] sm:$0xff]
      %v534 = vld [vmem:[%s286 + $0x760] sm:$0xff]
      %v535 = vld [vmem:[%s286 + $0x768] sm:$0xff]
      %v536 = vld [vmem:[%s286 + $0x770] sm:$0xff]
      %v537 = vld [vmem:[%s286 + $0x778] sm:$0xff]
      %v538 = vld [vmem:[%s286 + $0x780] sm:$0xff]
      %v539 = vld [vmem:[%s286 + $0x788] sm:$0xff]
      %v540 = vld [vmem:[%s286 + $0x790] sm:$0xff]
      %v541 = vld [vmem:[%s286 + $0x798] sm:$0xff]
      %v542 = vld [vmem:[%s286 + $0x7a0] sm:$0xff]
      %v543 = vld [vmem:[%s286 + $0x7a8] sm:$0xff]
      %v544 = vld [vmem:[%s286 + $0x7b0] sm:$0xff]
      %v545 = vld [vmem:[%s286 + $0x7b8] sm:$0xff]
      %v546 = vld [vmem:[%s286 + $0x7c0] sm:$0xff]
      %v547 = vld [vmem:[%s286 + $0x7c8] sm:$0xff]
      %v548 = vld [vmem:[%s286 + $0x7d0] sm:$0xff]
      %v549 = vld [vmem:[%s286 + $0x7d8] sm:$0xff]
      %v550 = vld [vmem:[%s286 + $0x7e0] sm:$0xff]
      %v551 = vld [vmem:[%s286 + $0x7e8] sm:$0xff]
      %v552 = vld [vmem:[%s286 + $0x7f0] sm:$0xff]
      %v553 = vld [vmem:[%s286 + $0x7f8] sm:$0xff]
      %v554 = vld [vmem:[%s286 + $0x800] sm:$0xff]
      %v555 = vld [vmem:[%s286 + $0x808] sm:$0xff]
      %v556 = vld [vmem:[%s286 + $0x810] sm:$0xff]
      %v557 = vld [vmem:[%s286 + $0x818] sm:$0xff]
      %v558 = vld [vmem:[%s286 + $0x820] sm:$0xff]
      %v559 = vld [vmem:[%s286 + $0x828] sm:$0xff]
      %v560 = vld [vmem:[%s286 + $0x830] sm:$0xff]
      %v561 = vld [vmem:[%s286 + $0x838] sm:$0xff]
      %v562 = vld [vmem:[%s286 + $0x840] sm:$0xff]
      %v563 = vld [vmem:[%s286 + $0x848] sm:$0xff]
      %v564 = vld [vmem:[%s286 + $0x850] sm:$0xff]
      %v565 = vld [vmem:[%s286 + $0x858] sm:$0xff]
      %v566 = vld [vmem:[%s286 + $0x860] sm:$0xff]
      %v567 = vld [vmem:[%s286 + $0x868] sm:$0xff]
      %v568 = vld [vmem:[%s286 + $0x870] sm:$0xff]
      %v569 = vld [vmem:[%s286 + $0x878] sm:$0xff]
      %v570 = vld [vmem:[%s286 + $0x880] sm:$0xff]
      %v571 = vld [vmem:[%s286 + $0x888] sm:$0xff]
      %v572 = vld [vmem:[%s286 + $0x890] sm:$0xff]
      %v573 = vld [vmem:[%s286 + $0x898] sm:$0xff]
      %v574 = vld [vmem:[%s286 + $0x8a0] sm:$0xff]
      %v575 = vld [vmem:[%s286 + $0x8a8] sm:$0xff]
      %v576 = vld [vmem:[%s286 + $0x8b0] sm:$0xff]
      %v577 = vld [vmem:[%s286 + $0x8b8] sm:$0xff]
      %v578 = vld [vmem:[%s286 + $0x8c0] sm:$0xff]
      %v579 = vld [vmem:[%s286 + $0x8c8] sm:$0xff]
      %v580 = vld [vmem:[%s286 + $0x8d0] sm:$0xff]
      %v581 = vld [vmem:[%s286 + $0x8d8] sm:$0xff]
      %v582 = vld [vmem:[%s286 + $0x8e0] sm:$0xff]
      %v583 = vld [vmem:[%s286 + $0x8e8] sm:$0xff]
      %v584 = vld [vmem:[%s286 + $0x8f0] sm:$0xff]
      %v585 = vld [vmem:[%s286 + $0x8f8] sm:$0xff]
      %v586 = vld [vmem:[%s286 + $0x900] sm:$0xff]
      %v587 = vld [vmem:[%s286 + $0x908] sm:$0xff]
      %v588 = vld [vmem:[%s286 + $0x910] sm:$0xff]
      %v589 = vld [vmem:[%s286 + $0x918] sm:$0xff]
      %v590 = vld [vmem:[%s286 + $0x920] sm:$0xff]
      %v591 = vld [vmem:[%s286 + $0x928] sm:$0xff]
      %v592 = vld [vmem:[%s286 + $0x930] sm:$0xff]
      %v593 = vld [vmem:[%s286 + $0x938] sm:$0xff]
      %v594 = vld [vmem:[%s286 + $0x940] sm:$0xff]
      %v595 = vld [vmem:[%s286 + $0x948] sm:$0xff]
      %v596 = vld [vmem:[%s286 + $0x950] sm:$0xff]
      %v597 = vld [vmem:[%s286 + $0x958] sm:$0xff]
      %v598 = vld [vmem:[%s286 + $0x960] sm:$0xff]
      %v599 = vld [vmem:[%s286 + $0x968] sm:$0xff]
      %v600 = vld [vmem:[%s286 + $0x970] sm:$0xff]
      %v601 = vld [vmem:[%s286 + $0x978] sm:$0xff]
      %v602 = vld [vmem:[%s286 + $0x980] sm:$0xff]
      %v603 = vld [vmem:[%s286 + $0x988] sm:$0xff]
      %v604 = vld [vmem:[%s286 + $0x990] sm:$0xff]
      %v605 = vld [vmem:[%s286 + $0x998] sm:$0xff]
      %v606 = vld [vmem:[%s286 + $0x9a0] sm:$0xff]
      %v607 = vld [vmem:[%s286 + $0x9a8] sm:$0xff]
      %v608 = vld [vmem:[%s286 + $0x9b0] sm:$0xff]
      %v609 = vld [vmem:[%s286 + $0x9b8] sm:$0xff]
      %v610 = vld [vmem:[%s286 + $0x9c0] sm:$0xff]
      %v611 = vld [vmem:[%s286 + $0x9c8] sm:$0xff]
      %v612 = vld [vmem:[%s286 + $0x9d0] sm:$0xff]
      %v613 = vld [vmem:[%s286 + $0x9d8] sm:$0xff]
      %v614 = vld [vmem:[%s286 + $0x9e0] sm:$0xff]
      %v615 = vld [vmem:[%s286 + $0x9e8] sm:$0xff]
      %v616 = vld [vmem:[%s286 + $0x9f0] sm:$0xff]
      %v617 = vld [vmem:[%s286 + $0x9f8] sm:$0xff]
      %v619 = vcombine.high %v297, %v297
      %v621 = vunpack.c.l.s4 1966171168
      %v622 = vunpack.c.0.s8 %v621
      %v623 = vlaneseq
      %v624 = vshrl.u32 %v623, 7
      %v625 = vsub.s32 %v622, %v624
      %v626 = vrot.slane %v297, %v625
      %v628 = vunpack.c.l.s4 1966171168
      %v629 = vunpack.c.0.s8 %v628
      %v630 = vlaneseq
      %v631 = vshrl.u32 %v630, 7
      %v632 = vsub.s32 %v629, %v631
      %v633 = vrot.slane %v619, %v632
      %v634 = vcombine.high %v626, %v626
      %v636 = vunpack.c.l.s4 1966171168
      %v637 = vunpack.c.0.s8 %v636
      %v638 = vlaneseq
      %v639 = vshrl.u32 %v638, 7
      %v640 = vsub.s32 %v637, %v639
      %v641 = vrot.slane %v626, %v640
      %v643 = vunpack.c.l.s4 1966171168
      %v644 = vunpack.c.0.s8 %v643
      %v645 = vlaneseq
      %v646 = vshrl.u32 %v645, 7
      %v647 = vsub.s32 %v644, %v646
      %v648 = vrot.slane %v633, %v647
      %v650 = vunpack.c.l.s4 1966171168
      %v651 = vunpack.c.0.s8 %v650
      %v652 = vlaneseq
      %v653 = vshrl.u32 %v652, 7
      %v654 = vsub.s32 %v651, %v653
      %v655 = vrot.slane %v634, %v654
      %v656 = vcombine.high %v641, %v641
      %v657 = vcombine.high %v655, %v655
      %v983 = vunpack.c.l.b16 %v298
      %v984 = vunpack.c.h.b16 %v298
      %v985 = vunpack.c.l.b16 %v299
      %v986 = vunpack.c.h.b16 %v299
      %v987 = vunpack.c.l.b16 %v300
      %v988 = vunpack.c.h.b16 %v300
      %v989 = vunpack.c.l.b16 %v301
      %v990 = vunpack.c.h.b16 %v301
      %v991 = vunpack.c.l.b16 %v302
      %v992 = vunpack.c.h.b16 %v302
      %v993 = vunpack.c.l.b16 %v303
      %v994 = vunpack.c.h.b16 %v303
      %v995 = vunpack.c.l.b16 %v304
      %v996 = vunpack.c.h.b16 %v304
      %v997 = vunpack.c.l.b16 %v305
      %v998 = vunpack.c.h.b16 %v305
      %v999 = vunpack.c.l.b16 %v306
      %v1000 = vunpack.c.h.b16 %v306
      %v1001 = vunpack.c.l.b16 %v307
      %v1002 = vunpack.c.h.b16 %v307
      %v1003 = vunpack.c.l.b16 %v308
      %v1004 = vunpack.c.h.b16 %v308
      %v1005 = vunpack.c.l.b16 %v309
      %v1006 = vunpack.c.h.b16 %v309
      %v1007 = vunpack.c.l.b16 %v310
      %v1008 = vunpack.c.h.b16 %v310
      %v1009 = vunpack.c.l.b16 %v311
      %v1010 = vunpack.c.h.b16 %v311
      %v1011 = vunpack.c.l.b16 %v312
      %v1012 = vunpack.c.h.b16 %v312
      %v1013 = vunpack.c.l.b16 %v313
      %v1014 = vunpack.c.h.b16 %v313
      %v1015 = vunpack.c.l.b16 %v314
      %v1016 = vunpack.c.h.b16 %v314
      %v1017 = vunpack.c.l.b16 %v315
      %v1018 = vunpack.c.h.b16 %v315
      %v1019 = vunpack.c.l.b16 %v316
      %v1020 = vunpack.c.h.b16 %v316
      %v1021 = vunpack.c.l.b16 %v317
      %v1022 = vunpack.c.h.b16 %v317
      %v1023 = vunpack.c.l.b16 %v318
      %v1024 = vunpack.c.h.b16 %v318
      %v1025 = vunpack.c.l.b16 %v319
      %v1026 = vunpack.c.h.b16 %v319
      %v1027 = vunpack.c.l.b16 %v320
      %v1028 = vunpack.c.h.b16 %v320
      %v1029 = vunpack.c.l.b16 %v321
      %v1030 = vunpack.c.h.b16 %v321
      %v1031 = vunpack.c.l.b16 %v322
      %v1032 = vunpack.c.h.b16 %v322
      %v1033 = vunpack.c.l.b16 %v323
      %v1034 = vunpack.c.h.b16 %v323
      %v1035 = vunpack.c.l.b16 %v324
      %v1036 = vunpack.c.h.b16 %v324
      %v1037 = vunpack.c.l.b16 %v325
      %v1038 = vunpack.c.h.b16 %v325
      %v1039 = vunpack.c.l.b16 %v326
      %v1040 = vunpack.c.h.b16 %v326
      %v1041 = vunpack.c.l.b16 %v327
      %v1042 = vunpack.c.h.b16 %v327
      %v1043 = vunpack.c.l.b16 %v328
      %v1044 = vunpack.c.h.b16 %v328
      %v1045 = vunpack.c.l.b16 %v329
      %v1046 = vunpack.c.h.b16 %v329
      %v1047 = vunpack.c.l.b16 %v330
      %v1048 = vunpack.c.h.b16 %v330
      %v1049 = vunpack.c.l.b16 %v331
      %v1050 = vunpack.c.h.b16 %v331
      %v1051 = vunpack.c.l.b16 %v332
      %v1052 = vunpack.c.h.b16 %v332
      %v1053 = vunpack.c.l.b16 %v333
      %v1054 = vunpack.c.h.b16 %v333
      %v1055 = vunpack.c.l.b16 %v334
      %v1056 = vunpack.c.h.b16 %v334
      %v1057 = vunpack.c.l.b16 %v335
      %v1058 = vunpack.c.h.b16 %v335
      %v1059 = vunpack.c.l.b16 %v336
      %v1060 = vunpack.c.h.b16 %v336
      %v1061 = vunpack.c.l.b16 %v337
      %v1062 = vunpack.c.h.b16 %v337
      %v1063 = vunpack.c.l.b16 %v338
      %v1064 = vunpack.c.h.b16 %v338
      %v1065 = vunpack.c.l.b16 %v339
      %v1066 = vunpack.c.h.b16 %v339
      %v1067 = vunpack.c.l.b16 %v340
      %v1068 = vunpack.c.h.b16 %v340
      %v1069 = vunpack.c.l.b16 %v341
      %v1070 = vunpack.c.h.b16 %v341
      %v1071 = vunpack.c.l.b16 %v342
      %v1072 = vunpack.c.h.b16 %v342
      %v1073 = vunpack.c.l.b16 %v343
      %v1074 = vunpack.c.h.b16 %v343
      %v1075 = vunpack.c.l.b16 %v344
      %v1076 = vunpack.c.h.b16 %v344
      %v1077 = vunpack.c.l.b16 %v345
      %v1078 = vunpack.c.h.b16 %v345
      %v1079 = vunpack.c.l.b16 %v346
      %v1080 = vunpack.c.h.b16 %v346
      %v1081 = vunpack.c.l.b16 %v347
      %v1082 = vunpack.c.h.b16 %v347
      %v1083 = vunpack.c.l.b16 %v348
      %v1084 = vunpack.c.h.b16 %v348
      %v1085 = vunpack.c.l.b16 %v349
      %v1086 = vunpack.c.h.b16 %v349
      %v1087 = vunpack.c.l.b16 %v350
      %v1088 = vunpack.c.h.b16 %v350
      %v1089 = vunpack.c.l.b16 %v351
      %v1090 = vunpack.c.h.b16 %v351
      %v1091 = vunpack.c.l.b16 %v352
      %v1092 = vunpack.c.h.b16 %v352
      %v1093 = vunpack.c.l.b16 %v353
      %v1094 = vunpack.c.h.b16 %v353
      %v1095 = vunpack.c.l.b16 %v354
      %v1096 = vunpack.c.h.b16 %v354
      %v1097 = vunpack.c.l.b16 %v355
      %v1098 = vunpack.c.h.b16 %v355
      %v1099 = vunpack.c.l.b16 %v356
      %v1100 = vunpack.c.h.b16 %v356
      %v1101 = vunpack.c.l.b16 %v357
      %v1102 = vunpack.c.h.b16 %v357
      %v1103 = vunpack.c.l.b16 %v358
      %v1104 = vunpack.c.h.b16 %v358
      %v1105 = vunpack.c.l.b16 %v359
      %v1106 = vunpack.c.h.b16 %v359
      %v1107 = vunpack.c.l.b16 %v360
      %v1108 = vunpack.c.h.b16 %v360
      %v1109 = vunpack.c.l.b16 %v361
      %v1110 = vunpack.c.h.b16 %v361
      %v1111 = vunpack.c.l.b16 %v362
      %v1112 = vunpack.c.h.b16 %v362
      %v1113 = vunpack.c.l.b16 %v363
      %v1114 = vunpack.c.h.b16 %v363
      %v1115 = vunpack.c.l.b16 %v364
      %v1116 = vunpack.c.h.b16 %v364
      %v1117 = vunpack.c.l.b16 %v365
      %v1118 = vunpack.c.h.b16 %v365
      %v1119 = vunpack.c.l.b16 %v366
      %v1120 = vunpack.c.h.b16 %v366
      %v1121 = vunpack.c.l.b16 %v367
      %v1122 = vunpack.c.h.b16 %v367
      %v1123 = vunpack.c.l.b16 %v368
      %v1124 = vunpack.c.h.b16 %v368
      %v1125 = vunpack.c.l.b16 %v369
      %v1126 = vunpack.c.h.b16 %v369
      %v1127 = vunpack.c.l.b16 %v370
      %v1128 = vunpack.c.h.b16 %v370
      %v1129 = vunpack.c.l.b16 %v371
      %v1130 = vunpack.c.h.b16 %v371
      %v1131 = vunpack.c.l.b16 %v372
      %v1132 = vunpack.c.h.b16 %v372
      %v1133 = vunpack.c.l.b16 %v373
      %v1134 = vunpack.c.h.b16 %v373
      %v1135 = vunpack.c.l.b16 %v374
      %v1136 = vunpack.c.h.b16 %v374
      %v1137 = vunpack.c.l.b16 %v375
      %v1138 = vunpack.c.h.b16 %v375
      %v1139 = vunpack.c.l.b16 %v376
      %v1140 = vunpack.c.h.b16 %v376
      %v1141 = vunpack.c.l.b16 %v377
      %v1142 = vunpack.c.h.b16 %v377
      %v1143 = vunpack.c.l.b16 %v378
      %v1144 = vunpack.c.h.b16 %v378
      %v1145 = vunpack.c.l.b16 %v379
      %v1146 = vunpack.c.h.b16 %v379
      %v1147 = vunpack.c.l.b16 %v380
      %v1148 = vunpack.c.h.b16 %v380
      %v1149 = vunpack.c.l.b16 %v381
      %v1150 = vunpack.c.h.b16 %v381
      %v1151 = vunpack.c.l.b16 %v382
      %v1152 = vunpack.c.h.b16 %v382
      %v1153 = vunpack.c.l.b16 %v383
      %v1154 = vunpack.c.h.b16 %v383
      %v1155 = vunpack.c.l.b16 %v384
      %v1156 = vunpack.c.h.b16 %v384
      %v1157 = vunpack.c.l.b16 %v385
      %v1158 = vunpack.c.h.b16 %v385
      %v1159 = vunpack.c.l.b16 %v386
      %v1160 = vunpack.c.h.b16 %v386
      %v1161 = vunpack.c.l.b16 %v387
      %v1162 = vunpack.c.h.b16 %v387
      %v1163 = vunpack.c.l.b16 %v388
      %v1164 = vunpack.c.h.b16 %v388
      %v1165 = vunpack.c.l.b16 %v389
      %v1166 = vunpack.c.h.b16 %v389
      %v1167 = vunpack.c.l.b16 %v390
      %v1168 = vunpack.c.h.b16 %v390
      %v1169 = vunpack.c.l.b16 %v391
      %v1170 = vunpack.c.h.b16 %v391
      %v1171 = vunpack.c.l.b16 %v392
      %v1172 = vunpack.c.h.b16 %v392
      %v1173 = vunpack.c.l.b16 %v393
      %v1174 = vunpack.c.h.b16 %v393
      %v1175 = vunpack.c.l.b16 %v394
      %v1176 = vunpack.c.h.b16 %v394
      %v1177 = vunpack.c.l.b16 %v395
      %v1178 = vunpack.c.h.b16 %v395
      %v1179 = vunpack.c.l.b16 %v396
      %v1180 = vunpack.c.h.b16 %v396
      %v1181 = vunpack.c.l.b16 %v397
      %v1182 = vunpack.c.h.b16 %v397
      %v1183 = vunpack.c.l.b16 %v398
      %v1184 = vunpack.c.h.b16 %v398
      %v1185 = vunpack.c.l.b16 %v399
      %v1186 = vunpack.c.h.b16 %v399
      %v1187 = vunpack.c.l.b16 %v400
      %v1188 = vunpack.c.h.b16 %v400
      %v1189 = vunpack.c.l.b16 %v401
      %v1190 = vunpack.c.h.b16 %v401
      %v1191 = vunpack.c.l.b16 %v402
      %v1192 = vunpack.c.h.b16 %v402
      %v1193 = vunpack.c.l.b16 %v403
      %v1194 = vunpack.c.h.b16 %v403
      %v1195 = vunpack.c.l.b16 %v404
      %v1196 = vunpack.c.h.b16 %v404
      %v1197 = vunpack.c.l.b16 %v405
      %v1198 = vunpack.c.h.b16 %v405
      %v1199 = vunpack.c.l.b16 %v406
      %v1200 = vunpack.c.h.b16 %v406
      %v1201 = vunpack.c.l.b16 %v407
      %v1202 = vunpack.c.h.b16 %v407
      %v1203 = vunpack.c.l.b16 %v408
      %v1204 = vunpack.c.h.b16 %v408
      %v1205 = vunpack.c.l.b16 %v409
      %v1206 = vunpack.c.h.b16 %v409
      %v1207 = vunpack.c.l.b16 %v410
      %v1208 = vunpack.c.h.b16 %v410
      %v1209 = vunpack.c.l.b16 %v411
      %v1210 = vunpack.c.h.b16 %v411
      %v1211 = vunpack.c.l.b16 %v412
      %v1212 = vunpack.c.h.b16 %v412
      %v1213 = vunpack.c.l.b16 %v413
      %v1214 = vunpack.c.h.b16 %v413
      %v1215 = vunpack.c.l.b16 %v414
      %v1216 = vunpack.c.h.b16 %v414
      %v1217 = vunpack.c.l.b16 %v415
      %v1218 = vunpack.c.h.b16 %v415
      %v1219 = vunpack.c.l.b16 %v416
      %v1220 = vunpack.c.h.b16 %v416
      %v1221 = vunpack.c.l.b16 %v417
      %v1222 = vunpack.c.h.b16 %v417
      %v1223 = vunpack.c.l.b16 %v418
      %v1224 = vunpack.c.h.b16 %v418
      %v1225 = vunpack.c.l.b16 %v419
      %v1226 = vunpack.c.h.b16 %v419
      %v1227 = vunpack.c.l.b16 %v420
      %v1228 = vunpack.c.h.b16 %v420
      %v1229 = vunpack.c.l.b16 %v421
      %v1230 = vunpack.c.h.b16 %v421
      %v1231 = vunpack.c.l.b16 %v422
      %v1232 = vunpack.c.h.b16 %v422
      %v1233 = vunpack.c.l.b16 %v423
      %v1234 = vunpack.c.h.b16 %v423
      %v1235 = vunpack.c.l.b16 %v424
      %v1236 = vunpack.c.h.b16 %v424
      %v1237 = vunpack.c.l.b16 %v425
      %v1238 = vunpack.c.h.b16 %v425
      %v1239 = vunpack.c.l.b16 %v426
      %v1240 = vunpack.c.h.b16 %v426
      %v1241 = vunpack.c.l.b16 %v427
      %v1242 = vunpack.c.h.b16 %v427
      %v1243 = vunpack.c.l.b16 %v428
      %v1244 = vunpack.c.h.b16 %v428
      %v1245 = vunpack.c.l.b16 %v429
      %v1246 = vunpack.c.h.b16 %v429
      %v1247 = vunpack.c.l.b16 %v430
      %v1248 = vunpack.c.h.b16 %v430
      %v1249 = vunpack.c.l.b16 %v431
      %v1250 = vunpack.c.h.b16 %v431
      %v1251 = vunpack.c.l.b16 %v432
      %v1252 = vunpack.c.h.b16 %v432
      %v1253 = vunpack.c.l.b16 %v433
      %v1254 = vunpack.c.h.b16 %v433
      %v1255 = vunpack.c.l.b16 %v434
      %v1256 = vunpack.c.h.b16 %v434
      %v1257 = vunpack.c.l.b16 %v435
      %v1258 = vunpack.c.h.b16 %v435
      %v1259 = vunpack.c.l.b16 %v436
      %v1260 = vunpack.c.h.b16 %v436
      %v1261 = vunpack.c.l.b16 %v437
      %v1262 = vunpack.c.h.b16 %v437
      %v1263 = vunpack.c.l.b16 %v438
      %v1264 = vunpack.c.h.b16 %v438
      %v1265 = vunpack.c.l.b16 %v439
      %v1266 = vunpack.c.h.b16 %v439
      %v1267 = vunpack.c.l.b16 %v440
      %v1268 = vunpack.c.h.b16 %v440
      %v1269 = vunpack.c.l.b16 %v441
      %v1270 = vunpack.c.h.b16 %v441
      %v1271 = vunpack.c.l.b16 %v442
      %v1272 = vunpack.c.h.b16 %v442
      %v1273 = vunpack.c.l.b16 %v443
      %v1274 = vunpack.c.h.b16 %v443
      %v1275 = vunpack.c.l.b16 %v444
      %v1276 = vunpack.c.h.b16 %v444
      %v1277 = vunpack.c.l.b16 %v445
      %v1278 = vunpack.c.h.b16 %v445
      %v1279 = vunpack.c.l.b16 %v446
      %v1280 = vunpack.c.h.b16 %v446
      %v1281 = vunpack.c.l.b16 %v447
      %v1282 = vunpack.c.h.b16 %v447
      %v1283 = vunpack.c.l.b16 %v448
      %v1284 = vunpack.c.h.b16 %v448
      %v1285 = vunpack.c.l.b16 %v449
      %v1286 = vunpack.c.h.b16 %v449
      %v1287 = vunpack.c.l.b16 %v450
      %v1288 = vunpack.c.h.b16 %v450
      %v1289 = vunpack.c.l.b16 %v451
      %v1290 = vunpack.c.h.b16 %v451
      %v1291 = vunpack.c.l.b16 %v452
      %v1292 = vunpack.c.h.b16 %v452
      %v1293 = vunpack.c.l.b16 %v453
      %v1294 = vunpack.c.h.b16 %v453
      %v1295 = vunpack.c.l.b16 %v454
      %v1296 = vunpack.c.h.b16 %v454
      %v1297 = vunpack.c.l.b16 %v455
      %v1298 = vunpack.c.h.b16 %v455
      %v1299 = vunpack.c.l.b16 %v456
      %v1300 = vunpack.c.h.b16 %v456
      %v1301 = vunpack.c.l.b16 %v457
      %v1302 = vunpack.c.h.b16 %v457
      %v1303 = vunpack.c.l.b16 %v458
      %v1304 = vunpack.c.h.b16 %v458
      %v1305 = vunpack.c.l.b16 %v459
      %v1306 = vunpack.c.h.b16 %v459
      %v1307 = vunpack.c.l.b16 %v460
      %v1308 = vunpack.c.h.b16 %v460
      %v1309 = vunpack.c.l.b16 %v461
      %v1310 = vunpack.c.h.b16 %v461
      %v1311 = vunpack.c.l.b16 %v462
      %v1312 = vunpack.c.h.b16 %v462
      %v1313 = vunpack.c.l.b16 %v463
      %v1314 = vunpack.c.h.b16 %v463
      %v1315 = vunpack.c.l.b16 %v464
      %v1316 = vunpack.c.h.b16 %v464
      %v1317 = vunpack.c.l.b16 %v465
      %v1318 = vunpack.c.h.b16 %v465
      %v1319 = vunpack.c.l.b16 %v466
      %v1320 = vunpack.c.h.b16 %v466
      %v1321 = vunpack.c.l.b16 %v467
      %v1322 = vunpack.c.h.b16 %v467
      %v1323 = vunpack.c.l.b16 %v468
      %v1324 = vunpack.c.h.b16 %v468
      %v1325 = vunpack.c.l.b16 %v469
      %v1326 = vunpack.c.h.b16 %v469
      %v1327 = vunpack.c.l.b16 %v470
      %v1328 = vunpack.c.h.b16 %v470
      %v1329 = vunpack.c.l.b16 %v471
      %v1330 = vunpack.c.h.b16 %v471
      %v1331 = vunpack.c.l.b16 %v472
      %v1332 = vunpack.c.h.b16 %v472
      %v1333 = vunpack.c.l.b16 %v473
      %v1334 = vunpack.c.h.b16 %v473
      %v1335 = vunpack.c.l.b16 %v474
      %v1336 = vunpack.c.h.b16 %v474
      %v1337 = vunpack.c.l.b16 %v475
      %v1338 = vunpack.c.h.b16 %v475
      %v1339 = vunpack.c.l.b16 %v476
      %v1340 = vunpack.c.h.b16 %v476
      %v1341 = vunpack.c.l.b16 %v477
      %v1342 = vunpack.c.h.b16 %v477
      %v1343 = vunpack.c.l.b16 %v478
      %v1344 = vunpack.c.h.b16 %v478
      %v1345 = vunpack.c.l.b16 %v479
      %v1346 = vunpack.c.h.b16 %v479
      %v1347 = vunpack.c.l.b16 %v480
      %v1348 = vunpack.c.h.b16 %v480
      %v1349 = vunpack.c.l.b16 %v481
      %v1350 = vunpack.c.h.b16 %v481
      %v1351 = vunpack.c.l.b16 %v482
      %v1352 = vunpack.c.h.b16 %v482
      %v1353 = vunpack.c.l.b16 %v483
      %v1354 = vunpack.c.h.b16 %v483
      %v1355 = vunpack.c.l.b16 %v484
      %v1356 = vunpack.c.h.b16 %v484
      %v1357 = vunpack.c.l.b16 %v485
      %v1358 = vunpack.c.h.b16 %v485
      %v1359 = vunpack.c.l.b16 %v486
      %v1360 = vunpack.c.h.b16 %v486
      %v1361 = vunpack.c.l.b16 %v487
      %v1362 = vunpack.c.h.b16 %v487
      %v1363 = vunpack.c.l.b16 %v488
      %v1364 = vunpack.c.h.b16 %v488
      %v1365 = vunpack.c.l.b16 %v489
      %v1366 = vunpack.c.h.b16 %v489
      %v1367 = vunpack.c.l.b16 %v490
      %v1368 = vunpack.c.h.b16 %v490
      %v1369 = vunpack.c.l.b16 %v491
      %v1370 = vunpack.c.h.b16 %v491
      %v1371 = vunpack.c.l.b16 %v492
      %v1372 = vunpack.c.h.b16 %v492
      %v1373 = vunpack.c.l.b16 %v493
      %v1374 = vunpack.c.h.b16 %v493
      %v1375 = vunpack.c.l.b16 %v494
      %v1376 = vunpack.c.h.b16 %v494
      %v1377 = vunpack.c.l.b16 %v495
      %v1378 = vunpack.c.h.b16 %v495
      %v1379 = vunpack.c.l.b16 %v496
      %v1380 = vunpack.c.h.b16 %v496
      %v1381 = vunpack.c.l.b16 %v497
      %v1382 = vunpack.c.h.b16 %v497
      %v1383 = vunpack.c.l.b16 %v498
      %v1384 = vunpack.c.h.b16 %v498
      %v1385 = vunpack.c.l.b16 %v499
      %v1386 = vunpack.c.h.b16 %v499
      %v1387 = vunpack.c.l.b16 %v500
      %v1388 = vunpack.c.h.b16 %v500
      %v1389 = vunpack.c.l.b16 %v501
      %v1390 = vunpack.c.h.b16 %v501
      %v1391 = vunpack.c.l.b16 %v502
      %v1392 = vunpack.c.h.b16 %v502
      %v1393 = vunpack.c.l.b16 %v503
      %v1394 = vunpack.c.h.b16 %v503
      %v1395 = vunpack.c.l.b16 %v504
      %v1396 = vunpack.c.h.b16 %v504
      %v1397 = vunpack.c.l.b16 %v505
      %v1398 = vunpack.c.h.b16 %v505
      %v1399 = vunpack.c.l.b16 %v506
      %v1400 = vunpack.c.h.b16 %v506
      %v1401 = vunpack.c.l.b16 %v507
      %v1402 = vunpack.c.h.b16 %v507
      %v1403 = vunpack.c.l.b16 %v508
      %v1404 = vunpack.c.h.b16 %v508
      %v1405 = vunpack.c.l.b16 %v509
      %v1406 = vunpack.c.h.b16 %v509
      %v1407 = vunpack.c.l.b16 %v510
      %v1408 = vunpack.c.h.b16 %v510
      %v1409 = vunpack.c.l.b16 %v511
      %v1410 = vunpack.c.h.b16 %v511
      %v1411 = vunpack.c.l.b16 %v512
      %v1412 = vunpack.c.h.b16 %v512
      %v1413 = vunpack.c.l.b16 %v513
      %v1414 = vunpack.c.h.b16 %v513
      %v1415 = vunpack.c.l.b16 %v514
      %v1416 = vunpack.c.h.b16 %v514
      %v1417 = vunpack.c.l.b16 %v515
      %v1418 = vunpack.c.h.b16 %v515
      %v1419 = vunpack.c.l.b16 %v516
      %v1420 = vunpack.c.h.b16 %v516
      %v1421 = vunpack.c.l.b16 %v517
      %v1422 = vunpack.c.h.b16 %v517
      %v1423 = vunpack.c.l.b16 %v518
      %v1424 = vunpack.c.h.b16 %v518
      %v1425 = vunpack.c.l.b16 %v519
      %v1426 = vunpack.c.h.b16 %v519
      %v1427 = vunpack.c.l.b16 %v520
      %v1428 = vunpack.c.h.b16 %v520
      %v1429 = vunpack.c.l.b16 %v521
      %v1430 = vunpack.c.h.b16 %v521
      %v1431 = vunpack.c.l.b16 %v522
      %v1432 = vunpack.c.h.b16 %v522
      %v1433 = vunpack.c.l.b16 %v523
      %v1434 = vunpack.c.h.b16 %v523
      %v1435 = vunpack.c.l.b16 %v524
      %v1436 = vunpack.c.h.b16 %v524
      %v1437 = vunpack.c.l.b16 %v525
      %v1438 = vunpack.c.h.b16 %v525
      %v1439 = vunpack.c.l.b16 %v526
      %v1440 = vunpack.c.h.b16 %v526
      %v1441 = vunpack.c.l.b16 %v527
      %v1442 = vunpack.c.h.b16 %v527
      %v1443 = vunpack.c.l.b16 %v528
      %v1444 = vunpack.c.h.b16 %v528
      %v1445 = vunpack.c.l.b16 %v529
      %v1446 = vunpack.c.h.b16 %v529
      %v1447 = vunpack.c.l.b16 %v530
      %v1448 = vunpack.c.h.b16 %v530
      %v1449 = vunpack.c.l.b16 %v531
      %v1450 = vunpack.c.h.b16 %v531
      %v1451 = vunpack.c.l.b16 %v532
      %v1452 = vunpack.c.h.b16 %v532
      %v1453 = vunpack.c.l.b16 %v533
      %v1454 = vunpack.c.h.b16 %v533
      %v1455 = vunpack.c.l.b16 %v534
      %v1456 = vunpack.c.h.b16 %v534
      %v1457 = vunpack.c.l.b16 %v535
      %v1458 = vunpack.c.h.b16 %v535
      %v1459 = vunpack.c.l.b16 %v536
      %v1460 = vunpack.c.h.b16 %v536
      %v1461 = vunpack.c.l.b16 %v537
      %v1462 = vunpack.c.h.b16 %v537
      %v1463 = vunpack.c.l.b16 %v538
      %v1464 = vunpack.c.h.b16 %v538
      %v1465 = vunpack.c.l.b16 %v539
      %v1466 = vunpack.c.h.b16 %v539
      %v1467 = vunpack.c.l.b16 %v540
      %v1468 = vunpack.c.h.b16 %v540
      %v1469 = vunpack.c.l.b16 %v541
      %v1470 = vunpack.c.h.b16 %v541
      %v1471 = vunpack.c.l.b16 %v542
      %v1472 = vunpack.c.h.b16 %v542
      %v1473 = vunpack.c.l.b16 %v543
      %v1474 = vunpack.c.h.b16 %v543
      %v1475 = vunpack.c.l.b16 %v544
      %v1476 = vunpack.c.h.b16 %v544
      %v1477 = vunpack.c.l.b16 %v545
      %v1478 = vunpack.c.h.b16 %v545
      %v1479 = vunpack.c.l.b16 %v546
      %v1480 = vunpack.c.h.b16 %v546
      %v1481 = vunpack.c.l.b16 %v547
      %v1482 = vunpack.c.h.b16 %v547
      %v1483 = vunpack.c.l.b16 %v548
      %v1484 = vunpack.c.h.b16 %v548
      %v1485 = vunpack.c.l.b16 %v549
      %v1486 = vunpack.c.h.b16 %v549
      %v1487 = vunpack.c.l.b16 %v550
      %v1488 = vunpack.c.h.b16 %v550
      %v1489 = vunpack.c.l.b16 %v551
      %v1490 = vunpack.c.h.b16 %v551
      %v1491 = vunpack.c.l.b16 %v552
      %v1492 = vunpack.c.h.b16 %v552
      %v1493 = vunpack.c.l.b16 %v553
      %v1494 = vunpack.c.h.b16 %v553
      %v1495 = vunpack.c.l.b16 %v554
      %v1496 = vunpack.c.h.b16 %v554
      %v1497 = vunpack.c.l.b16 %v555
      %v1498 = vunpack.c.h.b16 %v555
      %v1499 = vunpack.c.l.b16 %v556
      %v1500 = vunpack.c.h.b16 %v556
      %v1501 = vunpack.c.l.b16 %v557
      %v1502 = vunpack.c.h.b16 %v557
      %v1503 = vunpack.c.l.b16 %v558
      %v1504 = vunpack.c.h.b16 %v558
      %v1505 = vunpack.c.l.b16 %v559
      %v1506 = vunpack.c.h.b16 %v559
      %v1507 = vunpack.c.l.b16 %v560
      %v1508 = vunpack.c.h.b16 %v560
      %v1509 = vunpack.c.l.b16 %v561
      %v1510 = vunpack.c.h.b16 %v561
      %v1511 = vunpack.c.l.b16 %v562
      %v1512 = vunpack.c.h.b16 %v562
      %v1513 = vunpack.c.l.b16 %v563
      %v1514 = vunpack.c.h.b16 %v563
      %v1515 = vunpack.c.l.b16 %v564
      %v1516 = vunpack.c.h.b16 %v564
      %v1517 = vunpack.c.l.b16 %v565
      %v1518 = vunpack.c.h.b16 %v565
      %v1519 = vunpack.c.l.b16 %v566
      %v1520 = vunpack.c.h.b16 %v566
      %v1521 = vunpack.c.l.b16 %v567
      %v1522 = vunpack.c.h.b16 %v567
      %v1523 = vunpack.c.l.b16 %v568
      %v1524 = vunpack.c.h.b16 %v568
      %v1525 = vunpack.c.l.b16 %v569
      %v1526 = vunpack.c.h.b16 %v569
      %v1527 = vunpack.c.l.b16 %v570
      %v1528 = vunpack.c.h.b16 %v570
      %v1529 = vunpack.c.l.b16 %v571
      %v1530 = vunpack.c.h.b16 %v571
      %v1531 = vunpack.c.l.b16 %v572
      %v1532 = vunpack.c.h.b16 %v572
      %v1533 = vunpack.c.l.b16 %v573
      %v1534 = vunpack.c.h.b16 %v573
      %v1535 = vunpack.c.l.b16 %v574
      %v1536 = vunpack.c.h.b16 %v574
      %v1537 = vunpack.c.l.b16 %v575
      %v1538 = vunpack.c.h.b16 %v575
      %v1539 = vunpack.c.l.b16 %v576
      %v1540 = vunpack.c.h.b16 %v576
      %v1541 = vunpack.c.l.b16 %v577
      %v1542 = vunpack.c.h.b16 %v577
      %v1543 = vunpack.c.l.b16 %v578
      %v1544 = vunpack.c.h.b16 %v578
      %v1545 = vunpack.c.l.b16 %v579
      %v1546 = vunpack.c.h.b16 %v579
      %v1547 = vunpack.c.l.b16 %v580
      %v1548 = vunpack.c.h.b16 %v580
      %v1549 = vunpack.c.l.b16 %v581
      %v1550 = vunpack.c.h.b16 %v581
      %v1551 = vunpack.c.l.b16 %v582
      %v1552 = vunpack.c.h.b16 %v582
      %v1553 = vunpack.c.l.b16 %v583
      %v1554 = vunpack.c.h.b16 %v583
      %v1555 = vunpack.c.l.b16 %v584
      %v1556 = vunpack.c.h.b16 %v584
      %v1557 = vunpack.c.l.b16 %v585
      %v1558 = vunpack.c.h.b16 %v585
      %v1559 = vunpack.c.l.b16 %v586
      %v1560 = vunpack.c.h.b16 %v586
      %v1561 = vunpack.c.l.b16 %v587
      %v1562 = vunpack.c.h.b16 %v587
      %v1563 = vunpack.c.l.b16 %v588
      %v1564 = vunpack.c.h.b16 %v588
      %v1565 = vunpack.c.l.b16 %v589
      %v1566 = vunpack.c.h.b16 %v589
      %v1567 = vunpack.c.l.b16 %v590
      %v1568 = vunpack.c.h.b16 %v590
      %v1569 = vunpack.c.l.b16 %v591
      %v1570 = vunpack.c.h.b16 %v591
      %v1571 = vunpack.c.l.b16 %v592
      %v1572 = vunpack.c.h.b16 %v592
      %v1573 = vunpack.c.l.b16 %v593
      %v1574 = vunpack.c.h.b16 %v593
      %v1575 = vunpack.c.l.b16 %v594
      %v1576 = vunpack.c.h.b16 %v594
      %v1577 = vunpack.c.l.b16 %v595
      %v1578 = vunpack.c.h.b16 %v595
      %v1579 = vunpack.c.l.b16 %v596
      %v1580 = vunpack.c.h.b16 %v596
      %v1581 = vunpack.c.l.b16 %v597
      %v1582 = vunpack.c.h.b16 %v597
      %v1583 = vunpack.c.l.b16 %v598
      %v1584 = vunpack.c.h.b16 %v598
      %v1585 = vunpack.c.l.b16 %v599
      %v1586 = vunpack.c.h.b16 %v599
      %v1587 = vunpack.c.l.b16 %v600
      %v1588 = vunpack.c.h.b16 %v600
      %v1589 = vunpack.c.l.b16 %v601
      %v1590 = vunpack.c.h.b16 %v601
      %v1591 = vunpack.c.l.b16 %v602
      %v1592 = vunpack.c.h.b16 %v602
      %v1593 = vunpack.c.l.b16 %v603
      %v1594 = vunpack.c.h.b16 %v603
      %v1595 = vunpack.c.l.b16 %v604
      %v1596 = vunpack.c.h.b16 %v604
      %v1597 = vunpack.c.l.b16 %v605
      %v1598 = vunpack.c.h.b16 %v605
      %v1599 = vunpack.c.l.b16 %v606
      %v1600 = vunpack.c.h.b16 %v606
      %v1601 = vunpack.c.l.b16 %v607
      %v1602 = vunpack.c.h.b16 %v607
      %v1603 = vunpack.c.l.b16 %v608
      %v1604 = vunpack.c.h.b16 %v608
      %v1605 = vunpack.c.l.b16 %v609
      %v1606 = vunpack.c.h.b16 %v609
      %v1607 = vunpack.c.l.b16 %v610
      %v1608 = vunpack.c.h.b16 %v610
      %v1609 = vunpack.c.l.b16 %v611
      %v1610 = vunpack.c.h.b16 %v611
      %v1611 = vunpack.c.l.b16 %v612
      %v1612 = vunpack.c.h.b16 %v612
      %v1613 = vunpack.c.l.b16 %v613
      %v1614 = vunpack.c.h.b16 %v613
      %v1615 = vunpack.c.l.b16 %v614
      %v1616 = vunpack.c.h.b16 %v614
      %v1617 = vunpack.c.l.b16 %v615
      %v1618 = vunpack.c.h.b16 %v615
      %v1619 = vunpack.c.l.b16 %v616
      %v1620 = vunpack.c.h.b16 %v616
      %v1621 = vunpack.c.l.b16 %v617
      %v1622 = vunpack.c.h.b16 %v617
      %v1623 = vpack.c.b16 %v991, %v983
      %v1624 = vpack.c.b16 %v992, %v984
      %v1625 = vpack.c.b16 %v993, %v985
      %v1626 = vpack.c.b16 %v994, %v986
      %v1627 = vpack.c.b16 %v995, %v987
      %v1628 = vpack.c.b16 %v996, %v988
      %v1629 = vpack.c.b16 %v997, %v989
      %v1630 = vpack.c.b16 %v998, %v990
      %v1631 = vpack.c.b16 %v1007, %v999
      %v1632 = vpack.c.b16 %v1008, %v1000
      %v1633 = vpack.c.b16 %v1009, %v1001
      %v1634 = vpack.c.b16 %v1010, %v1002
      %v1635 = vpack.c.b16 %v1011, %v1003
      %v1636 = vpack.c.b16 %v1012, %v1004
      %v1637 = vpack.c.b16 %v1013, %v1005
      %v1638 = vpack.c.b16 %v1014, %v1006
      %v1639 = vpack.c.b16 %v1023, %v1015
      %v1640 = vpack.c.b16 %v1024, %v1016
      %v1641 = vpack.c.b16 %v1025, %v1017
      %v1642 = vpack.c.b16 %v1026, %v1018
      %v1643 = vpack.c.b16 %v1027, %v1019
      %v1644 = vpack.c.b16 %v1028, %v1020
      %v1645 = vpack.c.b16 %v1029, %v1021
      %v1646 = vpack.c.b16 %v1030, %v1022
      %v1647 = vpack.c.b16 %v1039, %v1031
      %v1648 = vpack.c.b16 %v1040, %v1032
      %v1649 = vpack.c.b16 %v1041, %v1033
      %v1650 = vpack.c.b16 %v1042, %v1034
      %v1651 = vpack.c.b16 %v1043, %v1035
      %v1652 = vpack.c.b16 %v1044, %v1036
      %v1653 = vpack.c.b16 %v1045, %v1037
      %v1654 = vpack.c.b16 %v1046, %v1038
      %v1655 = vpack.c.b16 %v1055, %v1047
      %v1656 = vpack.c.b16 %v1056, %v1048
      %v1657 = vpack.c.b16 %v1057, %v1049
      %v1658 = vpack.c.b16 %v1058, %v1050
      %v1659 = vpack.c.b16 %v1059, %v1051
      %v1660 = vpack.c.b16 %v1060, %v1052
      %v1661 = vpack.c.b16 %v1061, %v1053
      %v1662 = vpack.c.b16 %v1062, %v1054
      %v1663 = vpack.c.b16 %v1071, %v1063
      %v1664 = vpack.c.b16 %v1072, %v1064
      %v1665 = vpack.c.b16 %v1073, %v1065
      %v1666 = vpack.c.b16 %v1074, %v1066
      %v1667 = vpack.c.b16 %v1075, %v1067
      %v1668 = vpack.c.b16 %v1076, %v1068
      %v1669 = vpack.c.b16 %v1077, %v1069
      %v1670 = vpack.c.b16 %v1078, %v1070
      %v1671 = vpack.c.b16 %v1087, %v1079
      %v1672 = vpack.c.b16 %v1088, %v1080
      %v1673 = vpack.c.b16 %v1089, %v1081
      %v1674 = vpack.c.b16 %v1090, %v1082
      %v1675 = vpack.c.b16 %v1091, %v1083
      %v1676 = vpack.c.b16 %v1092, %v1084
      %v1677 = vpack.c.b16 %v1093, %v1085
      %v1678 = vpack.c.b16 %v1094, %v1086
      %v1679 = vpack.c.b16 %v1103, %v1095
      %v1680 = vpack.c.b16 %v1104, %v1096
      %v1681 = vpack.c.b16 %v1105, %v1097
      %v1682 = vpack.c.b16 %v1106, %v1098
      %v1683 = vpack.c.b16 %v1107, %v1099
      %v1684 = vpack.c.b16 %v1108, %v1100
      %v1685 = vpack.c.b16 %v1109, %v1101
      %v1686 = vpack.c.b16 %v1110, %v1102
      %v1687 = vpack.c.b16 %v1119, %v1111
      %v1688 = vpack.c.b16 %v1120, %v1112
      %v1689 = vpack.c.b16 %v1121, %v1113
      %v1690 = vpack.c.b16 %v1122, %v1114
      %v1691 = vpack.c.b16 %v1123, %v1115
      %v1692 = vpack.c.b16 %v1124, %v1116
      %v1693 = vpack.c.b16 %v1125, %v1117
      %v1694 = vpack.c.b16 %v1126, %v1118
      %v1695 = vpack.c.b16 %v1135, %v1127
      %v1696 = vpack.c.b16 %v1136, %v1128
      %v1697 = vpack.c.b16 %v1137, %v1129
      %v1698 = vpack.c.b16 %v1138, %v1130
      %v1699 = vpack.c.b16 %v1139, %v1131
      %v1700 = vpack.c.b16 %v1140, %v1132
      %v1701 = vpack.c.b16 %v1141, %v1133
      %v1702 = vpack.c.b16 %v1142, %v1134
      %v1703 = vpack.c.b16 %v1151, %v1143
      %v1704 = vpack.c.b16 %v1152, %v1144
      %v1705 = vpack.c.b16 %v1153, %v1145
      %v1706 = vpack.c.b16 %v1154, %v1146
      %v1707 = vpack.c.b16 %v1155, %v1147
      %v1708 = vpack.c.b16 %v1156, %v1148
      %v1709 = vpack.c.b16 %v1157, %v1149
      %v1710 = vpack.c.b16 %v1158, %v1150
      %v1711 = vpack.c.b16 %v1167, %v1159
      %v1712 = vpack.c.b16 %v1168, %v1160
      %v1713 = vpack.c.b16 %v1169, %v1161
      %v1714 = vpack.c.b16 %v1170, %v1162
      %v1715 = vpack.c.b16 %v1171, %v1163
      %v1716 = vpack.c.b16 %v1172, %v1164
      %v1717 = vpack.c.b16 %v1173, %v1165
      %v1718 = vpack.c.b16 %v1174, %v1166
      %v1719 = vpack.c.b16 %v1183, %v1175
      %v1720 = vpack.c.b16 %v1184, %v1176
      %v1721 = vpack.c.b16 %v1185, %v1177
      %v1722 = vpack.c.b16 %v1186, %v1178
      %v1723 = vpack.c.b16 %v1187, %v1179
      %v1724 = vpack.c.b16 %v1188, %v1180
      %v1725 = vpack.c.b16 %v1189, %v1181
      %v1726 = vpack.c.b16 %v1190, %v1182
      %v1727 = vpack.c.b16 %v1199, %v1191
      %v1728 = vpack.c.b16 %v1200, %v1192
      %v1729 = vpack.c.b16 %v1201, %v1193
      %v1730 = vpack.c.b16 %v1202, %v1194
      %v1731 = vpack.c.b16 %v1203, %v1195
      %v1732 = vpack.c.b16 %v1204, %v1196
      %v1733 = vpack.c.b16 %v1205, %v1197
      %v1734 = vpack.c.b16 %v1206, %v1198
      %v1735 = vpack.c.b16 %v1215, %v1207
      %v1736 = vpack.c.b16 %v1216, %v1208
      %v1737 = vpack.c.b16 %v1217, %v1209
      %v1738 = vpack.c.b16 %v1218, %v1210
      %v1739 = vpack.c.b16 %v1219, %v1211
      %v1740 = vpack.c.b16 %v1220, %v1212
      %v1741 = vpack.c.b16 %v1221, %v1213
      %v1742 = vpack.c.b16 %v1222, %v1214
      %v1743 = vpack.c.b16 %v1231, %v1223
      %v1744 = vpack.c.b16 %v1232, %v1224
      %v1745 = vpack.c.b16 %v1233, %v1225
      %v1746 = vpack.c.b16 %v1234, %v1226
      %v1747 = vpack.c.b16 %v1235, %v1227
      %v1748 = vpack.c.b16 %v1236, %v1228
      %v1749 = vpack.c.b16 %v1237, %v1229
      %v1750 = vpack.c.b16 %v1238, %v1230
      %v1751 = vpack.c.b16 %v1247, %v1239
      %v1752 = vpack.c.b16 %v1248, %v1240
      %v1753 = vpack.c.b16 %v1249, %v1241
      %v1754 = vpack.c.b16 %v1250, %v1242
      %v1755 = vpack.c.b16 %v1251, %v1243
      %v1756 = vpack.c.b16 %v1252, %v1244
      %v1757 = vpack.c.b16 %v1253, %v1245
      %v1758 = vpack.c.b16 %v1254, %v1246
      %v1759 = vpack.c.b16 %v1263, %v1255
      %v1760 = vpack.c.b16 %v1264, %v1256
      %v1761 = vpack.c.b16 %v1265, %v1257
      %v1762 = vpack.c.b16 %v1266, %v1258
      %v1763 = vpack.c.b16 %v1267, %v1259
      %v1764 = vpack.c.b16 %v1268, %v1260
      %v1765 = vpack.c.b16 %v1269, %v1261
      %v1766 = vpack.c.b16 %v1270, %v1262
      %v1767 = vpack.c.b16 %v1279, %v1271
      %v1768 = vpack.c.b16 %v1280, %v1272
      %v1769 = vpack.c.b16 %v1281, %v1273
      %v1770 = vpack.c.b16 %v1282, %v1274
      %v1771 = vpack.c.b16 %v1283, %v1275
      %v1772 = vpack.c.b16 %v1284, %v1276
      %v1773 = vpack.c.b16 %v1285, %v1277
      %v1774 = vpack.c.b16 %v1286, %v1278
      %v1775 = vpack.c.b16 %v1295, %v1287
      %v1776 = vpack.c.b16 %v1296, %v1288
      %v1777 = vpack.c.b16 %v1297, %v1289
      %v1778 = vpack.c.b16 %v1298, %v1290
      %v1779 = vpack.c.b16 %v1299, %v1291
      %v1780 = vpack.c.b16 %v1300, %v1292
      %v1781 = vpack.c.b16 %v1301, %v1293
      %v1782 = vpack.c.b16 %v1302, %v1294
      %v1783 = vpack.c.b16 %v1311, %v1303
      %v1784 = vpack.c.b16 %v1312, %v1304
      %v1785 = vpack.c.b16 %v1313, %v1305
      %v1786 = vpack.c.b16 %v1314, %v1306
      %v1787 = vpack.c.b16 %v1315, %v1307
      %v1788 = vpack.c.b16 %v1316, %v1308
      %v1789 = vpack.c.b16 %v1317, %v1309
      %v1790 = vpack.c.b16 %v1318, %v1310
      %v1791 = vpack.c.b16 %v1327, %v1319
      %v1792 = vpack.c.b16 %v1328, %v1320
      %v1793 = vpack.c.b16 %v1329, %v1321
      %v1794 = vpack.c.b16 %v1330, %v1322
      %v1795 = vpack.c.b16 %v1331, %v1323
      %v1796 = vpack.c.b16 %v1332, %v1324
      %v1797 = vpack.c.b16 %v1333, %v1325
      %v1798 = vpack.c.b16 %v1334, %v1326
      %v1799 = vpack.c.b16 %v1343, %v1335
      %v1800 = vpack.c.b16 %v1344, %v1336
      %v1801 = vpack.c.b16 %v1345, %v1337
      %v1802 = vpack.c.b16 %v1346, %v1338
      %v1803 = vpack.c.b16 %v1347, %v1339
      %v1804 = vpack.c.b16 %v1348, %v1340
      %v1805 = vpack.c.b16 %v1349, %v1341
      %v1806 = vpack.c.b16 %v1350, %v1342
      %v1807 = vpack.c.b16 %v1359, %v1351
      %v1808 = vpack.c.b16 %v1360, %v1352
      %v1809 = vpack.c.b16 %v1361, %v1353
      %v1810 = vpack.c.b16 %v1362, %v1354
      %v1811 = vpack.c.b16 %v1363, %v1355
      %v1812 = vpack.c.b16 %v1364, %v1356
      %v1813 = vpack.c.b16 %v1365, %v1357
      %v1814 = vpack.c.b16 %v1366, %v1358
      %v1815 = vpack.c.b16 %v1375, %v1367
      %v1816 = vpack.c.b16 %v1376, %v1368
      %v1817 = vpack.c.b16 %v1377, %v1369
      %v1818 = vpack.c.b16 %v1378, %v1370
      %v1819 = vpack.c.b16 %v1379, %v1371
      %v1820 = vpack.c.b16 %v1380, %v1372
      %v1821 = vpack.c.b16 %v1381, %v1373
      %v1822 = vpack.c.b16 %v1382, %v1374
      %v1823 = vpack.c.b16 %v1391, %v1383
      %v1824 = vpack.c.b16 %v1392, %v1384
      %v1825 = vpack.c.b16 %v1393, %v1385
      %v1826 = vpack.c.b16 %v1394, %v1386
      %v1827 = vpack.c.b16 %v1395, %v1387
      %v1828 = vpack.c.b16 %v1396, %v1388
      %v1829 = vpack.c.b16 %v1397, %v1389
      %v1830 = vpack.c.b16 %v1398, %v1390
      %v1831 = vpack.c.b16 %v1407, %v1399
      %v1832 = vpack.c.b16 %v1408, %v1400
      %v1833 = vpack.c.b16 %v1409, %v1401
      %v1834 = vpack.c.b16 %v1410, %v1402
      %v1835 = vpack.c.b16 %v1411, %v1403
      %v1836 = vpack.c.b16 %v1412, %v1404
      %v1837 = vpack.c.b16 %v1413, %v1405
      %v1838 = vpack.c.b16 %v1414, %v1406
      %v1839 = vpack.c.b16 %v1423, %v1415
      %v1840 = vpack.c.b16 %v1424, %v1416
      %v1841 = vpack.c.b16 %v1425, %v1417
      %v1842 = vpack.c.b16 %v1426, %v1418
      %v1843 = vpack.c.b16 %v1427, %v1419
      %v1844 = vpack.c.b16 %v1428, %v1420
      %v1845 = vpack.c.b16 %v1429, %v1421
      %v1846 = vpack.c.b16 %v1430, %v1422
      %v1847 = vpack.c.b16 %v1439, %v1431
      %v1848 = vpack.c.b16 %v1440, %v1432
      %v1849 = vpack.c.b16 %v1441, %v1433
      %v1850 = vpack.c.b16 %v1442, %v1434
      %v1851 = vpack.c.b16 %v1443, %v1435
      %v1852 = vpack.c.b16 %v1444, %v1436
      %v1853 = vpack.c.b16 %v1445, %v1437
      %v1854 = vpack.c.b16 %v1446, %v1438
      %v1855 = vpack.c.b16 %v1455, %v1447
      %v1856 = vpack.c.b16 %v1456, %v1448
      %v1857 = vpack.c.b16 %v1457, %v1449
      %v1858 = vpack.c.b16 %v1458, %v1450
      %v1859 = vpack.c.b16 %v1459, %v1451
      %v1860 = vpack.c.b16 %v1460, %v1452
      %v1861 = vpack.c.b16 %v1461, %v1453
      %v1862 = vpack.c.b16 %v1462, %v1454
      %v1863 = vpack.c.b16 %v1471, %v1463
      %v1864 = vpack.c.b16 %v1472, %v1464
      %v1865 = vpack.c.b16 %v1473, %v1465
      %v1866 = vpack.c.b16 %v1474, %v1466
      %v1867 = vpack.c.b16 %v1475, %v1467
      %v1868 = vpack.c.b16 %v1476, %v1468
      %v1869 = vpack.c.b16 %v1477, %v1469
      %v1870 = vpack.c.b16 %v1478, %v1470
      %v1871 = vpack.c.b16 %v1487, %v1479
      %v1872 = vpack.c.b16 %v1488, %v1480
      %v1873 = vpack.c.b16 %v1489, %v1481
      %v1874 = vpack.c.b16 %v1490, %v1482
      %v1875 = vpack.c.b16 %v1491, %v1483
      %v1876 = vpack.c.b16 %v1492, %v1484
      %v1877 = vpack.c.b16 %v1493, %v1485
      %v1878 = vpack.c.b16 %v1494, %v1486
      %v1879 = vpack.c.b16 %v1503, %v1495
      %v1880 = vpack.c.b16 %v1504, %v1496
      %v1881 = vpack.c.b16 %v1505, %v1497
      %v1882 = vpack.c.b16 %v1506, %v1498
      %v1883 = vpack.c.b16 %v1507, %v1499
      %v1884 = vpack.c.b16 %v1508, %v1500
      %v1885 = vpack.c.b16 %v1509, %v1501
      %v1886 = vpack.c.b16 %v1510, %v1502
      %v1887 = vpack.c.b16 %v1519, %v1511
      %v1888 = vpack.c.b16 %v1520, %v1512
      %v1889 = vpack.c.b16 %v1521, %v1513
      %v1890 = vpack.c.b16 %v1522, %v1514
      %v1891 = vpack.c.b16 %v1523, %v1515
      %v1892 = vpack.c.b16 %v1524, %v1516
      %v1893 = vpack.c.b16 %v1525, %v1517
      %v1894 = vpack.c.b16 %v1526, %v1518
      %v1895 = vpack.c.b16 %v1535, %v1527
      %v1896 = vpack.c.b16 %v1536, %v1528
      %v1897 = vpack.c.b16 %v1537, %v1529
      %v1898 = vpack.c.b16 %v1538, %v1530
      %v1899 = vpack.c.b16 %v1539, %v1531
      %v1900 = vpack.c.b16 %v1540, %v1532
      %v1901 = vpack.c.b16 %v1541, %v1533
      %v1902 = vpack.c.b16 %v1542, %v1534
      %v1903 = vpack.c.b16 %v1551, %v1543
      %v1904 = vpack.c.b16 %v1552, %v1544
      %v1905 = vpack.c.b16 %v1553, %v1545
      %v1906 = vpack.c.b16 %v1554, %v1546
      %v1907 = vpack.c.b16 %v1555, %v1547
      %v1908 = vpack.c.b16 %v1556, %v1548
      %v1909 = vpack.c.b16 %v1557, %v1549
      %v1910 = vpack.c.b16 %v1558, %v1550
      %v1911 = vpack.c.b16 %v1567, %v1559
      %v1912 = vpack.c.b16 %v1568, %v1560
      %v1913 = vpack.c.b16 %v1569, %v1561
      %v1914 = vpack.c.b16 %v1570, %v1562
      %v1915 = vpack.c.b16 %v1571, %v1563
      %v1916 = vpack.c.b16 %v1572, %v1564
      %v1917 = vpack.c.b16 %v1573, %v1565
      %v1918 = vpack.c.b16 %v1574, %v1566
      %v1919 = vpack.c.b16 %v1583, %v1575
      %v1920 = vpack.c.b16 %v1584, %v1576
      %v1921 = vpack.c.b16 %v1585, %v1577
      %v1922 = vpack.c.b16 %v1586, %v1578
      %v1923 = vpack.c.b16 %v1587, %v1579
      %v1924 = vpack.c.b16 %v1588, %v1580
      %v1925 = vpack.c.b16 %v1589, %v1581
      %v1926 = vpack.c.b16 %v1590, %v1582
      %v1927 = vpack.c.b16 %v1599, %v1591
      %v1928 = vpack.c.b16 %v1600, %v1592
      %v1929 = vpack.c.b16 %v1601, %v1593
      %v1930 = vpack.c.b16 %v1602, %v1594
      %v1931 = vpack.c.b16 %v1603, %v1595
      %v1932 = vpack.c.b16 %v1604, %v1596
      %v1933 = vpack.c.b16 %v1605, %v1597
      %v1934 = vpack.c.b16 %v1606, %v1598
      %v1935 = vpack.c.b16 %v1615, %v1607
      %v1936 = vpack.c.b16 %v1616, %v1608
      %v1937 = vpack.c.b16 %v1617, %v1609
      %v1938 = vpack.c.b16 %v1618, %v1610
      %v1939 = vpack.c.b16 %v1619, %v1611
      %v1940 = vpack.c.b16 %v1620, %v1612
      %v1941 = vpack.c.b16 %v1621, %v1613
      %v1942 = vpack.c.b16 %v1622, %v1614
      %2263 = vmatprep.subr.bf16.mxu0 %v1624
      %2264 = vmatpush1.bf16.msra.mxu0 %v1623
      %2265 = vmatprep.subr.bf16.mxu0 %v1632
      %2266 = vmatpush1.bf16.msra.mxu0 %v1631
      %2267 = vmatprep.subr.bf16.mxu0 %v1640
      %2268 = vmatpush1.bf16.msra.mxu0 %v1639
      %2269 = vmatprep.subr.bf16.mxu0 %v1648
      %2270 = vmatpush1.bf16.msra.mxu0 %v1647
      %2271 = vmatprep.subr.bf16.mxu0 %v1656
      %2272 = vmatpush1.bf16.msra.mxu0 %v1655
      %2273 = vmatprep.subr.bf16.mxu0 %v1664
      %2274 = vmatpush1.bf16.msra.mxu0 %v1663
      %2275 = vmatprep.subr.bf16.mxu0 %v1672
      %2276 = vmatpush1.bf16.msra.mxu0 %v1671
      %2277 = vmatprep.subr.bf16.mxu0 %v1680
      %2278 = vmatpush1.bf16.msra.mxu0 %v1679
      %2279 = vmatprep.subr.bf16.mxu0 %v1688
      %2280 = vmatpush1.bf16.msra.mxu0 %v1687
      %2281 = vmatprep.subr.bf16.mxu0 %v1696
      %2282 = vmatpush1.bf16.msra.mxu0 %v1695
      %2283 = vmatprep.subr.bf16.mxu0 %v1704
      %2284 = vmatpush1.bf16.msra.mxu0 %v1703
      %2285 = vmatprep.subr.bf16.mxu0 %v1712
      %2286 = vmatpush1.bf16.msra.mxu0 %v1711
      %2287 = vmatprep.subr.bf16.mxu0 %v1720
      %2288 = vmatpush1.bf16.msra.mxu0 %v1719
      %2289 = vmatprep.subr.bf16.mxu0 %v1728
      %2290 = vmatpush1.bf16.msra.mxu0 %v1727
      %2291 = vmatprep.subr.bf16.mxu0 %v1736
      %2292 = vmatpush1.bf16.msra.mxu0 %v1735
      %2293 = vmatprep.subr.bf16.mxu0 %v1744
      %2294 = vmatpush1.bf16.msra.mxu0 %v1743
      %2295 = vmatprep.mubr.bf16.mxu0 %v655
      %2296 = vmatmul.mubr.bf16.gmra.mrb[0].mxu0 %v641
      %v2297 = vpop.f32.mrb[0].mxu0
      %v2298 = vadd.f32 0.0, %v2297
      %v2299 = vpop.f32.mrb[0].mxu0
      %v2300 = vadd.f32 0.0, %v2299
      %v2301 = vpop.f32.mrb[0].mxu0
      %v2302 = vpop.f32.mrb[0].mxu0
      %2303 = vdwg.mxu0
      %2304 = vmatprep.subr.bf16.mxu0 %v1752
      %2305 = vmatpush1.bf16.msra.mxu0 %v1751
      %2306 = vmatprep.subr.bf16.mxu0 %v1760
      %2307 = vmatpush1.bf16.msra.mxu0 %v1759
      %2308 = vmatprep.subr.bf16.mxu0 %v1768
      %2309 = vmatpush1.bf16.msra.mxu0 %v1767
      %2310 = vmatprep.subr.bf16.mxu0 %v1776
      %2311 = vmatpush1.bf16.msra.mxu0 %v1775
      %2312 = vmatprep.subr.bf16.mxu0 %v1784
      %2313 = vmatpush1.bf16.msra.mxu0 %v1783
      %2314 = vmatprep.subr.bf16.mxu0 %v1792
      %2315 = vmatpush1.bf16.msra.mxu0 %v1791
      %2316 = vmatprep.subr.bf16.mxu0 %v1800
      %2317 = vmatpush1.bf16.msra.mxu0 %v1799
      %2318 = vmatprep.subr.bf16.mxu0 %v1808
      %2319 = vmatpush1.bf16.msra.mxu0 %v1807
      %2320 = vmatprep.subr.bf16.mxu0 %v1816
      %2321 = vmatpush1.bf16.msra.mxu0 %v1815
      %2322 = vmatprep.subr.bf16.mxu0 %v1824
      %2323 = vmatpush1.bf16.msra.mxu0 %v1823
      %2324 = vmatprep.subr.bf16.mxu0 %v1832
      %2325 = vmatpush1.bf16.msra.mxu0 %v1831
      %2326 = vmatprep.subr.bf16.mxu0 %v1840
      %2327 = vmatpush1.bf16.msra.mxu0 %v1839
      %2328 = vmatprep.subr.bf16.mxu0 %v1848
      %2329 = vmatpush1.bf16.msra.mxu0 %v1847
      %2330 = vmatprep.subr.bf16.mxu0 %v1856
      %2331 = vmatpush1.bf16.msra.mxu0 %v1855
      %2332 = vmatprep.subr.bf16.mxu0 %v1864
      %2333 = vmatpush1.bf16.msra.mxu0 %v1863
      %2334 = vmatprep.subr.bf16.mxu0 %v1872
      %2335 = vmatpush1.bf16.msra.mxu0 %v1871
      %2336 = vmatprep.mubr.bf16.mxu0 %v657
      %2337 = vmatmul.mubr.bf16.gmra.mrb[0].mxu0 %v656
      %v2338 = vpop.f32.mrb[0].mxu0
      %v2339 = vadd.f32 %v2298, %v2338
      %v2340 = vpop.f32.mrb[0].mxu0
      %v2341 = vadd.f32 %v2300, %v2340
      %v2342 = vpop.f32.mrb[0].mxu0
      %v2343 = vpop.f32.mrb[0].mxu0
      %2344 = vdwg.mxu0
      %2345 = vmatprep.subr.bf16.mxu0 %v1880
      %2346 = vmatpush1.bf16.msra.mxu0 %v1879
      %2347 = vmatprep.subr.bf16.mxu0 %v1888
      %2348 = vmatpush1.bf16.msra.mxu0 %v1887
      %2349 = vmatprep.subr.bf16.mxu0 %v1896
      %2350 = vmatpush1.bf16.msra.mxu0 %v1895
      %2351 = vmatprep.subr.bf16.mxu0 %v1904
      %2352 = vmatpush1.bf16.msra.mxu0 %v1903
      %2353 = vmatprep.subr.bf16.mxu0 %v1912
      %2354 = vmatpush1.bf16.msra.mxu0 %v1911
      %2355 = vmatprep.subr.bf16.mxu0 %v1920
      %2356 = vmatpush1.bf16.msra.mxu0 %v1919
      %2357 = vmatprep.subr.bf16.mxu0 %v1928
      %2358 = vmatpush1.bf16.msra.mxu0 %v1927
      %2359 = vmatprep.subr.bf16.mxu0 %v1936
      %2360 = vmatpush1.bf16.msra.mxu0 %v1935
      %2361 = vmatprep.subr.bf16.mxu0 0
      %2362 = vmatpush1.bf16.msra.mxu0 0
      %2363 = vmatprep.subr.bf16.mxu0 0
      %2364 = vmatpush1.bf16.msra.mxu0 0
      %2365 = vmatprep.subr.bf16.mxu0 0
      %2366 = vmatpush1.bf16.msra.mxu0 0
      %2367 = vmatprep.subr.bf16.mxu0 0
      %2368 = vmatpush1.bf16.msra.mxu0 0
      %2369 = vmatprep.subr.bf16.mxu0 0
      %2370 = vmatpush1.bf16.msra.mxu0 0
      %2371 = vmatprep.subr.bf16.mxu0 0
      %2372 = vmatpush1.bf16.msra.mxu0 0
      %2373 = vmatprep.subr.bf16.mxu0 0
      %2374 = vmatpush1.bf16.msra.mxu0 0
      %2375 = vmatprep.subr.bf16.mxu0 0
      %2376 = vmatpush1.bf16.msra.mxu0 0
      %2377 = vmatprep.mubr.bf16.mxu0 0
      %2378 = vmatmul.mubr.bf16.gmra.mrb[0].mxu0 %v648
      %v2379 = vpop.f32.mrb[0].mxu0
      %v2380 = vadd.f32 %v2339, %v2379
      %v2381 = vpop.f32.mrb[0].mxu0
      %v2382 = vadd.f32 %v2341, %v2381
      %v2383 = vpop.f32.mrb[0].mxu0
      %v2384 = vpop.f32.mrb[0].mxu0
      %2385 = vdwg.mxu0
      %2386 = vmatprep.subr.bf16.mxu0 %v1626
      %2387 = vmatpush1.bf16.msra.mxu0 %v1625
      %2388 = vmatprep.subr.bf16.mxu0 %v1634
      %2389 = vmatpush1.bf16.msra.mxu0 %v1633
      %2390 = vmatprep.subr.bf16.mxu0 %v1642
      %2391 = vmatpush1.bf16.msra.mxu0 %v1641
      %2392 = vmatprep.subr.bf16.mxu0 %v1650
      %2393 = vmatpush1.bf16.msra.mxu0 %v1649
      %2394 = vmatprep.subr.bf16.mxu0 %v1658
      %2395 = vmatpush1.bf16.msra.mxu0 %v1657
      %2396 = vmatprep.subr.bf16.mxu0 %v1666
      %2397 = vmatpush1.bf16.msra.mxu0 %v1665
      %2398 = vmatprep.subr.bf16.mxu0 %v1674
      %2399 = vmatpush1.bf16.msra.mxu0 %v1673
      %2400 = vmatprep.subr.bf16.mxu0 %v1682
      %2401 = vmatpush1.bf16.msra.mxu0 %v1681
      %2402 = vmatprep.subr.bf16.mxu0 %v1690
      %2403 = vmatpush1.bf16.msra.mxu0 %v1689
      %2404 = vmatprep.subr.bf16.mxu0 %v1698
      %2405 = vmatpush1.bf16.msra.mxu0 %v1697
      %2406 = vmatprep.subr.bf16.mxu0 %v1706
      %2407 = vmatpush1.bf16.msra.mxu0 %v1705
      %2408 = vmatprep.subr.bf16.mxu0 %v1714
      %2409 = vmatpush1.bf16.msra.mxu0 %v1713
      %2410 = vmatprep.subr.bf16.mxu0 %v1722
      %2411 = vmatpush1.bf16.msra.mxu0 %v1721
      %2412 = vmatprep.subr.bf16.mxu0 %v1730
      %2413 = vmatpush1.bf16.msra.mxu0 %v1729
      %2414 = vmatprep.subr.bf16.mxu0 %v1738
      %2415 = vmatpush1.bf16.msra.mxu0 %v1737
      %2416 = vmatprep.subr.bf16.mxu0 %v1746
      %2417 = vmatpush1.bf16.msra.mxu0 %v1745
      %2418 = vmatprep.mubr.bf16.mxu0 %v655
      %2419 = vmatmul.mubr.bf16.gmra.mrb[0].mxu0 %v641
      %v2420 = vpop.f32.mrb[0].mxu0
      %v2421 = vadd.f32 0.0, %v2420
      %v2422 = vpop.f32.mrb[0].mxu0
      %v2423 = vadd.f32 0.0, %v2422
      %v2424 = vpop.f32.mrb[0].mxu0
      %v2425 = vpop.f32.mrb[0].mxu0
      %2426 = vdwg.mxu0
      %2427 = vmatprep.subr.bf16.mxu0 %v1754
      %2428 = vmatpush1.bf16.msra.mxu0 %v1753
      %2429 = vmatprep.subr.bf16.mxu0 %v1762
      %2430 = vmatpush1.bf16.msra.mxu0 %v1761
      %2431 = vmatprep.subr.bf16.mxu0 %v1770
      %2432 = vmatpush1.bf16.msra.mxu0 %v1769
      %2433 = vmatprep.subr.bf16.mxu0 %v1778
      %2434 = vmatpush1.bf16.msra.mxu0 %v1777
      %2435 = vmatprep.subr.bf16.mxu0 %v1786
      %2436 = vmatpush1.bf16.msra.mxu0 %v1785
      %2437 = vmatprep.subr.bf16.mxu0 %v1794
      %2438 = vmatpush1.bf16.msra.mxu0 %v1793
      %2439 = vmatprep.subr.bf16.mxu0 %v1802
      %2440 = vmatpush1.bf16.msra.mxu0 %v1801
      %2441 = vmatprep.subr.bf16.mxu0 %v1810
      %2442 = vmatpush1.bf16.msra.mxu0 %v1809
      %2443 = vmatprep.subr.bf16.mxu0 %v1818
      %2444 = vmatpush1.bf16.msra.mxu0 %v1817
      %2445 = vmatprep.subr.bf16.mxu0 %v1826
      %2446 = vmatpush1.bf16.msra.mxu0 %v1825
      %2447 = vmatprep.subr.bf16.mxu0 %v1834
      %2448 = vmatpush1.bf16.msra.mxu0 %v1833
      %2449 = vmatprep.subr.bf16.mxu0 %v1842
      %2450 = vmatpush1.bf16.msra.mxu0 %v1841
      %2451 = vmatprep.subr.bf16.mxu0 %v1850
      %2452 = vmatpush1.bf16.msra.mxu0 %v1849
      %2453 = vmatprep.subr.bf16.mxu0 %v1858
      %2454 = vmatpush1.bf16.msra.mxu0 %v1857
      %2455 = vmatprep.subr.bf16.mxu0 %v1866
      %2456 = vmatpush1.bf16.msra.mxu0 %v1865
      %2457 = vmatprep.subr.bf16.mxu0 %v1874
      %2458 = vmatpush1.bf16.msra.mxu0 %v1873
      %2459 = vmatprep.mubr.bf16.mxu0 %v657
      %2460 = vmatmul.mubr.bf16.gmra.mrb[0].mxu0 %v656
      %v2461 = vpop.f32.mrb[0].mxu0
      %v2462 = vadd.f32 %v2421, %v2461
      %v2463 = vpop.f32.mrb[0].mxu0
      %v2464 = vadd.f32 %v2423, %v2463
      %v2465 = vpop.f32.mrb[0].mxu0
      %v2466 = vpop.f32.mrb[0].mxu0
      %2467 = vdwg.mxu0
      %2468 = vmatprep.subr.bf16.mxu0 %v1882
      %2469 = vmatpush1.bf16.msra.mxu0 %v1881
      %2470 = vmatprep.subr.bf16.mxu0 %v1890
      %2471 = vmatpush1.bf16.msra.mxu0 %v1889
      %2472 = vmatprep.subr.bf16.mxu0 %v1898
      %2473 = vmatpush1.bf16.msra.mxu0 %v1897
      %2474 = vmatprep.subr.bf16.mxu0 %v1906
      %2475 = vmatpush1.bf16.msra.mxu0 %v1905
      %2476 = vmatprep.subr.bf16.mxu0 %v1914
      %2477 = vmatpush1.bf16.msra.mxu0 %v1913
      %2478 = vmatprep.subr.bf16.mxu0 %v1922
      %2479 = vmatpush1.bf16.msra.mxu0 %v1921
      %2480 = vmatprep.subr.bf16.mxu0 %v1930
      %2481 = vmatpush1.bf16.msra.mxu0 %v1929
      %2482 = vmatprep.subr.bf16.mxu0 %v1938
      %2483 = vmatpush1.bf16.msra.mxu0 %v1937
      %2484 = vmatprep.subr.bf16.mxu0 0
      %2485 = vmatpush1.bf16.msra.mxu0 0
      %2486 = vmatprep.subr.bf16.mxu0 0
      %2487 = vmatpush1.bf16.msra.mxu0 0
      %2488 = vmatprep.subr.bf16.mxu0 0
      %2489 = vmatpush1.bf16.msra.mxu0 0
      %2490 = vmatprep.subr.bf16.mxu0 0
      %2491 = vmatpush1.bf16.msra.mxu0 0
      %2492 = vmatprep.subr.bf16.mxu0 0
      %2493 = vmatpush1.bf16.msra.mxu0 0
      %2494 = vmatprep.subr.bf16.mxu0 0
      %2495 = vmatpush1.bf16.msra.mxu0 0
      %2496 = vmatprep.subr.bf16.mxu0 0
      %2497 = vmatpush1.bf16.msra.mxu0 0
      %2498 = vmatprep.subr.bf16.mxu0 0
      %2499 = vmatpush1.bf16.msra.mxu0 0
      %2500 = vmatprep.mubr.bf16.mxu0 0
      %2501 = vmatmul.mubr.bf16.gmra.mrb[0].mxu0 %v648
      %v2502 = vpop.f32.mrb[0].mxu0
      %v2503 = vadd.f32 %v2462, %v2502
      %v2504 = vpop.f32.mrb[0].mxu0
      %v2505 = vadd.f32 %v2464, %v2504
      %v2506 = vpop.f32.mrb[0].mxu0
      %v2507 = vpop.f32.mrb[0].mxu0
      %2508 = vdwg.mxu0
      %2509 = vmatprep.subr.bf16.mxu0 %v1628
      %2510 = vmatpush1.bf16.msra.mxu0 %v1627
      %2511 = vmatprep.subr.bf16.mxu0 %v1636
      %2512 = vmatpush1.bf16.msra.mxu0 %v1635
      %2513 = vmatprep.subr.bf16.mxu0 %v1644
      %2514 = vmatpush1.bf16.msra.mxu0 %v1643
      %2515 = vmatprep.subr.bf16.mxu0 %v1652
      %2516 = vmatpush1.bf16.msra.mxu0 %v1651
      %2517 = vmatprep.subr.bf16.mxu0 %v1660
      %2518 = vmatpush1.bf16.msra.mxu0 %v1659
      %2519 = vmatprep.subr.bf16.mxu0 %v1668
      %2520 = vmatpush1.bf16.msra.mxu0 %v1667
      %2521 = vmatprep.subr.bf16.mxu0 %v1676
      %2522 = vmatpush1.bf16.msra.mxu0 %v1675
      %2523 = vmatprep.subr.bf16.mxu0 %v1684
      %2524 = vmatpush1.bf16.msra.mxu0 %v1683
      %2525 = vmatprep.subr.bf16.mxu0 %v1692
      %2526 = vmatpush1.bf16.msra.mxu0 %v1691
      %2527 = vmatprep.subr.bf16.mxu0 %v1700
      %2528 = vmatpush1.bf16.msra.mxu0 %v1699
      %2529 = vmatprep.subr.bf16.mxu0 %v1708
      %2530 = vmatpush1.bf16.msra.mxu0 %v1707
      %2531 = vmatprep.subr.bf16.mxu0 %v1716
      %2532 = vmatpush1.bf16.msra.mxu0 %v1715
      %2533 = vmatprep.subr.bf16.mxu0 %v1724
      %2534 = vmatpush1.bf16.msra.mxu0 %v1723
      %2535 = vmatprep.subr.bf16.mxu0 %v1732
      %2536 = vmatpush1.bf16.msra.mxu0 %v1731
      %2537 = vmatprep.subr.bf16.mxu0 %v1740
      %2538 = vmatpush1.bf16.msra.mxu0 %v1739
      %2539 = vmatprep.subr.bf16.mxu0 %v1748
      %2540 = vmatpush1.bf16.msra.mxu0 %v1747
      %2541 = vmatprep.mubr.bf16.mxu0 %v655
      %2542 = vmatmul.mubr.bf16.gmra.mrb[0].mxu0 %v641
      %v2543 = vpop.f32.mrb[0].mxu0
      %v2544 = vadd.f32 0.0, %v2543
      %v2545 = vpop.f32.mrb[0].mxu0
      %v2546 = vadd.f32 0.0, %v2545
      %v2547 = vpop.f32.mrb[0].mxu0
      %v2548 = vpop.f32.mrb[0].mxu0
      %2549 = vdwg.mxu0
      %2550 = vmatprep.subr.bf16.mxu0 %v1756
      %2551 = vmatpush1.bf16.msra.mxu0 %v1755
      %2552 = vmatprep.subr.bf16.mxu0 %v1764
      %2553 = vmatpush1.bf16.msra.mxu0 %v1763
      %2554 = vmatprep.subr.bf16.mxu0 %v1772
      %2555 = vmatpush1.bf16.msra.mxu0 %v1771
      %2556 = vmatprep.subr.bf16.mxu0 %v1780
      %2557 = vmatpush1.bf16.msra.mxu0 %v1779
      %2558 = vmatprep.subr.bf16.mxu0 %v1788
      %2559 = vmatpush1.bf16.msra.mxu0 %v1787
      %2560 = vmatprep.subr.bf16.mxu0 %v1796
      %2561 = vmatpush1.bf16.msra.mxu0 %v1795
      %2562 = vmatprep.subr.bf16.mxu0 %v1804
      %2563 = vmatpush1.bf16.msra.mxu0 %v1803
      %2564 = vmatprep.subr.bf16.mxu0 %v1812
      %2565 = vmatpush1.bf16.msra.mxu0 %v1811
      %2566 = vmatprep.subr.bf16.mxu0 %v1820
      %2567 = vmatpush1.bf16.msra.mxu0 %v1819
      %2568 = vmatprep.subr.bf16.mxu0 %v1828
      %2569 = vmatpush1.bf16.msra.mxu0 %v1827
      %2570 = vmatprep.subr.bf16.mxu0 %v1836
      %2571 = vmatpush1.bf16.msra.mxu0 %v1835
      %2572 = vmatprep.subr.bf16.mxu0 %v1844
      %2573 = vmatpush1.bf16.msra.mxu0 %v1843
      %2574 = vmatprep.subr.bf16.mxu0 %v1852
      %2575 = vmatpush1.bf16.msra.mxu0 %v1851
      %2576 = vmatprep.subr.bf16.mxu0 %v1860
      %2577 = vmatpush1.bf16.msra.mxu0 %v1859
      %2578 = vmatprep.subr.bf16.mxu0 %v1868
      %2579 = vmatpush1.bf16.msra.mxu0 %v1867
      %2580 = vmatprep.subr.bf16.mxu0 %v1876
      %2581 = vmatpush1.bf16.msra.mxu0 %v1875
      %2582 = vmatprep.mubr.bf16.mxu0 %v657
      %2583 = vmatmul.mubr.bf16.gmra.mrb[0].mxu0 %v656
      %v2584 = vpop.f32.mrb[0].mxu0
      %v2585 = vadd.f32 %v2544, %v2584
      %v2586 = vpop.f32.mrb[0].mxu0
      %v2587 = vadd.f32 %v2546, %v2586
      %v2588 = vpop.f32.mrb[0].mxu0
      %v2589 = vpop.f32.mrb[0].mxu0
      %2590 = vdwg.mxu0
      %2591 = vmatprep.subr.bf16.mxu0 %v1884
      %2592 = vmatpush1.bf16.msra.mxu0 %v1883
      %2593 = vmatprep.subr.bf16.mxu0 %v1892
      %2594 = vmatpush1.bf16.msra.mxu0 %v1891
      %2595 = vmatprep.subr.bf16.mxu0 %v1900
      %2596 = vmatpush1.bf16.msra.mxu0 %v1899
      %2597 = vmatprep.subr.bf16.mxu0 %v1908
      %2598 = vmatpush1.bf16.msra.mxu0 %v1907
      %2599 = vmatprep.subr.bf16.mxu0 %v1916
      %2600 = vmatpush1.bf16.msra.mxu0 %v1915
      %2601 = vmatprep.subr.bf16.mxu0 %v1924
      %2602 = vmatpush1.bf16.msra.mxu0 %v1923
      %2603 = vmatprep.subr.bf16.mxu0 %v1932
      %2604 = vmatpush1.bf16.msra.mxu0 %v1931
      %2605 = vmatprep.subr.bf16.mxu0 %v1940
      %2606 = vmatpush1.bf16.msra.mxu0 %v1939
      %2607 = vmatprep.subr.bf16.mxu0 0
      %2608 = vmatpush1.bf16.msra.mxu0 0
      %2609 = vmatprep.subr.bf16.mxu0 0
      %2610 = vmatpush1.bf16.msra.mxu0 0
      %2611 = vmatprep.subr.bf16.mxu0 0
      %2612 = vmatpush1.bf16.msra.mxu0 0
      %2613 = vmatprep.subr.bf16.mxu0 0
      %2614 = vmatpush1.bf16.msra.mxu0 0
      %2615 = vmatprep.subr.bf16.mxu0 0
      %2616 = vmatpush1.bf16.msra.mxu0 0
      %2617 = vmatprep.subr.bf16.mxu0 0
      %2618 = vmatpush1.bf16.msra.mxu0 0
      %2619 = vmatprep.subr.bf16.mxu0 0
      %2620 = vmatpush1.bf16.msra.mxu0 0
      %2621 = vmatprep.subr.bf16.mxu0 0
      %2622 = vmatpush1.bf16.msra.mxu0 0
      %2623 = vmatprep.mubr.bf16.mxu0 0
      %2624 = vmatmul.mubr.bf16.gmra.mrb[0].mxu0 %v648
      %v2625 = vpop.f32.mrb[0].mxu0
      %v2626 = vadd.f32 %v2585, %v2625
      %v2627 = vpop.f32.mrb[0].mxu0
      %v2628 = vadd.f32 %v2587, %v2627
      %v2629 = vpop.f32.mrb[0].mxu0
      %v2630 = vpop.f32.mrb[0].mxu0
      %2631 = vdwg.mxu0
      %2632 = vmatprep.subr.bf16.mxu0 %v1630
      %2633 = vmatpush1.bf16.msra.mxu0 %v1629
      %2634 = vmatprep.subr.bf16.mxu0 %v1638
      %2635 = vmatpush1.bf16.msra.mxu0 %v1637
      %2636 = vmatprep.subr.bf16.mxu0 %v1646
      %2637 = vmatpush1.bf16.msra.mxu0 %v1645
      %2638 = vmatprep.subr.bf16.mxu0 %v1654
      %2639 = vmatpush1.bf16.msra.mxu0 %v1653
      %2640 = vmatprep.subr.bf16.mxu0 %v1662
      %2641 = vmatpush1.bf16.msra.mxu0 %v1661
      %2642 = vmatprep.subr.bf16.mxu0 %v1670
      %2643 = vmatpush1.bf16.msra.mxu0 %v1669
      %2644 = vmatprep.subr.bf16.mxu0 %v1678
      %2645 = vmatpush1.bf16.msra.mxu0 %v1677
      %2646 = vmatprep.subr.bf16.mxu0 %v1686
      %2647 = vmatpush1.bf16.msra.mxu0 %v1685
      %2648 = vmatprep.subr.bf16.mxu0 %v1694
      %2649 = vmatpush1.bf16.msra.mxu0 %v1693
      %2650 = vmatprep.subr.bf16.mxu0 %v1702
      %2651 = vmatpush1.bf16.msra.mxu0 %v1701
      %2652 = vmatprep.subr.bf16.mxu0 %v1710
      %2653 = vmatpush1.bf16.msra.mxu0 %v1709
      %2654 = vmatprep.subr.bf16.mxu0 %v1718
      %2655 = vmatpush1.bf16.msra.mxu0 %v1717
      %2656 = vmatprep.subr.bf16.mxu0 %v1726
      %2657 = vmatpush1.bf16.msra.mxu0 %v1725
      %2658 = vmatprep.subr.bf16.mxu0 %v1734
      %2659 = vmatpush1.bf16.msra.mxu0 %v1733
      %2660 = vmatprep.subr.bf16.mxu0 %v1742
      %2661 = vmatpush1.bf16.msra.mxu0 %v1741
      %2662 = vmatprep.subr.bf16.mxu0 %v1750
      %2663 = vmatpush1.bf16.msra.mxu0 %v1749
      %2664 = vmatprep.mubr.bf16.mxu0 %v655
      %2665 = vmatmul.mubr.bf16.gmra.mrb[0].mxu0 %v641
      %v2666 = vpop.f32.mrb[0].mxu0
      %v2667 = vadd.f32 0.0, %v2666
      %v2668 = vpop.f32.mrb[0].mxu0
      %v2669 = vadd.f32 0.0, %v2668
      %v2670 = vpop.f32.mrb[0].mxu0
      %v2671 = vpop.f32.mrb[0].mxu0
      %2672 = vdwg.mxu0
      %2673 = vmatprep.subr.bf16.mxu0 %v1758
      %2674 = vmatpush1.bf16.msra.mxu0 %v1757
      %2675 = vmatprep.subr.bf16.mxu0 %v1766
      %2676 = vmatpush1.bf16.msra.mxu0 %v1765
      %2677 = vmatprep.subr.bf16.mxu0 %v1774
      %2678 = vmatpush1.bf16.msra.mxu0 %v1773
      %2679 = vmatprep.subr.bf16.mxu0 %v1782
      %2680 = vmatpush1.bf16.msra.mxu0 %v1781
      %2681 = vmatprep.subr.bf16.mxu0 %v1790
      %2682 = vmatpush1.bf16.msra.mxu0 %v1789
      %2683 = vmatprep.subr.bf16.mxu0 %v1798
      %2684 = vmatpush1.bf16.msra.mxu0 %v1797
      %2685 = vmatprep.subr.bf16.mxu0 %v1806
      %2686 = vmatpush1.bf16.msra.mxu0 %v1805
      %2687 = vmatprep.subr.bf16.mxu0 %v1814
      %2688 = vmatpush1.bf16.msra.mxu0 %v1813
      %2689 = vmatprep.subr.bf16.mxu0 %v1822
      %2690 = vmatpush1.bf16.msra.mxu0 %v1821
      %2691 = vmatprep.subr.bf16.mxu0 %v1830
      %2692 = vmatpush1.bf16.msra.mxu0 %v1829
      %2693 = vmatprep.subr.bf16.mxu0 %v1838
      %2694 = vmatpush1.bf16.msra.mxu0 %v1837
      %2695 = vmatprep.subr.bf16.mxu0 %v1846
      %2696 = vmatpush1.bf16.msra.mxu0 %v1845
      %2697 = vmatprep.subr.bf16.mxu0 %v1854
      %2698 = vmatpush1.bf16.msra.mxu0 %v1853
      %2699 = vmatprep.subr.bf16.mxu0 %v1862
      %2700 = vmatpush1.bf16.msra.mxu0 %v1861
      %2701 = vmatprep.subr.bf16.mxu0 %v1870
      %2702 = vmatpush1.bf16.msra.mxu0 %v1869
      %2703 = vmatprep.subr.bf16.mxu0 %v1878
      %2704 = vmatpush1.bf16.msra.mxu0 %v1877
      %2705 = vmatprep.mubr.bf16.mxu0 %v657
      %2706 = vmatmul.mubr.bf16.gmra.mrb[0].mxu0 %v656
      %v2707 = vpop.f32.mrb[0].mxu0
      %v2708 = vadd.f32 %v2667, %v2707
      %v2709 = vpop.f32.mrb[0].mxu0
      %v2710 = vadd.f32 %v2669, %v2709
      %v2711 = vpop.f32.mrb[0].mxu0
      %v2712 = vpop.f32.mrb[0].mxu0
      %2713 = vdwg.mxu0
      %2714 = vmatprep.subr.bf16.mxu0 %v1886
      %2715 = vmatpush1.bf16.msra.mxu0 %v1885
      %2716 = vmatprep.subr.bf16.mxu0 %v1894
      %2717 = vmatpush1.bf16.msra.mxu0 %v1893
      %2718 = vmatprep.subr.bf16.mxu0 %v1902
      %2719 = vmatpush1.bf16.msra.mxu0 %v1901
      %2720 = vmatprep.subr.bf16.mxu0 %v1910
      %2721 = vmatpush1.bf16.msra.mxu0 %v1909
      %2722 = vmatprep.subr.bf16.mxu0 %v1918
      %2723 = vmatpush1.bf16.msra.mxu0 %v1917
      %2724 = vmatprep.subr.bf16.mxu0 %v1926
      %2725 = vmatpush1.bf16.msra.mxu0 %v1925
      %2726 = vmatprep.subr.bf16.mxu0 %v1934
      %2727 = vmatpush1.bf16.msra.mxu0 %v1933
      %2728 = vmatprep.subr.bf16.mxu0 %v1942
      %2729 = vmatpush1.bf16.msra.mxu0 %v1941
      %2730 = vmatprep.subr.bf16.mxu0 0
      %2731 = vmatpush1.bf16.msra.mxu0 0
      %2732 = vmatprep.subr.bf16.mxu0 0
      %2733 = vmatpush1.bf16.msra.mxu0 0
      %2734 = vmatprep.subr.bf16.mxu0 0
      %2735 = vmatpush1.bf16.msra.mxu0 0
      %2736 = vmatprep.subr.bf16.mxu0 0
      %2737 = vmatpush1.bf16.msra.mxu0 0
      %2738 = vmatprep.subr.bf16.mxu0 0
      %2739 = vmatpush1.bf16.msra.mxu0 0
      %2740 = vmatprep.subr.bf16.mxu0 0
      %2741 = vmatpush1.bf16.msra.mxu0 0
      %2742 = vmatprep.subr.bf16.mxu0 0
      %2743 = vmatpush1.bf16.msra.mxu0 0
      %2744 = vmatprep.subr.bf16.mxu0 0
      %2745 = vmatpush1.bf16.msra.mxu0 0
      %2746 = vmatprep.mubr.bf16.mxu0 0
      %2747 = vmatmul.mubr.bf16.gmra.mrb[0].mxu0 %v648
      %v2748 = vpop.f32.mrb[0].mxu0
      %v2749 = vadd.f32 %v2708, %v2748
      %v2750 = vpop.f32.mrb[0].mxu0
      %v2751 = vadd.f32 %v2710, %v2750
      %v2752 = vpop.f32.mrb[0].mxu0
      %v2753 = vpop.f32.mrb[0].mxu0
      %2754 = vdwg.mxu0
      %v2763 = vcombine.low %v2380, %v2382
      %v2764 = vcombine.low %v2503, %v2505
      %v2766 = vunpack.c.l.s4 1983009808
      %v2767 = vunpack.c.0.s8 %v2766
      %v2768 = vlaneseq
      %v2769 = vshrl.u32 %v2768, 7
      %v2770 = vsub.s32 %v2767, %v2769
      %v2771 = vrot.slane %v2763, %v2770
      %v2773 = vunpack.c.l.s4 1983009808
      %v2774 = vunpack.c.0.s8 %v2773
      %v2775 = vlaneseq
      %v2776 = vshrl.u32 %v2775, 7
      %v2777 = vsub.s32 %v2774, %v2776
      %v2778 = vrot.slane %v2764, %v2777
      %v2779 = vcombine.low %v2771, %v2778
      %v2780 = vcombine.low %v2626, %v2628
      %v2781 = vcombine.low %v2749, %v2751
      %v2783 = vunpack.c.l.s4 1983009808
      %v2784 = vunpack.c.0.s8 %v2783
      %v2785 = vlaneseq
      %v2786 = vshrl.u32 %v2785, 7
      %v2787 = vsub.s32 %v2784, %v2786
      %v2788 = vrot.slane %v2780, %v2787
      %v2790 = vunpack.c.l.s4 1983009808
      %v2791 = vunpack.c.0.s8 %v2790
      %v2792 = vlaneseq
      %v2793 = vshrl.u32 %v2792, 7
      %v2794 = vsub.s32 %v2791, %v2793
      %v2795 = vrot.slane %v2781, %v2794
      %v2796 = vcombine.low %v2788, %v2795
      %v2799 = vadd.f32 %v295, %v2779
      %v2800 = vadd.f32 %v296, %v2796
      %2801 = vst [vmem:[#allocation2] sm:$0xff] %v2799
      %2802 = vst [vmem:[#allocation2 + $0x8] sm:$0xff] %v2800
      %p2803 = scmp.eq.s32.totalorder %s18, 4
      // Predicated region
      $region53: #{rainbow_dqn_forward.7} parent=47 // pred_check
        %p2804 = pneg %p2803
      $region54: #{rainbow_dqn_forward.7} parent=47 // pred_check_branch
        %2806 = sbr.rel (%p2804) target = $region56
      $region55: #{rainbow_dqn_forward.7} parent=47 // pred_region
        %v2807 = vld [vmem:[#allocation2] sm:$0xff]
        %v2808 = vld [vmem:[#allocation2 + $0x8] sm:$0xff]
        %v2809 = vld [vmem:[%s2] sm:$0xff]
        %v2811 = vlaneseq
        %v2812 = vshrl.u32 %v2811, 7
        %v2813 = vsub.s32 0, %v2812
        %v2814 = vrot.slane %v2809, %v2813
        %v2815 = vlaneseq
        %v2816 = vshrl.u32 %v2815, 7
        %v2817 = vsub.s32 1, %v2816
        %v2818 = vrot.slane %v2809, %v2817
        %v2819 = vlaneseq
        %v2820 = vshrl.u32 %v2819, 7
        %v2821 = vsub.s32 2, %v2820
        %v2822 = vrot.slane %v2809, %v2821
        %v2823 = vlaneseq
        %v2824 = vshrl.u32 %v2823, 7
        %v2825 = vsub.s32 3, %v2824
        %v2826 = vrot.slane %v2809, %v2825
        %v2827 = vlaneseq
        %v2828 = vshrl.u32 %v2827, 7
        %v2829 = vsub.s32 4, %v2828
        %v2830 = vrot.slane %v2809, %v2829
        %v2831 = vlaneseq
        %v2832 = vshrl.u32 %v2831, 7
        %v2833 = vsub.s32 5, %v2832
        %v2834 = vrot.slane %v2809, %v2833
        %v2835 = vlaneseq
        %v2836 = vshrl.u32 %v2835, 7
        %v2837 = vsub.s32 6, %v2836
        %v2838 = vrot.slane %v2809, %v2837
        %v2839 = vlaneseq
        %v2840 = vshrl.u32 %v2839, 7
        %v2841 = vsub.s32 7, %v2840
        %v2842 = vrot.slane %v2809, %v2841
        %v2843 = vcombine.low %v2814, %v2818
        %v2844 = vcombine.low %v2822, %v2826
        %v2846 = vunpack.c.l.s4 1983009808
        %v2847 = vunpack.c.0.s8 %v2846
        %v2848 = vlaneseq
        %v2849 = vshrl.u32 %v2848, 7
        %v2850 = vsub.s32 %v2847, %v2849
        %v2851 = vrot.slane %v2843, %v2850
        %v2853 = vunpack.c.l.s4 1983009808
        %v2854 = vunpack.c.0.s8 %v2853
        %v2855 = vlaneseq
        %v2856 = vshrl.u32 %v2855, 7
        %v2857 = vsub.s32 %v2854, %v2856
        %v2858 = vrot.slane %v2844, %v2857
        %v2859 = vcombine.low %v2851, %v2858
        %v2860 = vcombine.low %v2830, %v2834
        %v2861 = vcombine.low %v2838, %v2842
        %v2863 = vunpack.c.l.s4 1983009808
        %v2864 = vunpack.c.0.s8 %v2863
        %v2865 = vlaneseq
        %v2866 = vshrl.u32 %v2865, 7
        %v2867 = vsub.s32 %v2864, %v2866
        %v2868 = vrot.slane %v2860, %v2867
        %v2870 = vunpack.c.l.s4 1983009808
        %v2871 = vunpack.c.0.s8 %v2870
        %v2872 = vlaneseq
        %v2873 = vshrl.u32 %v2872, 7
        %v2874 = vsub.s32 %v2871, %v2873
        %v2875 = vrot.slane %v2861, %v2874
        %v2876 = vcombine.low %v2868, %v2875
        %v2879 = vadd.f32 %v2807, %v2859
        %v2880 = vadd.f32 %v2808, %v2876
        %v2881 = vmax.f32 %v2879, 0.0
        %v2882 = vmax.f32 %v2880, 0.0
        %v2884 = vcombine.high %v2881, %v2881
        %v2886 = vunpack.c.l.s4 1983009808
        %v2887 = vunpack.c.0.s8 %v2886
        %v2888 = vlaneseq
        %v2889 = vshrl.u32 %v2888, 7
        %v2890 = vsub.s32 %v2887, %v2889
        %v2891 = vrot.slane %v2881, %v2890
        %v2893 = vunpack.c.l.s4 1983009808
        %v2894 = vunpack.c.0.s8 %v2893
        %v2895 = vlaneseq
        %v2896 = vshrl.u32 %v2895, 7
        %v2897 = vsub.s32 %v2894, %v2896
        %v2898 = vrot.slane %v2884, %v2897
        %v2899 = vcombine.high %v2891, %v2891
        %v2900 = vcombine.high %v2898, %v2898
        %v2905 = vpack.c.bf16 %v2891, %v2891
        %v2906 = vpack.c.bf16 %v2899, %v2899
        %v2907 = vpack.c.bf16 %v2898, %v2898
        %v2908 = vpack.c.bf16 %v2900, %v2900
        %v2910 = vcombine.high %v2882, %v2882
        %v2912 = vunpack.c.l.s4 1983009808
        %v2913 = vunpack.c.0.s8 %v2912
        %v2914 = vlaneseq
        %v2915 = vshrl.u32 %v2914, 7
        %v2916 = vsub.s32 %v2913, %v2915
        %v2917 = vrot.slane %v2882, %v2916
        %v2919 = vunpack.c.l.s4 1983009808
        %v2920 = vunpack.c.0.s8 %v2919
        %v2921 = vlaneseq
        %v2922 = vshrl.u32 %v2921, 7
        %v2923 = vsub.s32 %v2920, %v2922
        %v2924 = vrot.slane %v2910, %v2923
        %v2925 = vcombine.high %v2917, %v2917
        %v2926 = vcombine.high %v2924, %v2924
        %v2931 = vpack.c.bf16 %v2917, %v2917
        %v2932 = vpack.c.bf16 %v2925, %v2925
        %v2933 = vpack.c.bf16 %v2924, %v2924
        %v2934 = vpack.c.bf16 %v2926, %v2926
        %v2935 = vld [vmem:[%s3] sm:$0xf]
        %v2936 = vld [vmem:[%s3 + $0x4] sm:$0xf]
        %v2937 = vld [vmem:[%s3 + $0x8] sm:$0xf]
        %v2938 = vld [vmem:[%s3 + $0xc] sm:$0xf]
        %v2939 = vld [vmem:[%s3 + $0x10] sm:$0xf]
        %v2940 = vld [vmem:[%s3 + $0x14] sm:$0xf]
        %v2941 = vld [vmem:[%s3 + $0x18] sm:$0xf]
        %v2942 = vld [vmem:[%s3 + $0x1c] sm:$0xf]
        %v2943 = vld [vmem:[%s3 + $0x20] sm:$0xf]
        %v2944 = vld [vmem:[%s3 + $0x24] sm:$0xf]
        %v2945 = vld [vmem:[%s3 + $0x28] sm:$0xf]
        %v2946 = vld [vmem:[%s3 + $0x2c] sm:$0xf]
        %v2947 = vld [vmem:[%s3 + $0x30] sm:$0xf]
        %v2948 = vld [vmem:[%s3 + $0x34] sm:$0xf]
        %v2949 = vld [vmem:[%s3 + $0x38] sm:$0xf]
        %v2950 = vld [vmem:[%s3 + $0x3c] sm:$0xf]
        %v2951 = vld [vmem:[%s3 + $0x40] sm:$0xf]
        %v2952 = vld [vmem:[%s3 + $0x44] sm:$0xf]
        %v2953 = vld [vmem:[%s3 + $0x48] sm:$0xf]
        %v2954 = vld [vmem:[%s3 + $0x4c] sm:$0xf]
        %v2955 = vld [vmem:[%s3 + $0x50] sm:$0xf]
        %v2956 = vld [vmem:[%s3 + $0x54] sm:$0xf]
        %v2957 = vld [vmem:[%s3 + $0x58] sm:$0xf]
        %v2958 = vld [vmem:[%s3 + $0x5c] sm:$0xf]
        %v2959 = vld [vmem:[%s3 + $0x60] sm:$0xf]
        %v2960 = vld [vmem:[%s3 + $0x64] sm:$0xf]
        %v2961 = vld [vmem:[%s3 + $0x68] sm:$0xf]
        %v2962 = vld [vmem:[%s3 + $0x6c] sm:$0xf]
        %v2963 = vld [vmem:[%s3 + $0x70] sm:$0xf]
        %v2964 = vld [vmem:[%s3 + $0x74] sm:$0xf]
        %v2965 = vld [vmem:[%s3 + $0x78] sm:$0xf]
        %v2966 = vld [vmem:[%s3 + $0x7c] sm:$0xf]
        %v2967 = vld [vmem:[%s3 + $0x80] sm:$0xf]
        %v2968 = vld [vmem:[%s3 + $0x84] sm:$0xf]
        %v2969 = vld [vmem:[%s3 + $0x88] sm:$0xf]
        %v2970 = vld [vmem:[%s3 + $0x8c] sm:$0xf]
        %v2971 = vld [vmem:[%s3 + $0x90] sm:$0xf]
        %v2972 = vld [vmem:[%s3 + $0x94] sm:$0xf]
        %v2973 = vld [vmem:[%s3 + $0x98] sm:$0xf]
        %v2974 = vld [vmem:[%s3 + $0x9c] sm:$0xf]
        %v2975 = vld [vmem:[%s3 + $0xa0] sm:$0xf]
        %v2976 = vld [vmem:[%s3 + $0xa4] sm:$0xf]
        %v2977 = vld [vmem:[%s3 + $0xa8] sm:$0xf]
        %v2978 = vld [vmem:[%s3 + $0xac] sm:$0xf]
        %v2979 = vld [vmem:[%s3 + $0xb0] sm:$0xf]
        %v2980 = vld [vmem:[%s3 + $0xb4] sm:$0xf]
        %v2981 = vld [vmem:[%s3 + $0xb8] sm:$0xf]
        %v2982 = vld [vmem:[%s3 + $0xbc] sm:$0xf]
        %v2983 = vld [vmem:[%s3 + $0xc0] sm:$0xf]
        %v2984 = vld [vmem:[%s3 + $0xc4] sm:$0xf]
        %v2985 = vld [vmem:[%s3 + $0xc8] sm:$0xf]
        %v2986 = vld [vmem:[%s3 + $0xcc] sm:$0xf]
        %v2987 = vld [vmem:[%s3 + $0xd0] sm:$0xf]
        %v2988 = vld [vmem:[%s3 + $0xd4] sm:$0xf]
        %v2989 = vld [vmem:[%s3 + $0xd8] sm:$0xf]
        %v2990 = vld [vmem:[%s3 + $0xdc] sm:$0xf]
        %v2991 = vld [vmem:[%s3 + $0xe0] sm:$0xf]
        %v2992 = vld [vmem:[%s3 + $0xe4] sm:$0xf]
        %v2993 = vld [vmem:[%s3 + $0xe8] sm:$0xf]
        %v2994 = vld [vmem:[%s3 + $0xec] sm:$0xf]
        %v2995 = vld [vmem:[%s3 + $0xf0] sm:$0xf]
        %v2996 = vld [vmem:[%s3 + $0xf4] sm:$0xf]
        %v2997 = vld [vmem:[%s3 + $0xf8] sm:$0xf]
        %v2998 = vld [vmem:[%s3 + $0xfc] sm:$0xf]
        %v2999 = vld [vmem:[%s4] sm:$0x1]
        %v3001 = vlaneseq
        %v3002 = vshrl.u32 %v3001, 7
        %v3003 = vsub.s32 0, %v3002
        %v3004 = vrot.slane %v2999, %v3003
        %v3070 = vunpack.c.l.b16 %v2935
        %v3071 = vunpack.c.l.b16 %v2936
        %v3072 = vunpack.c.l.b16 %v2937
        %v3073 = vunpack.c.l.b16 %v2938
        %v3074 = vunpack.c.l.b16 %v2939
        %v3075 = vunpack.c.l.b16 %v2940
        %v3076 = vunpack.c.l.b16 %v2941
        %v3077 = vunpack.c.l.b16 %v2942
        %v3078 = vunpack.c.l.b16 %v2943
        %v3079 = vunpack.c.l.b16 %v2944
        %v3080 = vunpack.c.l.b16 %v2945
        %v3081 = vunpack.c.l.b16 %v2946
        %v3082 = vunpack.c.l.b16 %v2947
        %v3083 = vunpack.c.l.b16 %v2948
        %v3084 = vunpack.c.l.b16 %v2949
        %v3085 = vunpack.c.l.b16 %v2950
        %v3086 = vunpack.c.l.b16 %v2951
        %v3087 = vunpack.c.l.b16 %v2952
        %v3088 = vunpack.c.l.b16 %v2953
        %v3089 = vunpack.c.l.b16 %v2954
        %v3090 = vunpack.c.l.b16 %v2955
        %v3091 = vunpack.c.l.b16 %v2956
        %v3092 = vunpack.c.l.b16 %v2957
        %v3093 = vunpack.c.l.b16 %v2958
        %v3094 = vunpack.c.l.b16 %v2959
        %v3095 = vunpack.c.l.b16 %v2960
        %v3096 = vunpack.c.l.b16 %v2961
        %v3097 = vunpack.c.l.b16 %v2962
        %v3098 = vunpack.c.l.b16 %v2963
        %v3099 = vunpack.c.l.b16 %v2964
        %v3100 = vunpack.c.l.b16 %v2965
        %v3101 = vunpack.c.l.b16 %v2966
        %v3102 = vunpack.c.l.b16 %v2967
        %v3103 = vunpack.c.l.b16 %v2968
        %v3104 = vunpack.c.l.b16 %v2969
        %v3105 = vunpack.c.l.b16 %v2970
        %v3106 = vunpack.c.l.b16 %v2971
        %v3107 = vunpack.c.l.b16 %v2972
        %v3108 = vunpack.c.l.b16 %v2973
        %v3109 = vunpack.c.l.b16 %v2974
        %v3110 = vunpack.c.l.b16 %v2975
        %v3111 = vunpack.c.l.b16 %v2976
        %v3112 = vunpack.c.l.b16 %v2977
        %v3113 = vunpack.c.l.b16 %v2978
        %v3114 = vunpack.c.l.b16 %v2979
        %v3115 = vunpack.c.l.b16 %v2980
        %v3116 = vunpack.c.l.b16 %v2981
        %v3117 = vunpack.c.l.b16 %v2982
        %v3118 = vunpack.c.l.b16 %v2983
        %v3119 = vunpack.c.l.b16 %v2984
        %v3120 = vunpack.c.l.b16 %v2985
        %v3121 = vunpack.c.l.b16 %v2986
        %v3122 = vunpack.c.l.b16 %v2987
        %v3123 = vunpack.c.l.b16 %v2988
        %v3124 = vunpack.c.l.b16 %v2989
        %v3125 = vunpack.c.l.b16 %v2990
        %v3126 = vunpack.c.l.b16 %v2991
        %v3127 = vunpack.c.l.b16 %v2992
        %v3128 = vunpack.c.l.b16 %v2993
        %v3129 = vunpack.c.l.b16 %v2994
        %v3130 = vunpack.c.l.b16 %v2995
        %v3131 = vunpack.c.l.b16 %v2996
        %v3132 = vunpack.c.l.b16 %v2997
        %v3133 = vunpack.c.l.b16 %v2998
        %v3134 = vpack.c.b16 %v3071, %v3070
        %v3135 = vpack.c.b16 %v3073, %v3072
        %v3136 = vpack.c.b16 %v3075, %v3074
        %v3137 = vpack.c.b16 %v3077, %v3076
        %v3138 = vpack.c.b16 %v3079, %v3078
        %v3139 = vpack.c.b16 %v3081, %v3080
        %v3140 = vpack.c.b16 %v3083, %v3082
        %v3141 = vpack.c.b16 %v3085, %v3084
        %v3142 = vpack.c.b16 %v3087, %v3086
        %v3143 = vpack.c.b16 %v3089, %v3088
        %v3144 = vpack.c.b16 %v3091, %v3090
        %v3145 = vpack.c.b16 %v3093, %v3092
        %v3146 = vpack.c.b16 %v3095, %v3094
        %v3147 = vpack.c.b16 %v3097, %v3096
        %v3148 = vpack.c.b16 %v3099, %v3098
        %v3149 = vpack.c.b16 %v3101, %v3100
        %v3150 = vpack.c.b16 %v3103, %v3102
        %v3151 = vpack.c.b16 %v3105, %v3104
        %v3152 = vpack.c.b16 %v3107, %v3106
        %v3153 = vpack.c.b16 %v3109, %v3108
        %v3154 = vpack.c.b16 %v3111, %v3110
        %v3155 = vpack.c.b16 %v3113, %v3112
        %v3156 = vpack.c.b16 %v3115, %v3114
        %v3157 = vpack.c.b16 %v3117, %v3116
        %v3158 = vpack.c.b16 %v3119, %v3118
        %v3159 = vpack.c.b16 %v3121, %v3120
        %v3160 = vpack.c.b16 %v3123, %v3122
        %v3161 = vpack.c.b16 %v3125, %v3124
        %v3162 = vpack.c.b16 %v3127, %v3126
        %v3163 = vpack.c.b16 %v3129, %v3128
        %v3164 = vpack.c.b16 %v3131, %v3130
        %v3165 = vpack.c.b16 %v3133, %v3132
        %3198 = vmatprep.subr.bf16.mxu0 0
        %3199 = vmatpush1.bf16.msra.mxu0 %v3134
        %3200 = vmatprep.subr.bf16.mxu0 0
        %3201 = vmatpush1.bf16.msra.mxu0 %v3135
        %3202 = vmatprep.subr.bf16.mxu0 0
        %3203 = vmatpush1.bf16.msra.mxu0 %v3136
        %3204 = vmatprep.subr.bf16.mxu0 0
        %3205 = vmatpush1.bf16.msra.mxu0 %v3137
        %3206 = vmatprep.subr.bf16.mxu0 0
        %3207 = vmatpush1.bf16.msra.mxu0 %v3138
        %3208 = vmatprep.subr.bf16.mxu0 0
        %3209 = vmatpush1.bf16.msra.mxu0 %v3139
        %3210 = vmatprep.subr.bf16.mxu0 0
        %3211 = vmatpush1.bf16.msra.mxu0 %v3140
        %3212 = vmatprep.subr.bf16.mxu0 0
        %3213 = vmatpush1.bf16.msra.mxu0 %v3141
        %3214 = vmatprep.subr.bf16.mxu0 0
        %3215 = vmatpush1.bf16.msra.mxu0 %v3142
        %3216 = vmatprep.subr.bf16.mxu0 0
        %3217 = vmatpush1.bf16.msra.mxu0 %v3143
        %3218 = vmatprep.subr.bf16.mxu0 0
        %3219 = vmatpush1.bf16.msra.mxu0 %v3144
        %3220 = vmatprep.subr.bf16.mxu0 0
        %3221 = vmatpush1.bf16.msra.mxu0 %v3145
        %3222 = vmatprep.subr.bf16.mxu0 0
        %3223 = vmatpush1.bf16.msra.mxu0 %v3146
        %3224 = vmatprep.subr.bf16.mxu0 0
        %3225 = vmatpush1.bf16.msra.mxu0 %v3147
        %3226 = vmatprep.subr.bf16.mxu0 0
        %3227 = vmatpush1.bf16.msra.mxu0 %v3148
        %3228 = vmatprep.subr.bf16.mxu0 0
        %3229 = vmatpush1.bf16.msra.mxu0 %v3149
        %3230 = vmatprep.mubr.bf16.mxu0 %v2906
        %3231 = vmatmul.mubr.bf16.gmra.mrb[0].mxu0 %v2905
        %v3232 = vpop.f32.mrb[0].mxu0
        %v3233 = vadd.f32 %v3004, %v3232
        %v3234 = vpop.f32.mrb[0].mxu0
        %v3235 = vpop.f32.mrb[0].mxu0
        %v3236 = vpop.f32.mrb[0].mxu0
        %3237 = vdwg.mxu0
        %3238 = vmatprep.subr.bf16.mxu0 0
        %3239 = vmatpush1.bf16.msra.mxu0 %v3150
        %3240 = vmatprep.subr.bf16.mxu0 0
        %3241 = vmatpush1.bf16.msra.mxu0 %v3151
        %3242 = vmatprep.subr.bf16.mxu0 0
        %3243 = vmatpush1.bf16.msra.mxu0 %v3152
        %3244 = vmatprep.subr.bf16.mxu0 0
        %3245 = vmatpush1.bf16.msra.mxu0 %v3153
        %3246 = vmatprep.subr.bf16.mxu0 0
        %3247 = vmatpush1.bf16.msra.mxu0 %v3154
        %3248 = vmatprep.subr.bf16.mxu0 0
        %3249 = vmatpush1.bf16.msra.mxu0 %v3155
        %3250 = vmatprep.subr.bf16.mxu0 0
        %3251 = vmatpush1.bf16.msra.mxu0 %v3156
        %3252 = vmatprep.subr.bf16.mxu0 0
        %3253 = vmatpush1.bf16.msra.mxu0 %v3157
        %3254 = vmatprep.subr.bf16.mxu0 0
        %3255 = vmatpush1.bf16.msra.mxu0 %v3158
        %3256 = vmatprep.subr.bf16.mxu0 0
        %3257 = vmatpush1.bf16.msra.mxu0 %v3159
        %3258 = vmatprep.subr.bf16.mxu0 0
        %3259 = vmatpush1.bf16.msra.mxu0 %v3160
        %3260 = vmatprep.subr.bf16.mxu0 0
        %3261 = vmatpush1.bf16.msra.mxu0 %v3161
        %3262 = vmatprep.subr.bf16.mxu0 0
        %3263 = vmatpush1.bf16.msra.mxu0 %v3162
        %3264 = vmatprep.subr.bf16.mxu0 0
        %3265 = vmatpush1.bf16.msra.mxu0 %v3163
        %3266 = vmatprep.subr.bf16.mxu0 0
        %3267 = vmatpush1.bf16.msra.mxu0 %v3164
        %3268 = vmatprep.subr.bf16.mxu0 0
        %3269 = vmatpush1.bf16.msra.mxu0 %v3165
        %3270 = vmatprep.mubr.bf16.mxu0 %v2908
        %3271 = vmatmul.mubr.bf16.gmra.mrb[0].mxu0 %v2907
        %v3272 = vpop.f32.mrb[0].mxu0
        %v3273 = vadd.f32 %v3233, %v3272
        %v3274 = vpop.f32.mrb[0].mxu0
        %v3275 = vpop.f32.mrb[0].mxu0
        %v3276 = vpop.f32.mrb[0].mxu0
        %3277 = vdwg.mxu0
        %v3278 = vld [vmem:[%s5] sm:$0xff]
        %v3279 = vld [vmem:[%s5 + $0x8] sm:$0xf]
        %v3280 = vld [vmem:[%s5 + $0xc] sm:$0xff]
        %v3281 = vld [vmem:[%s5 + $0x14] sm:$0xf]
        %v3282 = vld [vmem:[%s5 + $0x18] sm:$0xff]
        %v3283 = vld [vmem:[%s5 + $0x20] sm:$0xf]
        %v3284 = vld [vmem:[%s5 + $0x24] sm:$0xff]
        %v3285 = vld [vmem:[%s5 + $0x2c] sm:$0xf]
        %v3286 = vld [vmem:[%s5 + $0x30] sm:$0xff]
        %v3287 = vld [vmem:[%s5 + $0x38] sm:$0xf]
        %v3288 = vld [vmem:[%s5 + $0x3c] sm:$0xff]
        %v3289 = vld [vmem:[%s5 + $0x44] sm:$0xf]
        %v3290 = vld [vmem:[%s5 + $0x48] sm:$0xff]
        %v3291 = vld [vmem:[%s5 + $0x50] sm:$0xf]
        %v3292 = vld [vmem:[%s5 + $0x54] sm:$0xff]
        %v3293 = vld [vmem:[%s5 + $0x5c] sm:$0xf]
        %v3294 = vld [vmem:[%s5 + $0x60] sm:$0xff]
        %v3295 = vld [vmem:[%s5 + $0x68] sm:$0xf]
        %v3296 = vld [vmem:[%s5 + $0x6c] sm:$0xff]
        %v3297 = vld [vmem:[%s5 + $0x74] sm:$0xf]
        %v3298 = vld [vmem:[%s5 + $0x78] sm:$0xff]
        %v3299 = vld [vmem:[%s5 + $0x80] sm:$0xf]
        %v3300 = vld [vmem:[%s5 + $0x84] sm:$0xff]
        %v3301 = vld [vmem:[%s5 + $0x8c] sm:$0xf]
        %v3302 = vld [vmem:[%s5 + $0x90] sm:$0xff]
        %v3303 = vld [vmem:[%s5 + $0x98] sm:$0xf]
        %v3304 = vld [vmem:[%s5 + $0x9c] sm:$0xff]
        %v3305 = vld [vmem:[%s5 + $0xa4] sm:$0xf]
        %v3306 = vld [vmem:[%s5 + $0xa8] sm:$0xff]
        %v3307 = vld [vmem:[%s5 + $0xb0] sm:$0xf]
        %v3308 = vld [vmem:[%s5 + $0xb4] sm:$0xff]
        %v3309 = vld [vmem:[%s5 + $0xbc] sm:$0xf]
        %v3310 = vld [vmem:[%s5 + $0xc0] sm:$0xff]
        %v3311 = vld [vmem:[%s5 + $0xc8] sm:$0xf]
        %v3312 = vld [vmem:[%s5 + $0xcc] sm:$0xff]
        %v3313 = vld [vmem:[%s5 + $0xd4] sm:$0xf]
        %v3314 = vld [vmem:[%s5 + $0xd8] sm:$0xff]
        %v3315 = vld [vmem:[%s5 + $0xe0] sm:$0xf]
        %v3316 = vld [vmem:[%s5 + $0xe4] sm:$0xff]
        %v3317 = vld [vmem:[%s5 + $0xec] sm:$0xf]
        %v3318 = vld [vmem:[%s5 + $0xf0] sm:$0xff]
        %v3319 = vld [vmem:[%s5 + $0xf8] sm:$0xf]
        %v3320 = vld [vmem:[%s5 + $0xfc] sm:$0xff]
        %v3321 = vld [vmem:[%s5 + $0x104] sm:$0xf]
        %v3322 = vld [vmem:[%s5 + $0x108] sm:$0xff]
        %v3323 = vld [vmem:[%s5 + $0x110] sm:$0xf]
        %v3324 = vld [vmem:[%s5 + $0x114] sm:$0xff]
        %v3325 = vld [vmem:[%s5 + $0x11c] sm:$0xf]
        %v3326 = vld [vmem:[%s5 + $0x120] sm:$0xff]
        %v3327 = vld [vmem:[%s5 + $0x128] sm:$0xf]
        %v3328 = vld [vmem:[%s5 + $0x12c] sm:$0xff]
        %v3329 = vld [vmem:[%s5 + $0x134] sm:$0xf]
        %v3330 = vld [vmem:[%s5 + $0x138] sm:$0xff]
        %v3331 = vld [vmem:[%s5 + $0x140] sm:$0xf]
        %v3332 = vld [vmem:[%s5 + $0x144] sm:$0xff]
        %v3333 = vld [vmem:[%s5 + $0x14c] sm:$0xf]
        %v3334 = vld [vmem:[%s5 + $0x150] sm:$0xff]
        %v3335 = vld [vmem:[%s5 + $0x158] sm:$0xf]
        %v3336 = vld [vmem:[%s5 + $0x15c] sm:$0xff]
        %v3337 = vld [vmem:[%s5 + $0x164] sm:$0xf]
        %v3338 = vld [vmem:[%s5 + $0x168] sm:$0xff]
        %v3339 = vld [vmem:[%s5 + $0x170] sm:$0xf]
        %v3340 = vld [vmem:[%s5 + $0x174] sm:$0xff]
        %v3341 = vld [vmem:[%s5 + $0x17c] sm:$0xf]
        %v3342 = vld [vmem:[%s5 + $0x180] sm:$0xff]
        %v3343 = vld [vmem:[%s5 + $0x188] sm:$0xf]
        %v3344 = vld [vmem:[%s5 + $0x18c] sm:$0xff]
        %v3345 = vld [vmem:[%s5 + $0x194] sm:$0xf]
        %v3346 = vld [vmem:[%s5 + $0x198] sm:$0xff]
        %v3347 = vld [vmem:[%s5 + $0x1a0] sm:$0xf]
        %v3348 = vld [vmem:[%s5 + $0x1a4] sm:$0xff]
        %v3349 = vld [vmem:[%s5 + $0x1ac] sm:$0xf]
        %v3350 = vld [vmem:[%s5 + $0x1b0] sm:$0xff]
        %v3351 = vld [vmem:[%s5 + $0x1b8] sm:$0xf]
        %v3352 = vld [vmem:[%s5 + $0x1bc] sm:$0xff]
        %v3353 = vld [vmem:[%s5 + $0x1c4] sm:$0xf]
        %v3354 = vld [vmem:[%s5 + $0x1c8] sm:$0xff]
        %v3355 = vld [vmem:[%s5 + $0x1d0] sm:$0xf]
        %v3356 = vld [vmem:[%s5 + $0x1d4] sm:$0xff]
        %v3357 = vld [vmem:[%s5 + $0x1dc] sm:$0xf]
        %v3358 = vld [vmem:[%s5 + $0x1e0] sm:$0xff]
        %v3359 = vld [vmem:[%s5 + $0x1e8] sm:$0xf]
        %v3360 = vld [vmem:[%s5 + $0x1ec] sm:$0xff]
        %v3361 = vld [vmem:[%s5 + $0x1f4] sm:$0xf]
        %v3362 = vld [vmem:[%s5 + $0x1f8] sm:$0xff]
        %v3363 = vld [vmem:[%s5 + $0x200] sm:$0xf]
        %v3364 = vld [vmem:[%s5 + $0x204] sm:$0xff]
        %v3365 = vld [vmem:[%s5 + $0x20c] sm:$0xf]
        %v3366 = vld [vmem:[%s5 + $0x210] sm:$0xff]
        %v3367 = vld [vmem:[%s5 + $0x218] sm:$0xf]
        %v3368 = vld [vmem:[%s5 + $0x21c] sm:$0xff]
        %v3369 = vld [vmem:[%s5 + $0x224] sm:$0xf]
        %v3370 = vld [vmem:[%s5 + $0x228] sm:$0xff]
        %v3371 = vld [vmem:[%s5 + $0x230] sm:$0xf]
        %v3372 = vld [vmem:[%s5 + $0x234] sm:$0xff]
        %v3373 = vld [vmem:[%s5 + $0x23c] sm:$0xf]
        %v3374 = vld [vmem:[%s5 + $0x240] sm:$0xff]
        %v3375 = vld [vmem:[%s5 + $0x248] sm:$0xf]
        %v3376 = vld [vmem:[%s5 + $0x24c] sm:$0xff]
        %v3377 = vld [vmem:[%s5 + $0x254] sm:$0xf]
        %v3378 = vld [vmem:[%s5 + $0x258] sm:$0xff]
        %v3379 = vld [vmem:[%s5 + $0x260] sm:$0xf]
        %v3380 = vld [vmem:[%s5 + $0x264] sm:$0xff]
        %v3381 = vld [vmem:[%s5 + $0x26c] sm:$0xf]
        %v3382 = vld [vmem:[%s5 + $0x270] sm:$0xff]
        %v3383 = vld [vmem:[%s5 + $0x278] sm:$0xf]
        %v3384 = vld [vmem:[%s5 + $0x27c] sm:$0xff]
        %v3385 = vld [vmem:[%s5 + $0x284] sm:$0xf]
        %v3386 = vld [vmem:[%s5 + $0x288] sm:$0xff]
        %v3387 = vld [vmem:[%s5 + $0x290] sm:$0xf]
        %v3388 = vld [vmem:[%s5 + $0x294] sm:$0xff]
        %v3389 = vld [vmem:[%s5 + $0x29c] sm:$0xf]
        %v3390 = vld [vmem:[%s5 + $0x2a0] sm:$0xff]
        %v3391 = vld [vmem:[%s5 + $0x2a8] sm:$0xf]
        %v3392 = vld [vmem:[%s5 + $0x2ac] sm:$0xff]
        %v3393 = vld [vmem:[%s5 + $0x2b4] sm:$0xf]
        %v3394 = vld [vmem:[%s5 + $0x2b8] sm:$0xff]
        %v3395 = vld [vmem:[%s5 + $0x2c0] sm:$0xf]
        %v3396 = vld [vmem:[%s5 + $0x2c4] sm:$0xff]
        %v3397 = vld [vmem:[%s5 + $0x2cc] sm:$0xf]
        %v3398 = vld [vmem:[%s5 + $0x2d0] sm:$0xff]
        %v3399 = vld [vmem:[%s5 + $0x2d8] sm:$0xf]
        %v3400 = vld [vmem:[%s5 + $0x2dc] sm:$0xff]
        %v3401 = vld [vmem:[%s5 + $0x2e4] sm:$0xf]
        %v3402 = vld [vmem:[%s5 + $0x2e8] sm:$0xff]
        %v3403 = vld [vmem:[%s5 + $0x2f0] sm:$0xf]
        %v3404 = vld [vmem:[%s5 + $0x2f4] sm:$0xff]
        %v3405 = vld [vmem:[%s5 + $0x2fc] sm:$0xf]
        %v3406 = vld [vmem:[%s6] sm:$0x7]
        %v3408 = vlaneseq
        %v3409 = vshrl.u32 %v3408, 7
        %v3410 = vsub.s32 0, %v3409
        %v3411 = vrot.slane %v3406, %v3410
        %v3412 = vlaneseq
        %v3413 = vshrl.u32 %v3412, 7
        %v3414 = vsub.s32 1, %v3413
        %v3415 = vrot.slane %v3406, %v3414
        %v3416 = vlaneseq
        %v3417 = vshrl.u32 %v3416, 7
        %v3418 = vsub.s32 2, %v3417
        %v3419 = vrot.slane %v3406, %v3418
        %v3551 = vunpack.c.l.b16 %v3278
        %v3552 = vunpack.c.h.b16 %v3278
        %v3553 = vunpack.c.l.b16 %v3279
        %v3554 = vunpack.c.l.b16 %v3280
        %v3555 = vunpack.c.h.b16 %v3280
        %v3556 = vunpack.c.l.b16 %v3281
        %v3557 = vunpack.c.l.b16 %v3282
        %v3558 = vunpack.c.h.b16 %v3282
        %v3559 = vunpack.c.l.b16 %v3283
        %v3560 = vunpack.c.l.b16 %v3284
        %v3561 = vunpack.c.h.b16 %v3284
        %v3562 = vunpack.c.l.b16 %v3285
        %v3563 = vunpack.c.l.b16 %v3286
        %v3564 = vunpack.c.h.b16 %v3286
        %v3565 = vunpack.c.l.b16 %v3287
        %v3566 = vunpack.c.l.b16 %v3288
        %v3567 = vunpack.c.h.b16 %v3288
        %v3568 = vunpack.c.l.b16 %v3289
        %v3569 = vunpack.c.l.b16 %v3290
        %v3570 = vunpack.c.h.b16 %v3290
        %v3571 = vunpack.c.l.b16 %v3291
        %v3572 = vunpack.c.l.b16 %v3292
        %v3573 = vunpack.c.h.b16 %v3292
        %v3574 = vunpack.c.l.b16 %v3293
        %v3575 = vunpack.c.l.b16 %v3294
        %v3576 = vunpack.c.h.b16 %v3294
        %v3577 = vunpack.c.l.b16 %v3295
        %v3578 = vunpack.c.l.b16 %v3296
        %v3579 = vunpack.c.h.b16 %v3296
        %v3580 = vunpack.c.l.b16 %v3297
        %v3581 = vunpack.c.l.b16 %v3298
        %v3582 = vunpack.c.h.b16 %v3298
        %v3583 = vunpack.c.l.b16 %v3299
        %v3584 = vunpack.c.l.b16 %v3300
        %v3585 = vunpack.c.h.b16 %v3300
        %v3586 = vunpack.c.l.b16 %v3301
        %v3587 = vunpack.c.l.b16 %v3302
        %v3588 = vunpack.c.h.b16 %v3302
        %v3589 = vunpack.c.l.b16 %v3303
        %v3590 = vunpack.c.l.b16 %v3304
        %v3591 = vunpack.c.h.b16 %v3304
        %v3592 = vunpack.c.l.b16 %v3305
        %v3593 = vunpack.c.l.b16 %v3306
        %v3594 = vunpack.c.h.b16 %v3306
        %v3595 = vunpack.c.l.b16 %v3307
        %v3596 = vunpack.c.l.b16 %v3308
        %v3597 = vunpack.c.h.b16 %v3308
        %v3598 = vunpack.c.l.b16 %v3309
        %v3599 = vunpack.c.l.b16 %v3310
        %v3600 = vunpack.c.h.b16 %v3310
        %v3601 = vunpack.c.l.b16 %v3311
        %v3602 = vunpack.c.l.b16 %v3312
        %v3603 = vunpack.c.h.b16 %v3312
        %v3604 = vunpack.c.l.b16 %v3313
        %v3605 = vunpack.c.l.b16 %v3314
        %v3606 = vunpack.c.h.b16 %v3314
        %v3607 = vunpack.c.l.b16 %v3315
        %v3608 = vunpack.c.l.b16 %v3316
        %v3609 = vunpack.c.h.b16 %v3316
        %v3610 = vunpack.c.l.b16 %v3317
        %v3611 = vunpack.c.l.b16 %v3318
        %v3612 = vunpack.c.h.b16 %v3318
        %v3613 = vunpack.c.l.b16 %v3319
        %v3614 = vunpack.c.l.b16 %v3320
        %v3615 = vunpack.c.h.b16 %v3320
        %v3616 = vunpack.c.l.b16 %v3321
        %v3617 = vunpack.c.l.b16 %v3322
        %v3618 = vunpack.c.h.b16 %v3322
        %v3619 = vunpack.c.l.b16 %v3323
        %v3620 = vunpack.c.l.b16 %v3324
        %v3621 = vunpack.c.h.b16 %v3324
        %v3622 = vunpack.c.l.b16 %v3325
        %v3623 = vunpack.c.l.b16 %v3326
        %v3624 = vunpack.c.h.b16 %v3326
        %v3625 = vunpack.c.l.b16 %v3327
        %v3626 = vunpack.c.l.b16 %v3328
        %v3627 = vunpack.c.h.b16 %v3328
        %v3628 = vunpack.c.l.b16 %v3329
        %v3629 = vunpack.c.l.b16 %v3330
        %v3630 = vunpack.c.h.b16 %v3330
        %v3631 = vunpack.c.l.b16 %v3331
        %v3632 = vunpack.c.l.b16 %v3332
        %v3633 = vunpack.c.h.b16 %v3332
        %v3634 = vunpack.c.l.b16 %v3333
        %v3635 = vunpack.c.l.b16 %v3334
        %v3636 = vunpack.c.h.b16 %v3334
        %v3637 = vunpack.c.l.b16 %v3335
        %v3638 = vunpack.c.l.b16 %v3336
        %v3639 = vunpack.c.h.b16 %v3336
        %v3640 = vunpack.c.l.b16 %v3337
        %v3641 = vunpack.c.l.b16 %v3338
        %v3642 = vunpack.c.h.b16 %v3338
        %v3643 = vunpack.c.l.b16 %v3339
        %v3644 = vunpack.c.l.b16 %v3340
        %v3645 = vunpack.c.h.b16 %v3340
        %v3646 = vunpack.c.l.b16 %v3341
        %v3647 = vunpack.c.l.b16 %v3342
        %v3648 = vunpack.c.h.b16 %v3342
        %v3649 = vunpack.c.l.b16 %v3343
        %v3650 = vunpack.c.l.b16 %v3344
        %v3651 = vunpack.c.h.b16 %v3344
        %v3652 = vunpack.c.l.b16 %v3345
        %v3653 = vunpack.c.l.b16 %v3346
        %v3654 = vunpack.c.h.b16 %v3346
        %v3655 = vunpack.c.l.b16 %v3347
        %v3656 = vunpack.c.l.b16 %v3348
        %v3657 = vunpack.c.h.b16 %v3348
        %v3658 = vunpack.c.l.b16 %v3349
        %v3659 = vunpack.c.l.b16 %v3350
        %v3660 = vunpack.c.h.b16 %v3350
        %v3661 = vunpack.c.l.b16 %v3351
        %v3662 = vunpack.c.l.b16 %v3352
        %v3663 = vunpack.c.h.b16 %v3352
        %v3664 = vunpack.c.l.b16 %v3353
        %v3665 = vunpack.c.l.b16 %v3354
        %v3666 = vunpack.c.h.b16 %v3354
        %v3667 = vunpack.c.l.b16 %v3355
        %v3668 = vunpack.c.l.b16 %v3356
        %v3669 = vunpack.c.h.b16 %v3356
        %v3670 = vunpack.c.l.b16 %v3357
        %v3671 = vunpack.c.l.b16 %v3358
        %v3672 = vunpack.c.h.b16 %v3358
        %v3673 = vunpack.c.l.b16 %v3359
        %v3674 = vunpack.c.l.b16 %v3360
        %v3675 = vunpack.c.h.b16 %v3360
        %v3676 = vunpack.c.l.b16 %v3361
        %v3677 = vunpack.c.l.b16 %v3362
        %v3678 = vunpack.c.h.b16 %v3362
        %v3679 = vunpack.c.l.b16 %v3363
        %v3680 = vunpack.c.l.b16 %v3364
        %v3681 = vunpack.c.h.b16 %v3364
        %v3682 = vunpack.c.l.b16 %v3365
        %v3683 = vunpack.c.l.b16 %v3366
        %v3684 = vunpack.c.h.b16 %v3366
        %v3685 = vunpack.c.l.b16 %v3367
        %v3686 = vunpack.c.l.b16 %v3368
        %v3687 = vunpack.c.h.b16 %v3368
        %v3688 = vunpack.c.l.b16 %v3369
        %v3689 = vunpack.c.l.b16 %v3370
        %v3690 = vunpack.c.h.b16 %v3370
        %v3691 = vunpack.c.l.b16 %v3371
        %v3692 = vunpack.c.l.b16 %v3372
        %v3693 = vunpack.c.h.b16 %v3372
        %v3694 = vunpack.c.l.b16 %v3373
        %v3695 = vunpack.c.l.b16 %v3374
        %v3696 = vunpack.c.h.b16 %v3374
        %v3697 = vunpack.c.l.b16 %v3375
        %v3698 = vunpack.c.l.b16 %v3376
        %v3699 = vunpack.c.h.b16 %v3376
        %v3700 = vunpack.c.l.b16 %v3377
        %v3701 = vunpack.c.l.b16 %v3378
        %v3702 = vunpack.c.h.b16 %v3378
        %v3703 = vunpack.c.l.b16 %v3379
        %v3704 = vunpack.c.l.b16 %v3380
        %v3705 = vunpack.c.h.b16 %v3380
        %v3706 = vunpack.c.l.b16 %v3381
        %v3707 = vunpack.c.l.b16 %v3382
        %v3708 = vunpack.c.h.b16 %v3382
        %v3709 = vunpack.c.l.b16 %v3383
        %v3710 = vunpack.c.l.b16 %v3384
        %v3711 = vunpack.c.h.b16 %v3384
        %v3712 = vunpack.c.l.b16 %v3385
        %v3713 = vunpack.c.l.b16 %v3386
        %v3714 = vunpack.c.h.b16 %v3386
        %v3715 = vunpack.c.l.b16 %v3387
        %v3716 = vunpack.c.l.b16 %v3388
        %v3717 = vunpack.c.h.b16 %v3388
        %v3718 = vunpack.c.l.b16 %v3389
        %v3719 = vunpack.c.l.b16 %v3390
        %v3720 = vunpack.c.h.b16 %v3390
        %v3721 = vunpack.c.l.b16 %v3391
        %v3722 = vunpack.c.l.b16 %v3392
        %v3723 = vunpack.c.h.b16 %v3392
        %v3724 = vunpack.c.l.b16 %v3393
        %v3725 = vunpack.c.l.b16 %v3394
        %v3726 = vunpack.c.h.b16 %v3394
        %v3727 = vunpack.c.l.b16 %v3395
        %v3728 = vunpack.c.l.b16 %v3396
        %v3729 = vunpack.c.h.b16 %v3396
        %v3730 = vunpack.c.l.b16 %v3397
        %v3731 = vunpack.c.l.b16 %v3398
        %v3732 = vunpack.c.h.b16 %v3398
        %v3733 = vunpack.c.l.b16 %v3399
        %v3734 = vunpack.c.l.b16 %v3400
        %v3735 = vunpack.c.h.b16 %v3400
        %v3736 = vunpack.c.l.b16 %v3401
        %v3737 = vunpack.c.l.b16 %v3402
        %v3738 = vunpack.c.h.b16 %v3402
        %v3739 = vunpack.c.l.b16 %v3403
        %v3740 = vunpack.c.l.b16 %v3404
        %v3741 = vunpack.c.h.b16 %v3404
        %v3742 = vunpack.c.l.b16 %v3405
        %v3743 = vpack.c.b16 %v3554, %v3551
        %v3744 = vpack.c.b16 %v3555, %v3552
        %v3745 = vpack.c.b16 %v3556, %v3553
        %v3746 = vpack.c.b16 %v3560, %v3557
        %v3747 = vpack.c.b16 %v3561, %v3558
        %v3748 = vpack.c.b16 %v3562, %v3559
        %v3749 = vpack.c.b16 %v3566, %v3563
        %v3750 = vpack.c.b16 %v3567, %v3564
        %v3751 = vpack.c.b16 %v3568, %v3565
        %v3752 = vpack.c.b16 %v3572, %v3569
        %v3753 = vpack.c.b16 %v3573, %v3570
        %v3754 = vpack.c.b16 %v3574, %v3571
        %v3755 = vpack.c.b16 %v3578, %v3575
        %v3756 = vpack.c.b16 %v3579, %v3576
        %v3757 = vpack.c.b16 %v3580, %v3577
        %v3758 = vpack.c.b16 %v3584, %v3581
        %v3759 = vpack.c.b16 %v3585, %v3582
        %v3760 = vpack.c.b16 %v3586, %v3583
        %v3761 = vpack.c.b16 %v3590, %v3587
        %v3762 = vpack.c.b16 %v3591, %v3588
        %v3763 = vpack.c.b16 %v3592, %v3589
        %v3764 = vpack.c.b16 %v3596, %v3593
        %v3765 = vpack.c.b16 %v3597, %v3594
        %v3766 = vpack.c.b16 %v3598, %v3595
        %v3767 = vpack.c.b16 %v3602, %v3599
        %v3768 = vpack.c.b16 %v3603, %v3600
        %v3769 = vpack.c.b16 %v3604, %v3601
        %v3770 = vpack.c.b16 %v3608, %v3605
        %v3771 = vpack.c.b16 %v3609, %v3606
        %v3772 = vpack.c.b16 %v3610, %v3607
        %v3773 = vpack.c.b16 %v3614, %v3611
        %v3774 = vpack.c.b16 %v3615, %v3612
        %v3775 = vpack.c.b16 %v3616, %v3613
        %v3776 = vpack.c.b16 %v3620, %v3617
        %v3777 = vpack.c.b16 %v3621, %v3618
        %v3778 = vpack.c.b16 %v3622, %v3619
        %v3779 = vpack.c.b16 %v3626, %v3623
        %v3780 = vpack.c.b16 %v3627, %v3624
        %v3781 = vpack.c.b16 %v3628, %v3625
        %v3782 = vpack.c.b16 %v3632, %v3629
        %v3783 = vpack.c.b16 %v3633, %v3630
        %v3784 = vpack.c.b16 %v3634, %v3631
        %v3785 = vpack.c.b16 %v3638, %v3635
        %v3786 = vpack.c.b16 %v3639, %v3636
        %v3787 = vpack.c.b16 %v3640, %v3637
        %v3788 = vpack.c.b16 %v3644, %v3641
        %v3789 = vpack.c.b16 %v3645, %v3642
        %v3790 = vpack.c.b16 %v3646, %v3643
        %v3791 = vpack.c.b16 %v3650, %v3647
        %v3792 = vpack.c.b16 %v3651, %v3648
        %v3793 = vpack.c.b16 %v3652, %v3649
        %v3794 = vpack.c.b16 %v3656, %v3653
        %v3795 = vpack.c.b16 %v3657, %v3654
        %v3796 = vpack.c.b16 %v3658, %v3655
        %v3797 = vpack.c.b16 %v3662, %v3659
        %v3798 = vpack.c.b16 %v3663, %v3660
        %v3799 = vpack.c.b16 %v3664, %v3661
        %v3800 = vpack.c.b16 %v3668, %v3665
        %v3801 = vpack.c.b16 %v3669, %v3666
        %v3802 = vpack.c.b16 %v3670, %v3667
        %v3803 = vpack.c.b16 %v3674, %v3671
        %v3804 = vpack.c.b16 %v3675, %v3672
        %v3805 = vpack.c.b16 %v3676, %v3673
        %v3806 = vpack.c.b16 %v3680, %v3677
        %v3807 = vpack.c.b16 %v3681, %v3678
        %v3808 = vpack.c.b16 %v3682, %v3679
        %v3809 = vpack.c.b16 %v3686, %v3683
        %v3810 = vpack.c.b16 %v3687, %v3684
        %v3811 = vpack.c.b16 %v3688, %v3685
        %v3812 = vpack.c.b16 %v3692, %v3689
        %v3813 = vpack.c.b16 %v3693, %v3690
        %v3814 = vpack.c.b16 %v3694, %v3691
        %v3815 = vpack.c.b16 %v3698, %v3695
        %v3816 = vpack.c.b16 %v3699, %v3696
        %v3817 = vpack.c.b16 %v3700, %v3697
        %v3818 = vpack.c.b16 %v3704, %v3701
        %v3819 = vpack.c.b16 %v3705, %v3702
        %v3820 = vpack.c.b16 %v3706, %v3703
        %v3821 = vpack.c.b16 %v3710, %v3707
        %v3822 = vpack.c.b16 %v3711, %v3708
        %v3823 = vpack.c.b16 %v3712, %v3709
        %v3824 = vpack.c.b16 %v3716, %v3713
        %v3825 = vpack.c.b16 %v3717, %v3714
        %v3826 = vpack.c.b16 %v3718, %v3715
        %v3827 = vpack.c.b16 %v3722, %v3719
        %v3828 = vpack.c.b16 %v3723, %v3720
        %v3829 = vpack.c.b16 %v3724, %v3721
        %v3830 = vpack.c.b16 %v3728, %v3725
        %v3831 = vpack.c.b16 %v3729, %v3726
        %v3832 = vpack.c.b16 %v3730, %v3727
        %v3833 = vpack.c.b16 %v3734, %v3731
        %v3834 = vpack.c.b16 %v3735, %v3732
        %v3835 = vpack.c.b16 %v3736, %v3733
        %v3836 = vpack.c.b16 %v3740, %v3737
        %v3837 = vpack.c.b16 %v3741, %v3738
        %v3838 = vpack.c.b16 %v3742, %v3739
        %3935 = vmatprep.subr.bf16.mxu0 %v3744
        %3936 = vmatpush1.bf16.msra.mxu0 %v3743
        %3937 = vmatprep.subr.bf16.mxu0 %v3747
        %3938 = vmatpush1.bf16.msra.mxu0 %v3746
        %3939 = vmatprep.subr.bf16.mxu0 %v3750
        %3940 = vmatpush1.bf16.msra.mxu0 %v3749
        %3941 = vmatprep.subr.bf16.mxu0 %v3753
        %3942 = vmatpush1.bf16.msra.mxu0 %v3752
        %3943 = vmatprep.subr.bf16.mxu0 %v3756
        %3944 = vmatpush1.bf16.msra.mxu0 %v3755
        %3945 = vmatprep.subr.bf16.mxu0 %v3759
        %3946 = vmatpush1.bf16.msra.mxu0 %v3758
        %3947 = vmatprep.subr.bf16.mxu0 %v3762
        %3948 = vmatpush1.bf16.msra.mxu0 %v3761
        %3949 = vmatprep.subr.bf16.mxu0 %v3765
        %3950 = vmatpush1.bf16.msra.mxu0 %v3764
        %3951 = vmatprep.subr.bf16.mxu0 %v3768
        %3952 = vmatpush1.bf16.msra.mxu0 %v3767
        %3953 = vmatprep.subr.bf16.mxu0 %v3771
        %3954 = vmatpush1.bf16.msra.mxu0 %v3770
        %3955 = vmatprep.subr.bf16.mxu0 %v3774
        %3956 = vmatpush1.bf16.msra.mxu0 %v3773
        %3957 = vmatprep.subr.bf16.mxu0 %v3777
        %3958 = vmatpush1.bf16.msra.mxu0 %v3776
        %3959 = vmatprep.subr.bf16.mxu0 %v3780
        %3960 = vmatpush1.bf16.msra.mxu0 %v3779
        %3961 = vmatprep.subr.bf16.mxu0 %v3783
        %3962 = vmatpush1.bf16.msra.mxu0 %v3782
        %3963 = vmatprep.subr.bf16.mxu0 %v3786
        %3964 = vmatpush1.bf16.msra.mxu0 %v3785
        %3965 = vmatprep.subr.bf16.mxu0 %v3789
        %3966 = vmatpush1.bf16.msra.mxu0 %v3788
        %3967 = vmatprep.mubr.bf16.mxu0 %v2932
        %3968 = vmatmul.mubr.bf16.gmra.mrb[0].mxu0 %v2931
        %v3969 = vpop.f32.mrb[0].mxu0
        %v3970 = vadd.f32 %v3411, %v3969
        %v3971 = vpop.f32.mrb[0].mxu0
        %v3972 = vadd.f32 %v3415, %v3971
        %v3973 = vpop.f32.mrb[0].mxu0
        %v3974 = vpop.f32.mrb[0].mxu0
        %3975 = vdwg.mxu0
        %3976 = vmatprep.subr.bf16.mxu0 %v3792
        %3977 = vmatpush1.bf16.msra.mxu0 %v3791
        %3978 = vmatprep.subr.bf16.mxu0 %v3795
        %3979 = vmatpush1.bf16.msra.mxu0 %v3794
        %3980 = vmatprep.subr.bf16.mxu0 %v3798
        %3981 = vmatpush1.bf16.msra.mxu0 %v3797
        %3982 = vmatprep.subr.bf16.mxu0 %v3801
        %3983 = vmatpush1.bf16.msra.mxu0 %v3800
        %3984 = vmatprep.subr.bf16.mxu0 %v3804
        %3985 = vmatpush1.bf16.msra.mxu0 %v3803
        %3986 = vmatprep.subr.bf16.mxu0 %v3807
        %3987 = vmatpush1.bf16.msra.mxu0 %v3806
        %3988 = vmatprep.subr.bf16.mxu0 %v3810
        %3989 = vmatpush1.bf16.msra.mxu0 %v3809
        %3990 = vmatprep.subr.bf16.mxu0 %v3813
        %3991 = vmatpush1.bf16.msra.mxu0 %v3812
        %3992 = vmatprep.subr.bf16.mxu0 %v3816
        %3993 = vmatpush1.bf16.msra.mxu0 %v3815
        %3994 = vmatprep.subr.bf16.mxu0 %v3819
        %3995 = vmatpush1.bf16.msra.mxu0 %v3818
        %3996 = vmatprep.subr.bf16.mxu0 %v3822
        %3997 = vmatpush1.bf16.msra.mxu0 %v3821
        %3998 = vmatprep.subr.bf16.mxu0 %v3825
        %3999 = vmatpush1.bf16.msra.mxu0 %v3824
        %4000 = vmatprep.subr.bf16.mxu0 %v3828
        %4001 = vmatpush1.bf16.msra.mxu0 %v3827
        %4002 = vmatprep.subr.bf16.mxu0 %v3831
        %4003 = vmatpush1.bf16.msra.mxu0 %v3830
        %4004 = vmatprep.subr.bf16.mxu0 %v3834
        %4005 = vmatpush1.bf16.msra.mxu0 %v3833
        %4006 = vmatprep.subr.bf16.mxu0 %v3837
        %4007 = vmatpush1.bf16.msra.mxu0 %v3836
        %4008 = vmatprep.mubr.bf16.mxu0 %v2934
        %4009 = vmatmul.mubr.bf16.gmra.mrb[0].mxu0 %v2933
        %v4010 = vpop.f32.mrb[0].mxu0
        %v4011 = vadd.f32 %v3970, %v4010
        %v4012 = vpop.f32.mrb[0].mxu0
        %v4013 = vadd.f32 %v3972, %v4012
        %v4014 = vpop.f32.mrb[0].mxu0
        %v4015 = vpop.f32.mrb[0].mxu0
        %4016 = vdwg.mxu0
        %4017 = vmatprep.subr.bf16.mxu0 0
        %4018 = vmatpush1.bf16.msra.mxu0 %v3745
        %4019 = vmatprep.subr.bf16.mxu0 0
        %4020 = vmatpush1.bf16.msra.mxu0 %v3748
        %4021 = vmatprep.subr.bf16.mxu0 0
        %4022 = vmatpush1.bf16.msra.mxu0 %v3751
        %4023 = vmatprep.subr.bf16.mxu0 0
        %4024 = vmatpush1.bf16.msra.mxu0 %v3754
        %4025 = vmatprep.subr.bf16.mxu0 0
        %4026 = vmatpush1.bf16.msra.mxu0 %v3757
        %4027 = vmatprep.subr.bf16.mxu0 0
        %4028 = vmatpush1.bf16.msra.mxu0 %v3760
        %4029 = vmatprep.subr.bf16.mxu0 0
        %4030 = vmatpush1.bf16.msra.mxu0 %v3763
        %4031 = vmatprep.subr.bf16.mxu0 0
        %4032 = vmatpush1.bf16.msra.mxu0 %v3766
        %4033 = vmatprep.subr.bf16.mxu0 0
        %4034 = vmatpush1.bf16.msra.mxu0 %v3769
        %4035 = vmatprep.subr.bf16.mxu0 0
        %4036 = vmatpush1.bf16.msra.mxu0 %v3772
        %4037 = vmatprep.subr.bf16.mxu0 0
        %4038 = vmatpush1.bf16.msra.mxu0 %v3775
        %4039 = vmatprep.subr.bf16.mxu0 0
        %4040 = vmatpush1.bf16.msra.mxu0 %v3778
        %4041 = vmatprep.subr.bf16.mxu0 0
        %4042 = vmatpush1.bf16.msra.mxu0 %v3781
        %4043 = vmatprep.subr.bf16.mxu0 0
        %4044 = vmatpush1.bf16.msra.mxu0 %v3784
        %4045 = vmatprep.subr.bf16.mxu0 0
        %4046 = vmatpush1.bf16.msra.mxu0 %v3787
        %4047 = vmatprep.subr.bf16.mxu0 0
        %4048 = vmatpush1.bf16.msra.mxu0 %v3790
        %4049 = vmatprep.mubr.bf16.mxu0 %v2932
        %4050 = vmatmul.mubr.bf16.gmra.mrb[0].mxu0 %v2931
        %v4051 = vpop.f32.mrb[0].mxu0
        %v4052 = vadd.f32 %v3419, %v4051
        %v4053 = vpop.f32.mrb[0].mxu0
        %v4054 = vpop.f32.mrb[0].mxu0
        %v4055 = vpop.f32.mrb[0].mxu0
        %4056 = vdwg.mxu0
        %4057 = vmatprep.subr.bf16.mxu0 0
        %4058 = vmatpush1.bf16.msra.mxu0 %v3793
        %4059 = vmatprep.subr.bf16.mxu0 0
        %4060 = vmatpush1.bf16.msra.mxu0 %v3796
        %4061 = vmatprep.subr.bf16.mxu0 0
        %4062 = vmatpush1.bf16.msra.mxu0 %v3799
        %4063 = vmatprep.subr.bf16.mxu0 0
        %4064 = vmatpush1.bf16.msra.mxu0 %v3802
        %4065 = vmatprep.subr.bf16.mxu0 0
        %4066 = vmatpush1.bf16.msra.mxu0 %v3805
        %4067 = vmatprep.subr.bf16.mxu0 0
        %4068 = vmatpush1.bf16.msra.mxu0 %v3808
        %4069 = vmatprep.subr.bf16.mxu0 0
        %4070 = vmatpush1.bf16.msra.mxu0 %v3811
        %4071 = vmatprep.subr.bf16.mxu0 0
        %4072 = vmatpush1.bf16.msra.mxu0 %v3814
        %4073 = vmatprep.subr.bf16.mxu0 0
        %4074 = vmatpush1.bf16.msra.mxu0 %v3817
        %4075 = vmatprep.subr.bf16.mxu0 0
        %4076 = vmatpush1.bf16.msra.mxu0 %v3820
        %4077 = vmatprep.subr.bf16.mxu0 0
        %4078 = vmatpush1.bf16.msra.mxu0 %v3823
        %4079 = vmatprep.subr.bf16.mxu0 0
        %4080 = vmatpush1.bf16.msra.mxu0 %v3826
        %4081 = vmatprep.subr.bf16.mxu0 0
        %4082 = vmatpush1.bf16.msra.mxu0 %v3829
        %4083 = vmatprep.subr.bf16.mxu0 0
        %4084 = vmatpush1.bf16.msra.mxu0 %v3832
        %4085 = vmatprep.subr.bf16.mxu0 0
        %4086 = vmatpush1.bf16.msra.mxu0 %v3835
        %4087 = vmatprep.subr.bf16.mxu0 0
        %4088 = vmatpush1.bf16.msra.mxu0 %v3838
        %4089 = vmatprep.mubr.bf16.mxu0 %v2934
        %4090 = vmatmul.mubr.bf16.gmra.mrb[0].mxu0 %v2933
        %v4091 = vpop.f32.mrb[0].mxu0
        %v4092 = vadd.f32 %v4052, %v4091
        %v4093 = vpop.f32.mrb[0].mxu0
        %v4094 = vpop.f32.mrb[0].mxu0
        %v4095 = vpop.f32.mrb[0].mxu0
        %4096 = vdwg.mxu0
        %4098 = vrot.lane.b32.xlu0 %v4011, 77
        %v4099 = vpop.permute.xlu0 %4098
        %4102 = vrot.lane.b32.xlu0 %v4011, 26
        %v4103 = vpop.permute.xlu0 %4102
        %4104 = vrot.lane.b32.xlu0 %v4013, 26
        %v4105 = vpop.permute.xlu0 %4104
        %vm4106 = vcmask 211968
        %v4107 = vsel %vm4106, %v4103, %v4105
        %4109 = vrot.lane.b32.xlu0 %v4013, 103
        %v4110 = vpop.permute.xlu0 %4109
        %4112 = vrot.lane.b32.xlu0 %v4013, 52
        %v4113 = vpop.permute.xlu0 %4112
        %4115 = vrot.lane.b32.xlu0 %v4013, 1
        %v4116 = vpop.permute.xlu0 %4115
        %4117 = vrot.lane.b32.xlu0 %v4092, 1
        %v4118 = vpop.permute.xlu0 %4117
        %vm4119 = vcmask 7168
        %v4120 = vsel %vm4119, %v4116, %v4118
        %v4121 = vcombine.low %v4011, %v4107
        %v4123 = vunpack.c.l.s4 1983009808
        %v4124 = vunpack.c.0.s8 %v4123
        %v4125 = vlaneseq
        %v4126 = vshrl.u32 %v4125, 7
        %v4127 = vsub.s32 %v4124, %v4126
        %v4128 = vrot.slane %v4121, %v4127
        %v4129 = vcombine.low %v4099, %v4110
        %v4131 = vunpack.c.l.s4 1983009808
        %v4132 = vunpack.c.0.s8 %v4131
        %v4133 = vlaneseq
        %v4134 = vshrl.u32 %v4133, 7
        %v4135 = vsub.s32 %v4132, %v4134
        %v4136 = vrot.slane %v4129, %v4135
        %v4139 = vcombine.low %v4128, %v4136
        %v4141 = vunpack.c.l.s4 1934713408
        %v4142 = vunpack.c.0.s8 %v4141
        %v4143 = vlaneseq
        %v4144 = vshrl.u32 %v4143, 7
        %v4145 = vsub.s32 %v4142, %v4144
        %v4146 = vrot.slane %v4139, %v4145
        %v4147 = vcombine.low %v4113, %v4120
        %v4149 = vunpack.c.l.s4 1934713408
        %v4150 = vunpack.c.0.s8 %v4149
        %v4151 = vlaneseq
        %v4152 = vshrl.u32 %v4151, 7
        %v4153 = vsub.s32 %v4150, %v4152
        %v4154 = vrot.slane %v4147, %v4153
        %v4155 = vcombine.low %v4146, %v4154
        %v4156 = vcombine.high %v4146, %v4154
        %v4159 = vunpack.c.l.s4 1966171168
        %v4160 = vunpack.c.0.s8 %v4159
        %v4161 = vlaneseq
        %v4162 = vshrl.u32 %v4161, 7
        %v4163 = vsub.s32 %v4160, %v4162
        %v4164 = vrot.slane %v3273, %v4163
        %v4165 = vcombine.high %v4164, %v4164
        %v4167 = vunpack.c.l.s4 1966171168
        %v4168 = vunpack.c.0.s8 %v4167
        %v4169 = vlaneseq
        %v4170 = vshrl.u32 %v4169, 7
        %v4171 = vsub.s32 %v4168, %v4170
        %v4172 = vrot.slane %v4164, %v4171
        %v4174 = vunpack.c.l.s4 1966171168
        %v4175 = vunpack.c.0.s8 %v4174
        %v4176 = vlaneseq
        %v4177 = vshrl.u32 %v4176, 7
        %v4178 = vsub.s32 %v4175, %v4177
        %v4179 = vrot.slane %v4165, %v4178
        %v4180 = vlaneseq
        %v4181 = vshrl.u32 %v4180, 7
        %v4182 = vsub.s32 0, %v4181
        %v4183 = vrot.slane %v4172, %v4182
        %v4184 = vlaneseq
        %v4185 = vshrl.u32 %v4184, 7
        %v4186 = vsub.s32 0, %v4185
        %v4187 = vrot.slane %v4179, %v4186
        %v4190 = vadd.f32 %v4183, %v4155
        %v4191 = vadd.f32 %v4187, %v4156
        %vm4192 = vcmask 414720
        %v4193 = vsel %vm4192, %v4155, 0.0
        %v4194 = vrot.slane %v4193, 4
        %v4195 = vadd.f32 %v4193, %v4194
        %v4196 = vrot.slane %v4195, 2
        %v4197 = vadd.f32 %v4195, %v4196
        %v4198 = vrot.slane %v4197, 1
        %v4199 = vadd.f32 %v4197, %v4198
        %v4200 = vsel %vm4192, %v4156, 0.0
        %v4201 = vrot.slane %v4200, 4
        %v4202 = vadd.f32 %v4200, %v4201
        %v4203 = vrot.slane %v4202, 2
        %v4204 = vadd.f32 %v4202, %v4203
        %v4205 = vrot.slane %v4204, 1
        %v4206 = vadd.f32 %v4204, %v4205
        %v4207 = vrcp.pop 6.0
        %v4208 = vmul.f32 %v4199, %v4207
        %v4209 = vmul.f32 %v4206, %v4207
        %v4210 = vsub.f32 %v4190, %v4208
        %v4211 = vsub.f32 %v4191, %v4209
        %v4212 = vsel %vm4192, %v4210, -inf
        %4213 = vmax.xlane.f32.xlu0 %v4212
        %v4214 = vpop.xlane.xlu0 %4213
        %v4215 = vsel %vm4192, %v4211, -inf
        %4216 = vmax.xlane.f32.xlu0 %v4215
        %v4217 = vpop.xlane.xlu0 %4216
        %v4218 = vsub.f32 %v4210, %v4214
        %v4219 = vsub.f32 %v4211, %v4217
        %v4220 = vmul.f32 %v4218, 1.442695
        %v4221 = vpow.pop %v4220
        %v4222 = vmul.f32 %v4219, 1.442695
        %v4223 = vpow.pop %v4222
        %v4224 = vsel %vm4192, %v4221, 0.0
        %4225 = vadd.xlane.f32.xlu0 %v4224
        %v4226 = vpop.xlane.xlu0 %4225
        %v4227 = vsel %vm4192, %v4223, 0.0
        %4228 = vadd.xlane.f32.xlu0 %v4227
        %v4229 = vpop.xlane.xlu0 %4228
        %v4230 = vrcp.pop %v4226
        %v4231 = vmul.f32 %v4221, %v4230
        %v4232 = vrcp.pop %v4229
        %v4233 = vmul.f32 %v4223, %v4232
        %v4234 = vmax.f32 %v4231, 0.001
        %v4235 = vmax.f32 %v4233, 0.001
        %v4237 = vunpack.c.l.s4 1983009808
        %v4238 = vunpack.c.0.s8 %v4237
        %v4239 = vlaneseq
        %v4240 = vshrl.u32 %v4239, 7
        %v4241 = vsub.s32 %v4238, %v4240
        %v4242 = vrot.slane %v4234, %v4241
        %v4243 = vcombine.high %v4234, 0.0
        %v4245 = vunpack.c.l.s4 1983009808
        %v4246 = vunpack.c.0.s8 %v4245
        %v4247 = vlaneseq
        %v4248 = vshrl.u32 %v4247, 7
        %v4249 = vsub.s32 %v4246, %v4248
        %v4250 = vrot.slane %v4235, %v4249
        %v4251 = vcombine.high %v4235, 0.0
        %v4252 = vcombine.low %v4242, %v4250
        %v4253 = vcombine.high %v4242, %v4250
        %v4255 = vunpack.c.l.s4 1934713408
        %v4256 = vunpack.c.0.s8 %v4255
        %v4257 = vlaneseq
        %v4258 = vshrl.u32 %v4257, 7
        %v4259 = vsub.s32 %v4256, %v4258
        %v4260 = vrot.slane %v4252, %v4259
        %v4262 = vunpack.c.l.s4 1934713408
        %v4263 = vunpack.c.0.s8 %v4262
        %v4264 = vlaneseq
        %v4265 = vshrl.u32 %v4264, 7
        %v4266 = vsub.s32 %v4263, %v4265
        %v4267 = vrot.slane %v4253, %v4266
        %v4268 = vcombine.low %v4243, %v4251
        %v4270 = vunpack.c.l.s4 1934713408
        %v4271 = vunpack.c.0.s8 %v4270
        %v4272 = vlaneseq
        %v4273 = vshrl.u32 %v4272, 7
        %v4274 = vsub.s32 %v4271, %v4273
        %v4275 = vrot.slane %v4268, %v4274
        %v4276 = vcombine.high %v4260, 0.0
        %v4277 = vcombine.high %v4267, 0.0
        %v4278 = vcombine.high %v4275, 0.0
        %4280 = vrot.lane.b32.xlu0 %v4276, 51
        %v4281 = vpop.permute.xlu0 %4280
        %4284 = vrot.lane.b32.xlu0 %v4267, 102
        %v4285 = vpop.permute.xlu0 %4284
        %4288 = vrot.lane.b32.xlu0 %v4277, 25
        %v4289 = vpop.permute.xlu0 %4288
        %4292 = vrot.lane.b32.xlu0 %v4275, 76
        %v4293 = vpop.permute.xlu0 %4292
        %4296 = vrot.lane.b32.xlu0 %v4278, 127
        %v4297 = vpop.permute.xlu0 %4296
        %vm4299 = vcmask 416768
        %v4300 = vsel %vm4299, %v4260, %v4281
        %vm4301 = vcmask 834560
        %v4302 = vsel %vm4301, %v4300, %v4285
        %vm4303 = vcmask 203776
        %v4304 = vsel %vm4303, %v4285, %v4289
        %vm4305 = vcmask 621568
        %v4306 = vsel %vm4305, %v4304, %v4293
        %vm4307 = vcmask 1039360
        %v4308 = vsel %vm4307, %v4306, %v4297
        %v4311 = vcombine.low %v4302, %v4308
        %v4313 = vunpack.c.l.s4 1983009808
        %v4314 = vunpack.c.0.s8 %v4313
        %v4315 = vlaneseq
        %v4316 = vshrl.u32 %v4315, 7
        %v4317 = vsub.s32 %v4314, %v4316
        %v4318 = vrot.slane %v4311, %v4317
        %v4320 = vunpack.c.l.s4 1983009808
        %v4321 = vunpack.c.0.s8 %v4320
        %v4322 = vlaneseq
        %v4323 = vshrl.u32 %v4322, 7
        %v4324 = vsub.s32 %v4321, %v4323
        %v4325 = vrot.slane %v4297, %v4324
        %v4326 = vcombine.low %v4318, %v4325
        %vm4328 = vcmask 1041408
        %vm4329 = vcmask 1043458
        %vm4330 = vmor %vm4329, %vm4328
        %vm4331 = vcmask 406532
        %vm4332 = vmor %vm4331, %vm4330
        %4333 = vst.msk [vmem:[%s7] sm:$0x3f] %vm4332, %v4326
      $region56: #{rainbow_dqn_forward.7} parent=47 // pred_fallthru
        _
      // Predicated region
      $region57: #{rainbow_dqn_forward.7} parent=47 // pred_check
        %p4334 = pneg %p188
      $region58: #{rainbow_dqn_forward.7} parent=47 // pred_check_branch
        %4336 = sbr.rel (%p4334) target = $region60
      $region59: #{rainbow_dqn_forward.7} parent=47 // pred_region
        _
      $region60: #{rainbow_dqn_forward.7} parent=47 // pred_fallthru
        _
      // Predicated region
      $region61: #{rainbow_dqn_forward.7} parent=47 // pred_check
        %p4337 = pneg %p188
      $region62: #{rainbow_dqn_forward.7} parent=47 // pred_check_branch
        %4339 = sbr.rel (%p4337) target = $region64
      $region63: #{rainbow_dqn_forward.7} parent=47 // pred_region
        _
      $region64: #{rainbow_dqn_forward.7} parent=47 // pred_fallthru
        _
    $region48: #{rainbow_dqn_forward.7} parent=5 // pred_fallthru
      _
    %p4340 = scmp.le.s32.totalorder 2, %s13
    // Predicated region
    $region65: #{rainbow_dqn_forward.7} parent=5 // pred_check
      %p4341 = pneg %p4340
    $region66: #{rainbow_dqn_forward.7} parent=5 // pred_check_branch
      %4343 = sbr.rel (%p4341) target = $region68
    $region67: #{rainbow_dqn_forward.7} parent=5 // pred_region
      %s4344 = ssub.s32 %s13, 2
    $region68: #{rainbow_dqn_forward.7} parent=5 // pred_fallthru
      _
  $region6: #{rainbow_dqn_forward.7} parent=0 // loop_footer
    %s17 = sadd.s32 1, %s13
  $region7: #{rainbow_dqn_forward.7} parent=0 // loop_footer_branch
    %12 = sbr.rel target = $region3
  $region8: #{rainbow_dqn_forward.7} parent=0 // loop_exit
    _

</llo_original>
